<compile_context>
chip_gen: v7x
topology: tpu7x:2x2x1
jax: 0.10.0
libtpu: 0.0.40
codegen_flags: <defaults>
</compile_context>

<pallas_src>
import functools

import jax
import jax.numpy as jnp
from jax.experimental import pallas as pl
from jax.experimental.pallas import tpu as pltpu


USE_BF16 = True  # bf16 MXU operands + bf16 patch matrix; f32 accumulate/epilogue.


def _round_up(a, b):
    return (a + b - 1) // b * b


# ---------------------------------------------------------------------------
# Pallas kernels
# ---------------------------------------------------------------------------
def _conv_pool_kernel(p_ref, w_ref, b_ref, o_ref, *, ts):
    """Fused conv-as-matmul + bias + ReLU + 2x2 max-pool.

    p_ref: (K, 4*TS)  im2col patches for this tile; the 4 pool partners
                      (dh,dw) are contiguous TS-wide lane blocks.
    w_ref: (Cout, K)  flattened OIHW conv weights.
    b_ref: (Cout, 1)  bias (f32).
    o_ref: (Cout, TS) pooled, ReLU'd output (lane-dense, channel-major).
    """
    # One long MXU stream instead of 4 short pushes.
    y = jnp.dot(w_ref[...], p_ref[...], preferred_element_type=jnp.float32)
    # Static, TS-aligned (multiple of 128) lane slices -> no lane shuffle.
    m = jnp.maximum(jnp.maximum(y[:, 0 * ts:1 * ts], y[:, 1 * ts:2 * ts]),
                    jnp.maximum(y[:, 2 * ts:3 * ts], y[:, 3 * ts:4 * ts]))
    # bias + ReLU commute with the 2x2 max.
    o_ref[...] = jnp.maximum(m + b_ref[...], 0.0).astype(o_ref.dtype)


def _mlp_kernel(x_ref, w1_ref, b1_ref, w2_ref, b2_ref, w3_ref, b3_ref, o_ref):
    """Fused fc1 -> relu -> fc2 -> relu -> out.  All weights VMEM resident."""
    h = jnp.dot(x_ref[...], w1_ref[...], preferred_element_type=jnp.float32)
    h = jnp.maximum(h + b1_ref[...], 0.0)
    h = jnp.dot(h.astype(w2_ref.dtype), w2_ref[...],
                preferred_element_type=jnp.float32)
    h = jnp.maximum(h + b2_ref[...], 0.0)
    h = jnp.dot(h.astype(w3_ref.dtype), w3_ref[...],
                preferred_element_type=jnp.float32)
    o_ref[...] = (h + b3_ref[...]).astype(o_ref.dtype)


# ---------------------------------------------------------------------------
# Glue: pool-partner-split im2col (plain JAX)
# ---------------------------------------------------------------------------
def pooled_patches(x_cnhw, kh, kw):
    """x: (C, N, H, W) -> P: (4, C*kh*kw, N*PH*PW) with PH = (H-kh+1)//2.

    P[q, (c,i,j), (n,ph,pw)] = x[c, n, 2*ph+dh+i, 2*pw+dw+j] with q = dh*2+dw.
    Row order (c,i,j) matches the OIHW weight flatten; column order (n,ph,pw)
    makes the matmul output channel-major and lane-dense.
    """
    C, N, H, W = x_cnhw.shape
    OH, OW = H - kh + 1, W - kw + 1
    PH, PW = OH // 2, OW // 2
    rows = []
    for c in range(C):
        for i in range(kh):
            for j in range(kw):
                rows.append(x_cnhw[c, :, i:i + OH, j:j + OW])   # (N, OH, OW)
    pk = jnp.stack(rows, axis=0)                                # (K, N, OH, OW)
    pk = pk[:, :, :2 * PH, :2 * PW]                             # drop odd tail
    pk = pk.reshape(C * kh * kw, N, PH, 2, PW, 2)
    pk = pk.transpose(3, 5, 0, 1, 2, 4)                         # (2,2,K,N,PH,PW)
    return pk.reshape(4, C * kh * kw, N * PH * PW), (N, PH, PW)


# ---------------------------------------------------------------------------
# Wrappers
# ---------------------------------------------------------------------------
def conv_relu_pool(x_cnhw, w_oihw, b, *, use_bf16=USE_BF16):
    """Fused conv(valid, k5, s1) + bias + ReLU + 2x2 max-pool.

    x: (C, N, H, W) channel-major; w: (O, C, kh, kw); b: (O,).
    Returns (O, N, (H-kh+1)//2, (W-kw+1)//2), channel-major, dtype = compute dtype.
    """
    C, N, H, W = x_cnhw.shape
    O, C2, kh, kw = w_oihw.shape
    assert C == C2
    cdt = jnp.bfloat16 if use_bf16 else jnp.float32
    isz = 2 if use_bf16 else 4

    # Cast BEFORE im2col so the materialized patch matrix (the dominant HBM
    # traffic, ~K x the raw input) is written and read at half size.
    P4, (_, PH, PW) = pooled_patches(x_cnhw.astype(cdt), kh, kw)  # (4, K, S2)
    K = C * kh * kw
    S2 = N * PH * PW

    # Lane-tile selection: always 128-aligned, >= 512 wide, padded, grid >= 2.
    # Worst-case double-buffered input block (conv2, TS=2048, bf16) ~4.8 MiB,
    # safely under the default scoped VMEM on v5e/v6e/v7x.
    TS = 512
    for cand in (2048, 1024):
        if S2 >= 2 * cand:
            TS = cand
            break
    G = max(2, pl.cdiv(S2, TS))
    S2_pad = G * TS

    # Zero-pad columns, then interleave the 4 pool partners per tile:
    #   P[k, (i*4 + q)*TS + t] = P4[q, k, i*TS + t]
    P4 = jnp.pad(P4, ((0, 0), (0, 0), (0, S2_pad - S2)))
    P = P4.reshape(4, K, G, TS).transpose(1, 2, 0, 3).reshape(K, 4 * S2_pad)

    Wm = w_oihw.reshape(O, K).astype(cdt)
    bm = b.reshape(O, 1).astype(jnp.float32)

    cost = pl.CostEstimate(
        flops=2 * O * K * 4 * S2_pad,
        transcendentals=0,
        bytes_accessed=(K * 4 * S2_pad * isz + O * K * isz + O * 4
                        + O * S2_pad * isz),
    )

    out = pl.pallas_call(
        functools.partial(_conv_pool_kernel, ts=TS),
        out_shape=jax.ShapeDtypeStruct((O, S2_pad), cdt),
        grid=(G,),
        in_specs=[
            pl.BlockSpec((K, 4 * TS), lambda i: (0, i)),
            pl.BlockSpec((O, K), lambda i: (0, 0)),
            pl.BlockSpec((O, 1), lambda i: (0, 0)),
        ],
        out_specs=pl.BlockSpec((O, TS), lambda i: (0, i)),
        compiler_params=pltpu.CompilerParams(
            dimension_semantics=("parallel",)),
        cost_estimate=cost,
    )(P, Wm, bm)
    return out[:, :S2].reshape(O, N, PH, PW)


def mlp_head(t, w1, b1, w2, b2, w3, b3, *, use_bf16=USE_BF16):
    """Fused fc1->relu->fc2->relu->out.  t: (M, K1); weights (in, out)."""
    M, K1 = t.shape
    n_out = w3.shape[1]
    cdt = jnp.bfloat16 if use_bf16 else jnp.float32
    isz = 2 if use_bf16 else 4
    LANE = 128

    # Pad every lane (feature) dim to 128: unmasked stores, dense vregs.
    N1 = _round_up(w1.shape[1], LANE)   # 120 -> 128
    N2 = _round_up(w2.shape[1], LANE)   # 60  -> 128
    N3 = _round_up(w3.shape[1], LANE)   # 10  -> 128 (logits sliced afterwards)

    def padw(w, r, c):
        return jnp.pad(w, ((0, r - w.shape[0]), (0, c - w.shape[1]))).astype(cdt)

    def padb(bv, c):
        return jnp.pad(bv, (0, c - bv.shape[0])).reshape(1, c).astype(jnp.float32)

    w1p, b1p = padw(w1, K1, N1), padb(b1, N1)
    w2p, b2p = padw(w2, N1, N2), padb(b2, N2)
    w3p, b3p = padw(w3, N2, N3), padb(b3, N3)

    # Row tile: whole (8-padded) batch in one block up to 512 rows, else
    # 512-row tiles (per-block VMEM incl. resident weights stays < 1 MiB).
    if M <= 512:
        M_pad = _round_up(max(M, 8), 8)
        TM = M_pad
    else:
        TM = 512
        M_pad = _round_up(M, TM)
    tp = jnp.pad(t, ((0, M_pad - M), (0, 0))).astype(cdt)

    cost = pl.CostEstimate(
        flops=2 * M_pad * (K1 * N1 + N1 * N2 + N2 * N3),
        transcendentals=0,
        bytes_accessed=((M_pad * K1 + K1 * N1 + N1 * N2 + N2 * N3) * isz
                        + (N1 + N2 + N3) * 4 + M_pad * N3 * 4),
    )

    out = pl.pallas_call(
        _mlp_kernel,
        out_shape=jax.ShapeDtypeStruct((M_pad, N3), jnp.float32),
        grid=(M_pad // TM,),
        in_specs=[
            pl.BlockSpec((TM, K1), lambda i: (i, 0)),
            pl.BlockSpec((K1, N1), lambda i: (0, 0)),
            pl.BlockSpec((1, N1), lambda i: (0, 0)),
            pl.BlockSpec((N1, N2), lambda i: (0, 0)),
            pl.BlockSpec((1, N2), lambda i: (0, 0)),
            pl.BlockSpec((N2, N3), lambda i: (0, 0)),
            pl.BlockSpec((1, N3), lambda i: (0, 0)),
        ],
        out_specs=pl.BlockSpec((TM, N3), lambda i: (i, 0)),
        compiler_params=pltpu.CompilerParams(
            dimension_semantics=("parallel",)),
        cost_estimate=cost,
    )(tp, w1p, b1p, w2p, b2p, w3p, b3p)
    return out[:M, :n_out]


# ---------------------------------------------------------------------------
# Network forward
# ---------------------------------------------------------------------------
def init_params(key):
    ks = jax.random.split(key, 10)

    def w(k, shape, scale):
        return jax.random.normal(k, shape, jnp.float32) * scale

    return {
        "conv1_w": w(ks[0], (6, 1, 5, 5), 0.2),
        "conv1_b": w(ks[1], (6,), 0.1),
        "conv2_w": w(ks[2], (12, 6, 5, 5), 0.08),
        "conv2_b": w(ks[3], (12,), 0.1),
        "fc1_w":   w(ks[4], (120, 192), 0.07),   # PyTorch Linear: (out, in)
        "fc1_b":   w(ks[5], (120,), 0.1),
        "fc2_w":   w(ks[6], (60, 120), 0.09),
        "fc2_b":   w(ks[7], (60,), 0.1),
        "out_w":   w(ks[8], (10, 60), 0.13),
        "out_b":   w(ks[9], (10,), 0.1),
    }


@functools.partial(jax.jit, static_argnames=("use_bf16",))
def network_forward(x, params, use_bf16=USE_BF16):
    N = x.shape[0]
    xc = jnp.transpose(x, (1, 0, 2, 3))                       # (C, N, H, W)

    # conv1 + relu + pool : (1,N,28,28) -> (6,N,12,12)
    y = conv_relu_pool(xc, params["conv1_w"], params["conv1_b"],
                       use_bf16=use_bf16)
    # conv2 + relu + pool : (6,N,12,12) -> (12,N,4,4)
    y = conv_relu_pool(y, params["conv2_w"], params["conv2_b"],
                       use_bf16=use_bf16)

    # Flatten in PyTorch NCHW order (tiny (12,N,4,4) transpose).
    t = jnp.transpose(y, (1, 0, 2, 3)).reshape(N, 12 * 4 * 4)  # (N, 192)

    # Fused FC head (weights pre-transposed to (in, out)).
    return mlp_head(t,
                    params["fc1_w"].T, params["fc1_b"],
                    params["fc2_w"].T, params["fc2_b"],
                    params["out_w"].T, params["out_b"],
                    use_bf16=use_bf16)


# ---------------------------------------------------------------------------
# Pure-JAX reference (for correctness check)
# ---------------------------------------------------------------------------
def reference_forward(x, p):
    def conv(x, w, b):
        y = jax.lax.conv_general_dilated(
            x, w, (1, 1), "VALID", dimension_numbers=("NCHW", "OIHW", "NCHW"))
        return y + b[None, :, None, None]

    def pool(x):
        return jax.lax.reduce_window(
            x, -jnp.inf, jax.lax.max, (1, 1, 2, 2), (1, 1, 2, 2), "VALID")

    t = pool(jnp.maximum(conv(x, p["conv1_w"], p["conv1_b"]), 0.0))
    t = pool(jnp.maximum(conv(t, p["conv2_w"], p["conv2_b"]), 0.0))
    t = t.reshape(-1, 12 * 4 * 4)
    t = jnp.maximum(t @ p["fc1_w"].T + p["fc1_b"], 0.0)
    t = jnp.maximum(t @ p["fc2_w"].T + p["fc2_b"], 0.0)
    return t @ p["out_w"].T + p["out_b"]


if __name__ == "__main__":
    key = jax.random.PRNGKey(0)
    k_x, k_p = jax.random.split(key)

    # MNIST-like input implied by fc1 in_features = 12*4*4: (N, 1, 28, 28)
    x = jax.random.normal(k_x, (2, 1, 28, 28), jnp.float32)
    params = init_params(k_p)

    ref = reference_forward(x, params)

    # f32 path: exact-kernel correctness (tight tolerance).
    out_f32 = jax.block_until_ready(network_forward(x, params, use_bf16=False))
    assert out_f32.shape == (2, 10), out_f32.shape
    assert jnp.allclose(out_f32, ref, rtol=1e-4, atol=1e-4), (
        f"f32 max abs err = {jnp.max(jnp.abs(out_f32 - ref))}")

    # bf16 path (default perf mode): loose sanity tolerance vs f32 reference.
    out_bf16 = jax.block_until_ready(network_forward(x, params, use_bf16=True))
    assert out_bf16.shape == (2, 10), out_bf16.shape
    assert jnp.allclose(out_bf16, ref, rtol=5e-2, atol=2e-1), (
        f"bf16 max abs err = {jnp.max(jnp.abs(out_bf16 - ref))}")

    print("KERNEL_OK")
</pallas_src>

<mosaic_0001>
module attributes {stable_mosaic.version = 11 : i64} {
  func.func @_conv_pool_kernel(%arg0: i32, %arg1: memref<25x2048xf32, #tpu.memory_space<vmem>>, %arg2: memref<6x25xf32, #tpu.memory_space<vmem>>, %arg3: memref<6x1xf32, #tpu.memory_space<vmem>>, %arg4: memref<6x512xf32, #tpu.memory_space<vmem>>) attributes {dimension_semantics = [#tpu.dimension_semantics<parallel>], iteration_bounds = array<i64: 2>, scalar_prefetch = 0 : i64, scratch_operands = 0 : i64, tpu.core_type = #tpu.core_type<tc>, window_params = [{transform_indices = @transform_0, window_bounds = array<i64: 25, 2048>}, {pipeline_mode = #tpu.pipeline_mode<synchronous>, transform_indices = @transform_1, window_bounds = array<i64: 6, 25>}, {pipeline_mode = #tpu.pipeline_mode<synchronous>, transform_indices = @transform_2, window_bounds = array<i64: 6, 1>}, {transform_indices = @transform_3, window_bounds = array<i64: 6, 512>}]} {
    %c0 = arith.constant 0 : index
    %c0_0 = arith.constant 0 : index
    %0 = vector.load %arg2[%c0, %c0_0] : memref<6x25xf32, #tpu.memory_space<vmem>>, vector<6x25xf32>
    %c0_1 = arith.constant 0 : index
    %c0_2 = arith.constant 0 : index
    %1 = vector.load %arg1[%c0_1, %c0_2] : memref<25x2048xf32, #tpu.memory_space<vmem>>, vector<25x2048xf32>
    %cst = arith.constant dense<0.000000e+00> : vector<6x2048xf32>
    %2 = tpu.matmul %0, %1, %cst {dimension_numbers = #tpu.dot_dimension_numbers<[1], [0], [0], [1], [0, 0, 1, 1], [], []>} : vector<6x25xf32>, vector<25x2048xf32>, vector<6x2048xf32> -> vector<6x2048xf32>
    %3 = vector.extract_strided_slice %2 {offsets = [0, 0], sizes = [6, 512], strides = [1, 1]} : vector<6x2048xf32> to vector<6x512xf32>
    %4 = vector.extract_strided_slice %2 {offsets = [0, 512], sizes = [6, 512], strides = [1, 1]} : vector<6x2048xf32> to vector<6x512xf32>
    %5 = arith.maximumf %3, %4 : vector<6x512xf32>
    %6 = vector.extract_strided_slice %2 {offsets = [0, 1024], sizes = [6, 512], strides = [1, 1]} : vector<6x2048xf32> to vector<6x512xf32>
    %7 = vector.extract_strided_slice %2 {offsets = [0, 1536], sizes = [6, 512], strides = [1, 1]} : vector<6x2048xf32> to vector<6x512xf32>
    %8 = arith.maximumf %6, %7 : vector<6x512xf32>
    %9 = arith.maximumf %5, %8 : vector<6x512xf32>
    %c0_3 = arith.constant 0 : index
    %c0_4 = arith.constant 0 : index
    %10 = vector.load %arg3[%c0_3, %c0_4] : memref<6x1xf32, #tpu.memory_space<vmem>>, vector<6x1xf32>
    %11 = vector.broadcast %10 : vector<6x1xf32> to vector<6x512xf32>
    %12 = arith.addf %9, %11 : vector<6x512xf32>
    %cst_5 = arith.constant 0.000000e+00 : f32
    %13 = vector.broadcast %cst_5 : f32 to vector<6x512xf32>
    %14 = arith.maximumf %12, %13 : vector<6x512xf32>
    %c0_6 = arith.constant 0 : index
    %c0_7 = arith.constant 0 : index
    %15 = vector.load %arg4[%c0_6, %c0_7] : memref<6x512xf32, #tpu.memory_space<vmem>>, vector<6x512xf32>
    tpu.vector_store %arg4[%c0_6, %c0_7], %14 {strides = array<i32>} : memref<6x512xf32, #tpu.memory_space<vmem>>, vector<6x512xf32>,
    return
  }
  func.func @transform_0(%arg0: i32) -> (i32, i32) {
    %c0_i32 = arith.constant 0 : i32
    %c0_i32_0 = arith.constant 0 : i32
    return %c0_i32, %arg0 : i32, i32
  }
  func.func @transform_1(%arg0: i32) -> (i32, i32) {
    %c0_i32 = arith.constant 0 : i32
    %c0_i32_0 = arith.constant 0 : i32
    %c0_i32_1 = arith.constant 0 : i32
    return %c0_i32, %c0_i32_0 : i32, i32
  }
  func.func @transform_2(%arg0: i32) -> (i32, i32) {
    %c0_i32 = arith.constant 0 : i32
    %c0_i32_0 = arith.constant 0 : i32
    %c0_i32_1 = arith.constant 0 : i32
    return %c0_i32, %c0_i32_0 : i32, i32
  }
  func.func @transform_3(%arg0: i32) -> (i32, i32) {
    %c0_i32 = arith.constant 0 : i32
    %c0_i32_0 = arith.constant 0 : i32
    return %c0_i32, %arg0 : i32, i32
  }
}

module attributes {stable_mosaic.version = 11 : i64} {
  func.func @_conv_pool_kernel(%arg0: i32, %arg1: memref<150x2048xf32, #tpu.memory_space<vmem>>, %arg2: memref<12x150xf32, #tpu.memory_space<vmem>>, %arg3: memref<12x1xf32, #tpu.memory_space<vmem>>, %arg4: memref<12x512xf32, #tpu.memory_space<vmem>>) attributes {dimension_semantics = [#tpu.dimension_semantics<parallel>], iteration_bounds = array<i64: 2>, scalar_prefetch = 0 : i64, scratch_operands = 0 : i64, tpu.core_type = #tpu.core_type<tc>, window_params = [{transform_indices = @transform_0, window_bounds = array<i64: 150, 2048>}, {pipeline_mode = #tpu.pipeline_mode<synchronous>, transform_indices = @transform_1, window_bounds = array<i64: 12, 150>}, {pipeline_mode = #tpu.pipeline_mode<synchronous>, transform_indices = @transform_2, window_bounds = array<i64: 12, 1>}, {transform_indices = @transform_3, window_bounds = array<i64: 12, 512>}]} {
    %c0 = arith.constant 0 : index
    %c0_0 = arith.constant 0 : index
    %0 = vector.load %arg2[%c0, %c0_0] : memref<12x150xf32, #tpu.memory_space<vmem>>, vector<12x150xf32>
    %c0_1 = arith.constant 0 : index
    %c0_2 = arith.constant 0 : index
    %1 = vector.load %arg1[%c0_1, %c0_2] : memref<150x2048xf32, #tpu.memory_space<vmem>>, vector<150x2048xf32>
    %cst = arith.constant dense<0.000000e+00> : vector<12x2048xf32>
    %2 = tpu.matmul %0, %1, %cst {dimension_numbers = #tpu.dot_dimension_numbers<[1], [0], [0], [1], [0, 0, 1, 1], [], []>} : vector<12x150xf32>, vector<150x2048xf32>, vector<12x2048xf32> -> vector<12x2048xf32>
    %3 = vector.extract_strided_slice %2 {offsets = [0, 0], sizes = [12, 512], strides = [1, 1]} : vector<12x2048xf32> to vector<12x512xf32>
    %4 = vector.extract_strided_slice %2 {offsets = [0, 512], sizes = [12, 512], strides = [1, 1]} : vector<12x2048xf32> to vector<12x512xf32>
    %5 = arith.maximumf %3, %4 : vector<12x512xf32>
    %6 = vector.extract_strided_slice %2 {offsets = [0, 1024], sizes = [12, 512], strides = [1, 1]} : vector<12x2048xf32> to vector<12x512xf32>
    %7 = vector.extract_strided_slice %2 {offsets = [0, 1536], sizes = [12, 512], strides = [1, 1]} : vector<12x2048xf32> to vector<12x512xf32>
    %8 = arith.maximumf %6, %7 : vector<12x512xf32>
    %9 = arith.maximumf %5, %8 : vector<12x512xf32>
    %c0_3 = arith.constant 0 : index
    %c0_4 = arith.constant 0 : index
    %10 = vector.load %arg3[%c0_3, %c0_4] : memref<12x1xf32, #tpu.memory_space<vmem>>, vector<12x1xf32>
    %11 = vector.broadcast %10 : vector<12x1xf32> to vector<12x512xf32>
    %12 = arith.addf %9, %11 : vector<12x512xf32>
    %cst_5 = arith.constant 0.000000e+00 : f32
    %13 = vector.broadcast %cst_5 : f32 to vector<12x512xf32>
    %14 = arith.maximumf %12, %13 : vector<12x512xf32>
    %c0_6 = arith.constant 0 : index
    %c0_7 = arith.constant 0 : index
    %15 = vector.load %arg4[%c0_6, %c0_7] : memref<12x512xf32, #tpu.memory_space<vmem>>, vector<12x512xf32>
    tpu.vector_store %arg4[%c0_6, %c0_7], %14 {strides = array<i32>} : memref<12x512xf32, #tpu.memory_space<vmem>>, vector<12x512xf32>,
    return
  }
  func.func @transform_0(%arg0: i32) -> (i32, i32) {
    %c0_i32 = arith.constant 0 : i32
    %c0_i32_0 = arith.constant 0 : i32
    return %c0_i32, %arg0 : i32, i32
  }
  func.func @transform_1(%arg0: i32) -> (i32, i32) {
    %c0_i32 = arith.constant 0 : i32
    %c0_i32_0 = arith.constant 0 : i32
    %c0_i32_1 = arith.constant 0 : i32
    return %c0_i32, %c0_i32_0 : i32, i32
  }
  func.func @transform_2(%arg0: i32) -> (i32, i32) {
    %c0_i32 = arith.constant 0 : i32
    %c0_i32_0 = arith.constant 0 : i32
    %c0_i32_1 = arith.constant 0 : i32
    return %c0_i32, %c0_i32_0 : i32, i32
  }
  func.func @transform_3(%arg0: i32) -> (i32, i32) {
    %c0_i32 = arith.constant 0 : i32
    %c0_i32_0 = arith.constant 0 : i32
    return %c0_i32, %arg0 : i32, i32
  }
}

module attributes {stable_mosaic.version = 11 : i64} {
  func.func @_mlp_kernel(%arg0: i32, %arg1: memref<8x192xf32, #tpu.memory_space<vmem>>, %arg2: memref<192x128xf32, #tpu.memory_space<vmem>>, %arg3: memref<1x128xf32, #tpu.memory_space<vmem>>, %arg4: memref<128x128xf32, #tpu.memory_space<vmem>>, %arg5: memref<1x128xf32, #tpu.memory_space<vmem>>, %arg6: memref<128x128xf32, #tpu.memory_space<vmem>>, %arg7: memref<1x128xf32, #tpu.memory_space<vmem>>, %arg8: memref<8x128xf32, #tpu.memory_space<vmem>>) attributes {dimension_semantics = [#tpu.dimension_semantics<parallel>], iteration_bounds = array<i64: 1>, scalar_prefetch = 0 : i64, scratch_operands = 0 : i64, tpu.core_type = #tpu.core_type<tc>, window_params = [{transform_indices = @transform_0, window_bounds = array<i64: 8, 192>}, {pipeline_mode = #tpu.pipeline_mode<synchronous>, transform_indices = @transform_1, window_bounds = array<i64: 192, 128>}, {pipeline_mode = #tpu.pipeline_mode<synchronous>, transform_indices = @transform_2, window_bounds = array<i64: 1, 128>}, {pipeline_mode = #tpu.pipeline_mode<synchronous>, transform_indices = @transform_3, window_bounds = array<i64: 128, 128>}, {pipeline_mode = #tpu.pipeline_mode<synchronous>, transform_indices = @transform_4, window_bounds = array<i64: 1, 128>}, {pipeline_mode = #tpu.pipeline_mode<synchronous>, transform_indices = @transform_5, window_bounds = array<i64: 128, 128>}, {pipeline_mode = #tpu.pipeline_mode<synchronous>, transform_indices = @transform_6, window_bounds = array<i64: 1, 128>}, {transform_indices = @transform_7, window_bounds = array<i64: 8, 128>}]} {
    %c0 = arith.constant 0 : index
    %c0_0 = arith.constant 0 : index
    %0 = vector.load %arg1[%c0, %c0_0] : memref<8x192xf32, #tpu.memory_space<vmem>>, vector<8x192xf32>
    %c0_1 = arith.constant 0 : index
    %c0_2 = arith.constant 0 : index
    %1 = vector.load %arg2[%c0_1, %c0_2] : memref<192x128xf32, #tpu.memory_space<vmem>>, vector<192x128xf32>
    %cst = arith.constant dense<0.000000e+00> : vector<8x128xf32>
    %2 = tpu.matmul %0, %1, %cst {dimension_numbers = #tpu.dot_dimension_numbers<[1], [0], [0], [1], [0, 0, 1, 1], [], []>} : vector<8x192xf32>, vector<192x128xf32>, vector<8x128xf32> -> vector<8x128xf32>
    %c0_3 = arith.constant 0 : index
    %c0_4 = arith.constant 0 : index
    %3 = vector.load %arg3[%c0_3, %c0_4] : memref<1x128xf32, #tpu.memory_space<vmem>>, vector<1x128xf32>
    %4 = vector.broadcast %3 : vector<1x128xf32> to vector<8x128xf32>
    %5 = arith.addf %2, %4 : vector<8x128xf32>
    %cst_5 = arith.constant 0.000000e+00 : f32
    %6 = vector.broadcast %cst_5 : f32 to vector<8x128xf32>
    %7 = arith.maximumf %5, %6 : vector<8x128xf32>
    %c0_6 = arith.constant 0 : index
    %c0_7 = arith.constant 0 : index
    %8 = vector.load %arg4[%c0_6, %c0_7] : memref<128x128xf32, #tpu.memory_space<vmem>>, vector<128x128xf32>
    %cst_8 = arith.constant dense<0.000000e+00> : vector<8x128xf32>
    %9 = tpu.matmul %7, %8, %cst_8 {dimension_numbers = #tpu.dot_dimension_numbers<[1], [0], [0], [1], [0, 0, 1, 1], [], []>} : vector<8x128xf32>, vector<128x128xf32>, vector<8x128xf32> -> vector<8x128xf32>
    %c0_9 = arith.constant 0 : index
    %c0_10 = arith.constant 0 : index
    %10 = vector.load %arg5[%c0_9, %c0_10] : memref<1x128xf32, #tpu.memory_space<vmem>>, vector<1x128xf32>
    %11 = vector.broadcast %10 : vector<1x128xf32> to vector<8x128xf32>
    %12 = arith.addf %9, %11 : vector<8x128xf32>
    %cst_11 = arith.constant 0.000000e+00 : f32
    %13 = vector.broadcast %cst_11 : f32 to vector<8x128xf32>
    %14 = arith.maximumf %12, %13 : vector<8x128xf32>
    %c0_12 = arith.constant 0 : index
    %c0_13 = arith.constant 0 : index
    %15 = vector.load %arg6[%c0_12, %c0_13] : memref<128x128xf32, #tpu.memory_space<vmem>>, vector<128x128xf32>
    %cst_14 = arith.constant dense<0.000000e+00> : vector<8x128xf32>
    %16 = tpu.matmul %14, %15, %cst_14 {dimension_numbers = #tpu.dot_dimension_numbers<[1], [0], [0], [1], [0, 0, 1, 1], [], []>} : vector<8x128xf32>, vector<128x128xf32>, vector<8x128xf32> -> vector<8x128xf32>
    %c0_15 = arith.constant 0 : index
    %c0_16 = arith.constant 0 : index
    %17 = vector.load %arg7[%c0_15, %c0_16] : memref<1x128xf32, #tpu.memory_space<vmem>>, vector<1x128xf32>
    %18 = vector.broadcast %17 : vector<1x128xf32> to vector<8x128xf32>
    %19 = arith.addf %16, %18 : vector<8x128xf32>
    %c0_17 = arith.constant 0 : index
    %c0_18 = arith.constant 0 : index
    %20 = vector.load %arg8[%c0_17, %c0_18] : memref<8x128xf32, #tpu.memory_space<vmem>>, vector<8x128xf32>
    tpu.vector_store %arg8[%c0_17, %c0_18], %19 {strides = array<i32>} : memref<8x128xf32, #tpu.memory_space<vmem>>, vector<8x128xf32>,
    return
  }
  func.func @transform_0(%arg0: i32) -> (i32, i32) {
    %c0_i32 = arith.constant 0 : i32
    %c0_i32_0 = arith.constant 0 : i32
    return %arg0, %c0_i32 : i32, i32
  }
  func.func @transform_1(%arg0: i32) -> (i32, i32) {
    %c0_i32 = arith.constant 0 : i32
    %c0_i32_0 = arith.constant 0 : i32
    %c0_i32_1 = arith.constant 0 : i32
    return %c0_i32, %c0_i32_0 : i32, i32
  }
  func.func @transform_2(%arg0: i32) -> (i32, i32) {
    %c0_i32 = arith.constant 0 : i32
    %c0_i32_0 = arith.constant 0 : i32
    %c0_i32_1 = arith.constant 0 : i32
    return %c0_i32, %c0_i32_0 : i32, i32
  }
  func.func @transform_3(%arg0: i32) -> (i32, i32) {
    %c0_i32 = arith.constant 0 : i32
    %c0_i32_0 = arith.constant 0 : i32
    %c0_i32_1 = arith.constant 0 : i32
    return %c0_i32, %c0_i32_0 : i32, i32
  }
  func.func @transform_4(%arg0: i32) -> (i32, i32) {
    %c0_i32 = arith.constant 0 : i32
    %c0_i32_0 = arith.constant 0 : i32
    %c0_i32_1 = arith.constant 0 : i32
    return %c0_i32, %c0_i32_0 : i32, i32
  }
  func.func @transform_5(%arg0: i32) -> (i32, i32) {
    %c0_i32 = arith.constant 0 : i32
    %c0_i32_0 = arith.constant 0 : i32
    %c0_i32_1 = arith.constant 0 : i32
    return %c0_i32, %c0_i32_0 : i32, i32
  }
  func.func @transform_6(%arg0: i32) -> (i32, i32) {
    %c0_i32 = arith.constant 0 : i32
    %c0_i32_0 = arith.constant 0 : i32
    %c0_i32_1 = arith.constant 0 : i32
    return %c0_i32, %c0_i32_0 : i32, i32
  }
  func.func @transform_7(%arg0: i32) -> (i32, i32) {
    %c0_i32 = arith.constant 0 : i32
    %c0_i32_0 = arith.constant 0 : i32
    return %arg0, %c0_i32 : i32, i32
  }
}

</mosaic_0001>

<llo_original>
// kernel: network_forward.3
$region0: #{network_forward.3}
  #allocation0 [shape = 'u32[]', space=smem, size = 0x4, offset = 0x4, fixed_abs, tag = 'smem constant byte address 0x4 - core index']
  #allocation1 [shape = 'u32[144,128]{1,0:T(1,128)}', space=vmem, size = 0x12000, scoped, tag = 'internal scratch']
  %s0 = inlined_call_operand.vmem [shape: f32[25,4096], index: 0, kind: input, shape index: {}]
  %s1 = inlined_call_operand.vmem [shape: f32[6,25], index: 1, kind: input, shape index: {}]
  %s2 = inlined_call_operand.vmem [shape: f32[6,1], index: 2, kind: input, shape index: {}]
  %s3 = inlined_call_operand.vmem [shape: f32[6,1024], index: 3, kind: output, shape index: {}]
  %s4 = sld [smem:[#allocation0]]
  $region68: #{network_forward.3} parent=0
    _
  %s6 = ssub.s32 1, %s4
  %s7 = scalar_select 0, %s6, %s4
  $region1: #{network_forward.3} parent=0
    #allocation2 [shape = 'u8[524288]{0}', space=vmem, size = 0x80000, scoped, tag = 'input window, operand 0']
    loop: start=0, step=1, limit=4
    $region2: #{network_forward.3} parent=1 // loop_pre_header
      _
    $region3: #{network_forward.3} parent=1 // loop_header
      %s9 = sphi 0, %s13
      %p10 = scmp.ge.s32.totalorder %s9, 4
      %s19 = sphi 0, %s21
      %s22 = sphi 0, %s19
      %s23 = sphi 0, %s22
      %s39 = sphi 0, %s23
      %s43 = sphi 0, %s43
      %s45 = sphi 0, %s43
      %s46 = sphi 0, %s45
      %s60 = sphi 0, %s46
      %s64 = sphi 0, %s64
      %s66 = sphi 0, %s64
      %s67 = sphi 0, %s66
      %s81 = sphi 0, %s67
      %s87 = sphi 0, %s89
      %s90 = sphi 0, %s87
      %s91 = sphi 0, %s90
      %s107 = sphi 0, %s91
    $region4: #{network_forward.3} parent=1 // loop_header_branch
      %12 = sbr.rel (%p10) target = $region8
    $region5: #{network_forward.3} parent=1 // loop_body
      %s14 = ssub.s32 %s9, 1
      %s15 = ssub.s32 %s9, 2
      %s16 = sadd.s32 %s9, 1
      %s17 = ssub.s32 %s9, %s16
      %p18 = scmp.eq.s32.totalorder %s17, 0
      %s20 = sadd.s32 %s19, 1
      %s21 = scalar_select %p18, %s19, %s20
      %p24 = pneg %p18
      %p25 = scmp.eq.s32.totalorder %s9, 1
      %p26 = por %p24, %p25
      %p27 = scmp.ne.s32.totalorder %s19, %s22
      %p28 = scmp.eq.s32.totalorder %s9, 0
      %p29 = por %p27, %p28
      %p30 = scmp.ne.s32.totalorder %s19, %s22
      %p31 = scmp.eq.s32.totalorder %s14, 1
      %p32 = por %p30, %p31
      %p33 = scmp.ne.s32.totalorder %s22, %s23
      %p34 = scmp.eq.s32.totalorder %s14, 0
      %p35 = por %p33, %p34
      %p36 = scmp.ne.s32.totalorder %s22, %s23
      %p37 = scmp.eq.s32.totalorder %s15, 1
      %p38 = por %p36, %p37
      %p40 = scmp.ne.s32.totalorder %s23, %s39
      %p41 = scmp.eq.s32.totalorder %s15, 0
      %p42 = por %p40, %p41
      %s44 = sadd.s32 %s43, 1
      %p47 = scmp.eq.s32.totalorder %s9, 1
      %p48 = scmp.ne.s32.totalorder %s43, %s45
      %p49 = scmp.eq.s32.totalorder %s9, 0
      %p50 = por %p48, %p49
      %p51 = scmp.ne.s32.totalorder %s43, %s45
      %p52 = scmp.eq.s32.totalorder %s14, 1
      %p53 = por %p51, %p52
      %p54 = scmp.ne.s32.totalorder %s45, %s46
      %p55 = scmp.eq.s32.totalorder %s14, 0
      %p56 = por %p54, %p55
      %p57 = scmp.ne.s32.totalorder %s45, %s46
      %p58 = scmp.eq.s32.totalorder %s15, 1
      %p59 = por %p57, %p58
      %p61 = scmp.ne.s32.totalorder %s46, %s60
      %p62 = scmp.eq.s32.totalorder %s15, 0
      %p63 = por %p61, %p62
      %s65 = sadd.s32 %s64, 1
      %p68 = scmp.eq.s32.totalorder %s9, 1
      %p69 = scmp.ne.s32.totalorder %s64, %s66
      %p70 = scmp.eq.s32.totalorder %s9, 0
      %p71 = por %p69, %p70
      %p72 = scmp.ne.s32.totalorder %s64, %s66
      %p73 = scmp.eq.s32.totalorder %s14, 1
      %p74 = por %p72, %p73
      %p75 = scmp.ne.s32.totalorder %s66, %s67
      %p76 = scmp.eq.s32.totalorder %s14, 0
      %p77 = por %p75, %p76
      %p78 = scmp.ne.s32.totalorder %s66, %s67
      %p79 = scmp.eq.s32.totalorder %s15, 1
      %p80 = por %p78, %p79
      %p82 = scmp.ne.s32.totalorder %s67, %s81
      %p83 = scmp.eq.s32.totalorder %s15, 0
      %p84 = por %p82, %p83
      %s85 = ssub.s32 %s9, %s16
      %p86 = scmp.eq.s32.totalorder %s85, 0
      %s88 = sadd.s32 %s87, 1
      %s89 = scalar_select %p86, %s87, %s88
      %p92 = pneg %p86
      %p93 = scmp.eq.s32.totalorder %s9, 1
      %p94 = por %p92, %p93
      %p95 = scmp.ne.s32.totalorder %s87, %s90
      %p96 = scmp.eq.s32.totalorder %s9, 0
      %p97 = por %p95, %p96
      %p98 = scmp.ne.s32.totalorder %s87, %s90
      %p99 = scmp.eq.s32.totalorder %s14, 1
      %p100 = por %p98, %p99
      %p101 = scmp.ne.s32.totalorder %s90, %s91
      %p102 = scmp.eq.s32.totalorder %s14, 0
      %p103 = por %p101, %p102
      %p104 = scmp.ne.s32.totalorder %s90, %s91
      %p105 = scmp.eq.s32.totalorder %s15, 1
      %p106 = por %p104, %p105
      %p108 = scmp.ne.s32.totalorder %s91, %s107
      %p109 = scmp.eq.s32.totalorder %s15, 0
      %p110 = por %p108, %p109
      %p111 = scmp.le.s32.totalorder 1, %s9
      %p112 = scmp.lt.s32.totalorder %s9, 3
      %p113 = pnand %p111, %p112
      %p114 = pneg %p113
      // Predicated region
      $region9: #{network_forward.3} parent=5 // pred_check
        _
      $region10: #{network_forward.3} parent=5 // pred_check_branch
        %116 = sbr.rel (%p113) target = $region12
      $region11: #{network_forward.3} parent=5 // pred_region
        %s117 = ssub.s32 %s9, 1
        // Predicated region
        $region13: #{network_forward.3} parent=11 // pred_check
          %p118 = pneg %p56
        $region14: #{network_forward.3} parent=11 // pred_check_branch
          %120 = sbr.rel (%p118) target = $region16
        $region15: #{network_forward.3} parent=11 // pred_region
          _
        $region16: #{network_forward.3} parent=11 // pred_fallthru
          _
        // Predicated region
        $region17: #{network_forward.3} parent=11 // pred_check
          %p121 = pneg %p77
        $region18: #{network_forward.3} parent=11 // pred_check_branch
          %123 = sbr.rel (%p121) target = $region20
        $region19: #{network_forward.3} parent=11 // pred_region
          _
        $region20: #{network_forward.3} parent=11 // pred_fallthru
          _
      $region12: #{network_forward.3} parent=5 // pred_fallthru
        _
      %p124 = scmp.lt.s32.totalorder %s9, 2
      // Predicated region
      $region21: #{network_forward.3} parent=5 // pred_check
        %p125 = pneg %p124
      $region22: #{network_forward.3} parent=5 // pred_check_branch
        %127 = sbr.rel (%p125) target = $region24
      $region23: #{network_forward.3} parent=5 // pred_region
        // Predicated region
        $region25: #{network_forward.3} parent=23 // pred_check
          %p128 = pneg %p29
        $region26: #{network_forward.3} parent=23 // pred_check_branch
          %130 = sbr.rel (%p128) target = $region28
        $region27: #{network_forward.3} parent=23 // pred_region
          %s131 = sand.u32 %s19, 1
          %s132 = sand.u32 %s19, 1
          %s133 = smul.addr %s132, 512
          %s134 = scalar_lea.vmem [#allocation2], %s133
          %s135 = smul.u32 16, %s9
          %s136 = smul.addr %s135, 8
          %s137 = scalar_lea.vmem %s0, %s136
          // Predicated region
          $region29: #{network_forward.3} parent=27 // pred_check
            _
          $region30: #{network_forward.3} parent=27 // pred_check_branch
            %139 = sbr.rel (0) target = $region32
          $region31: #{network_forward.3} parent=27 // pred_region
            // Predicated region
            $region33: #{network_forward.3} parent=31 // pred_check
              _
            $region34: #{network_forward.3} parent=31 // pred_check_branch
              %141 = sbr.rel (0) target = $region36
            $region35: #{network_forward.3} parent=31 // pred_region
              loop: start=0, step=1, limit=1
              $region37: #{network_forward.3} parent=35 // loop_pre_header
                _
              $region38: #{network_forward.3} parent=35 // loop_header
                %s143 = sphi 0, %s147
                %p144 = scmp.ge.s32.totalorder %s143, 1
                %s148 = sphi %s137, %s137
                %s149 = sphi %s134, %s134
              $region39: #{network_forward.3} parent=35 // loop_header_branch
                %146 = sbr.rel (%p144) target = $region43
              $region40: #{network_forward.3} parent=35 // loop_body
                %v150 = vld [vmem:[%s148] sm:$0xff]
                %151 = vst [vmem:[%s149] sm:$0xff] %v150
                %v152 = vld [vmem:[%s148 + $0x8] sm:$0xff]
                %153 = vst [vmem:[%s149 + $0x8] sm:$0xff] %v152
                %v154 = vld [vmem:[%s148 + $0x10] sm:$0xff]
                %155 = vst [vmem:[%s149 + $0x10] sm:$0xff] %v154
                %v156 = vld [vmem:[%s148 + $0x18] sm:$0xff]
                %157 = vst [vmem:[%s149 + $0x18] sm:$0xff] %v156
                %v158 = vld [vmem:[%s148 + $0x20] sm:$0xff]
                %159 = vst [vmem:[%s149 + $0x20] sm:$0xff] %v158
                %v160 = vld [vmem:[%s148 + $0x28] sm:$0xff]
                %161 = vst [vmem:[%s149 + $0x28] sm:$0xff] %v160
                %v162 = vld [vmem:[%s148 + $0x30] sm:$0xff]
                %163 = vst [vmem:[%s149 + $0x30] sm:$0xff] %v162
                %v164 = vld [vmem:[%s148 + $0x38] sm:$0xff]
                %165 = vst [vmem:[%s149 + $0x38] sm:$0xff] %v164
                %v166 = vld [vmem:[%s148 + $0x40] sm:$0xff]
                %167 = vst [vmem:[%s149 + $0x40] sm:$0xff] %v166
                %v168 = vld [vmem:[%s148 + $0x48] sm:$0xff]
                %169 = vst [vmem:[%s149 + $0x48] sm:$0xff] %v168
                %v170 = vld [vmem:[%s148 + $0x50] sm:$0xff]
                %171 = vst [vmem:[%s149 + $0x50] sm:$0xff] %v170
                %v172 = vld [vmem:[%s148 + $0x58] sm:$0xff]
                %173 = vst [vmem:[%s149 + $0x58] sm:$0xff] %v172
                %v174 = vld [vmem:[%s148 + $0x60] sm:$0xff]
                %175 = vst [vmem:[%s149 + $0x60] sm:$0xff] %v174
                %v176 = vld [vmem:[%s148 + $0x68] sm:$0xff]
                %177 = vst [vmem:[%s149 + $0x68] sm:$0xff] %v176
                %v178 = vld [vmem:[%s148 + $0x70] sm:$0xff]
                %179 = vst [vmem:[%s149 + $0x70] sm:$0xff] %v178
                %v180 = vld [vmem:[%s148 + $0x78] sm:$0xff]
                %181 = vst [vmem:[%s149 + $0x78] sm:$0xff] %v180
                %v182 = vld [vmem:[%s148 + $0x100] sm:$0xff]
                %183 = vst [vmem:[%s149 + $0x80] sm:$0xff] %v182
                %v184 = vld [vmem:[%s148 + $0x108] sm:$0xff]
                %185 = vst [vmem:[%s149 + $0x88] sm:$0xff] %v184
                %v186 = vld [vmem:[%s148 + $0x110] sm:$0xff]
                %187 = vst [vmem:[%s149 + $0x90] sm:$0xff] %v186
                %v188 = vld [vmem:[%s148 + $0x118] sm:$0xff]
                %189 = vst [vmem:[%s149 + $0x98] sm:$0xff] %v188
                %v190 = vld [vmem:[%s148 + $0x120] sm:$0xff]
                %191 = vst [vmem:[%s149 + $0xa0] sm:$0xff] %v190
                %v192 = vld [vmem:[%s148 + $0x128] sm:$0xff]
                %193 = vst [vmem:[%s149 + $0xa8] sm:$0xff] %v192
                %v194 = vld [vmem:[%s148 + $0x130] sm:$0xff]
                %195 = vst [vmem:[%s149 + $0xb0] sm:$0xff] %v194
                %v196 = vld [vmem:[%s148 + $0x138] sm:$0xff]
                %197 = vst [vmem:[%s149 + $0xb8] sm:$0xff] %v196
                %v198 = vld [vmem:[%s148 + $0x140] sm:$0xff]
                %199 = vst [vmem:[%s149 + $0xc0] sm:$0xff] %v198
                %v200 = vld [vmem:[%s148 + $0x148] sm:$0xff]
                %201 = vst [vmem:[%s149 + $0xc8] sm:$0xff] %v200
                %v202 = vld [vmem:[%s148 + $0x150] sm:$0xff]
                %203 = vst [vmem:[%s149 + $0xd0] sm:$0xff] %v202
                %v204 = vld [vmem:[%s148 + $0x158] sm:$0xff]
                %205 = vst [vmem:[%s149 + $0xd8] sm:$0xff] %v204
                %v206 = vld [vmem:[%s148 + $0x160] sm:$0xff]
                %207 = vst [vmem:[%s149 + $0xe0] sm:$0xff] %v206
                %v208 = vld [vmem:[%s148 + $0x168] sm:$0xff]
                %209 = vst [vmem:[%s149 + $0xe8] sm:$0xff] %v208
                %v210 = vld [vmem:[%s148 + $0x170] sm:$0xff]
                %211 = vst [vmem:[%s149 + $0xf0] sm:$0xff] %v210
                %v212 = vld [vmem:[%s148 + $0x178] sm:$0xff]
                %213 = vst [vmem:[%s149 + $0xf8] sm:$0xff] %v212
                %v214 = vld [vmem:[%s148 + $0x200] sm:$0xff]
                %215 = vst [vmem:[%s149 + $0x100] sm:$0xff] %v214
                %v216 = vld [vmem:[%s148 + $0x208] sm:$0xff]
                %217 = vst [vmem:[%s149 + $0x108] sm:$0xff] %v216
                %v218 = vld [vmem:[%s148 + $0x210] sm:$0xff]
                %219 = vst [vmem:[%s149 + $0x110] sm:$0xff] %v218
                %v220 = vld [vmem:[%s148 + $0x218] sm:$0xff]
                %221 = vst [vmem:[%s149 + $0x118] sm:$0xff] %v220
                %v222 = vld [vmem:[%s148 + $0x220] sm:$0xff]
                %223 = vst [vmem:[%s149 + $0x120] sm:$0xff] %v222
                %v224 = vld [vmem:[%s148 + $0x228] sm:$0xff]
                %225 = vst [vmem:[%s149 + $0x128] sm:$0xff] %v224
                %v226 = vld [vmem:[%s148 + $0x230] sm:$0xff]
                %227 = vst [vmem:[%s149 + $0x130] sm:$0xff] %v226
                %v228 = vld [vmem:[%s148 + $0x238] sm:$0xff]
                %229 = vst [vmem:[%s149 + $0x138] sm:$0xff] %v228
                %v230 = vld [vmem:[%s148 + $0x240] sm:$0xff]
                %231 = vst [vmem:[%s149 + $0x140] sm:$0xff] %v230
                %v232 = vld [vmem:[%s148 + $0x248] sm:$0xff]
                %233 = vst [vmem:[%s149 + $0x148] sm:$0xff] %v232
                %v234 = vld [vmem:[%s148 + $0x250] sm:$0xff]
                %235 = vst [vmem:[%s149 + $0x150] sm:$0xff] %v234
                %v236 = vld [vmem:[%s148 + $0x258] sm:$0xff]
                %237 = vst [vmem:[%s149 + $0x158] sm:$0xff] %v236
                %v238 = vld [vmem:[%s148 + $0x260] sm:$0xff]
                %239 = vst [vmem:[%s149 + $0x160] sm:$0xff] %v238
                %v240 = vld [vmem:[%s148 + $0x268] sm:$0xff]
                %241 = vst [vmem:[%s149 + $0x168] sm:$0xff] %v240
                %v242 = vld [vmem:[%s148 + $0x270] sm:$0xff]
                %243 = vst [vmem:[%s149 + $0x170] sm:$0xff] %v242
                %v244 = vld [vmem:[%s148 + $0x278] sm:$0xff]
                %245 = vst [vmem:[%s149 + $0x178] sm:$0xff] %v244
                %v246 = vld [vmem:[%s148 + $0x300] sm:$0xff]
                %247 = vst [vmem:[%s149 + $0x180] sm:$0xff] %v246
                %v248 = vld [vmem:[%s148 + $0x308] sm:$0xff]
                %249 = vst [vmem:[%s149 + $0x188] sm:$0xff] %v248
                %v250 = vld [vmem:[%s148 + $0x310] sm:$0xff]
                %251 = vst [vmem:[%s149 + $0x190] sm:$0xff] %v250
                %v252 = vld [vmem:[%s148 + $0x318] sm:$0xff]
                %253 = vst [vmem:[%s149 + $0x198] sm:$0xff] %v252
                %v254 = vld [vmem:[%s148 + $0x320] sm:$0xff]
                %255 = vst [vmem:[%s149 + $0x1a0] sm:$0xff] %v254
                %v256 = vld [vmem:[%s148 + $0x328] sm:$0xff]
                %257 = vst [vmem:[%s149 + $0x1a8] sm:$0xff] %v256
                %v258 = vld [vmem:[%s148 + $0x330] sm:$0xff]
                %259 = vst [vmem:[%s149 + $0x1b0] sm:$0xff] %v258
                %v260 = vld [vmem:[%s148 + $0x338] sm:$0xff]
                %261 = vst [vmem:[%s149 + $0x1b8] sm:$0xff] %v260
                %v262 = vld [vmem:[%s148 + $0x340] sm:$0xff]
                %263 = vst [vmem:[%s149 + $0x1c0] sm:$0xff] %v262
                %v264 = vld [vmem:[%s148 + $0x348] sm:$0xff]
                %265 = vst [vmem:[%s149 + $0x1c8] sm:$0xff] %v264
                %v266 = vld [vmem:[%s148 + $0x350] sm:$0xff]
                %267 = vst [vmem:[%s149 + $0x1d0] sm:$0xff] %v266
                %v268 = vld [vmem:[%s148 + $0x358] sm:$0xff]
                %269 = vst [vmem:[%s149 + $0x1d8] sm:$0xff] %v268
                %v270 = vld [vmem:[%s148 + $0x360] sm:$0xff]
                %271 = vst [vmem:[%s149 + $0x1e0] sm:$0xff] %v270
                %v272 = vld [vmem:[%s148 + $0x368] sm:$0xff]
                %273 = vst [vmem:[%s149 + $0x1e8] sm:$0xff] %v272
                %v274 = vld [vmem:[%s148 + $0x370] sm:$0xff]
                %275 = vst [vmem:[%s149 + $0x1f0] sm:$0xff] %v274
                %v276 = vld [vmem:[%s148 + $0x378] sm:$0xff]
                %277 = vst [vmem:[%s149 + $0x1f8] sm:$0xff] %v276
              $region41: #{network_forward.3} parent=35 // loop_footer
                %s147 = sadd.s32 1, %s143
              $region42: #{network_forward.3} parent=35 // loop_footer_branch
                %142 = sbr.rel target = $region38
              $region43: #{network_forward.3} parent=35 // loop_exit
                _
            $region36: #{network_forward.3} parent=31 // pred_fallthru
              _
            // Predicated region
            $region44: #{network_forward.3} parent=31 // pred_check
              _
            $region45: #{network_forward.3} parent=31 // pred_check_branch
              %279 = sbr.rel target = $region47
            $region46: #{network_forward.3} parent=31 // pred_region
              _
            $region47: #{network_forward.3} parent=31 // pred_fallthru
              _
          $region32: #{network_forward.3} parent=27 // pred_fallthru
            _
          %280 = vnop
        $region28: #{network_forward.3} parent=23 // pred_fallthru
          _
      $region24: #{network_forward.3} parent=5 // pred_fallthru
        _
      %p281 = scmp.le.s32.totalorder 1, %s9
      %p282 = scmp.lt.s32.totalorder %s9, 3
      %p283 = pnand %p281, %p282
      %p284 = pneg %p283
      // Predicated region
      $region48: #{network_forward.3} parent=5 // pred_check
        _
      $region49: #{network_forward.3} parent=5 // pred_check_branch
        %286 = sbr.rel (%p283) target = $region51
      $region50: #{network_forward.3} parent=5 // pred_region
        %s287 = ssub.s32 %s9, 1
        %s288 = sand.u32 %s22, 1
        %s289 = sand.u32 %s22, 1
        %s290 = smul.addr %s289, 512
        %s291 = scalar_lea.vmem [#allocation2], %s290
        // Predicated region
        $region52: #{network_forward.3} parent=50 // pred_check
          %p292 = pneg %p35
        $region53: #{network_forward.3} parent=50 // pred_check_branch
          %294 = sbr.rel (%p292) target = $region55
        $region54: #{network_forward.3} parent=50 // pred_region
          _
        $region55: #{network_forward.3} parent=50 // pred_fallthru
          _
        %s295 = sand.u32 %s22, 1
        %s296 = sand.u32 %s22, 1
        %s297 = smul.addr %s296, 512
        %s298 = scalar_lea.vmem [#allocation2], %s297
        %p299 = pneg %p35
        %p300 = pneg %p32
        %p301 = pneg %p56
        %p302 = pneg %p53
        %p303 = pneg %p77
        %p304 = pneg %p74
        %p305 = pneg %p103
        %p306 = pneg %p100
        %s307 = smul.u32 4, %s14
        %p308 = scmp.lt.s32.totalorder %s307, 7
        %s309 = scalar_select %p308, %s307, 7
        %s310 = smul.addr %s309, 8
        %s311 = scalar_lea.vmem %s3, %s310
        %s312 = smul.u32 16, %s14
        %s313 = smul.u32 4, %s14
        %p314 = scmp.lt.s32.totalorder %s313, 7
        %s315 = scalar_select %p314, %s313, 7
        %s316 = smul.addr %s315, 8
        %s317 = scalar_lea.vmem %s3, %s316
        %s318 = smul.u32 4, %s14
        %v319 = vld [vmem:[%s1] sm:$0x3f]
        %v320 = vld [vmem:[%s291] sm:$0xff]
        %v321 = vld [vmem:[%s291 + $0x8] sm:$0xff]
        %v322 = vld [vmem:[%s291 + $0x10] sm:$0xff]
        %v323 = vld [vmem:[%s291 + $0x18] sm:$0xff]
        %v324 = vld [vmem:[%s291 + $0x20] sm:$0xff]
        %v325 = vld [vmem:[%s291 + $0x28] sm:$0xff]
        %v326 = vld [vmem:[%s291 + $0x30] sm:$0xff]
        %v327 = vld [vmem:[%s291 + $0x38] sm:$0xff]
        %v328 = vld [vmem:[%s291 + $0x40] sm:$0xff]
        %v329 = vld [vmem:[%s291 + $0x48] sm:$0xff]
        %v330 = vld [vmem:[%s291 + $0x50] sm:$0xff]
        %v331 = vld [vmem:[%s291 + $0x58] sm:$0xff]
        %v332 = vld [vmem:[%s291 + $0x60] sm:$0xff]
        %v333 = vld [vmem:[%s291 + $0x68] sm:$0xff]
        %v334 = vld [vmem:[%s291 + $0x70] sm:$0xff]
        %v335 = vld [vmem:[%s291 + $0x78] sm:$0xff]
        %v336 = vld [vmem:[%s291 + $0x80] sm:$0xff]
        %v337 = vld [vmem:[%s291 + $0x88] sm:$0xff]
        %v338 = vld [vmem:[%s291 + $0x90] sm:$0xff]
        %v339 = vld [vmem:[%s291 + $0x98] sm:$0xff]
        %v340 = vld [vmem:[%s291 + $0xa0] sm:$0xff]
        %v341 = vld [vmem:[%s291 + $0xa8] sm:$0xff]
        %v342 = vld [vmem:[%s291 + $0xb0] sm:$0xff]
        %v343 = vld [vmem:[%s291 + $0xb8] sm:$0xff]
        %v344 = vld [vmem:[%s291 + $0xc0] sm:$0xff]
        %v345 = vld [vmem:[%s291 + $0xc8] sm:$0xff]
        %v346 = vld [vmem:[%s291 + $0xd0] sm:$0xff]
        %v347 = vld [vmem:[%s291 + $0xd8] sm:$0xff]
        %v348 = vld [vmem:[%s291 + $0xe0] sm:$0xff]
        %v349 = vld [vmem:[%s291 + $0xe8] sm:$0xff]
        %v350 = vld [vmem:[%s291 + $0xf0] sm:$0xff]
        %v351 = vld [vmem:[%s291 + $0xf8] sm:$0xff]
        %v352 = vld [vmem:[%s291 + $0x100] sm:$0xff]
        %v353 = vld [vmem:[%s291 + $0x108] sm:$0xff]
        %v354 = vld [vmem:[%s291 + $0x110] sm:$0xff]
        %v355 = vld [vmem:[%s291 + $0x118] sm:$0xff]
        %v356 = vld [vmem:[%s291 + $0x120] sm:$0xff]
        %v357 = vld [vmem:[%s291 + $0x128] sm:$0xff]
        %v358 = vld [vmem:[%s291 + $0x130] sm:$0xff]
        %v359 = vld [vmem:[%s291 + $0x138] sm:$0xff]
        %v360 = vld [vmem:[%s291 + $0x140] sm:$0xff]
        %v361 = vld [vmem:[%s291 + $0x148] sm:$0xff]
        %v362 = vld [vmem:[%s291 + $0x150] sm:$0xff]
        %v363 = vld [vmem:[%s291 + $0x158] sm:$0xff]
        %v364 = vld [vmem:[%s291 + $0x160] sm:$0xff]
        %v365 = vld [vmem:[%s291 + $0x168] sm:$0xff]
        %v366 = vld [vmem:[%s291 + $0x170] sm:$0xff]
        %v367 = vld [vmem:[%s291 + $0x178] sm:$0xff]
        %v368 = vld [vmem:[%s291 + $0x180] sm:$0x1]
        %v369 = vld [vmem:[%s291 + $0x188] sm:$0x1]
        %v370 = vld [vmem:[%s291 + $0x190] sm:$0x1]
        %v371 = vld [vmem:[%s291 + $0x198] sm:$0x1]
        %v372 = vld [vmem:[%s291 + $0x1a0] sm:$0x1]
        %v373 = vld [vmem:[%s291 + $0x1a8] sm:$0x1]
        %v374 = vld [vmem:[%s291 + $0x1b0] sm:$0x1]
        %v375 = vld [vmem:[%s291 + $0x1b8] sm:$0x1]
        %v376 = vld [vmem:[%s291 + $0x1c0] sm:$0x1]
        %v377 = vld [vmem:[%s291 + $0x1c8] sm:$0x1]
        %v378 = vld [vmem:[%s291 + $0x1d0] sm:$0x1]
        %v379 = vld [vmem:[%s291 + $0x1d8] sm:$0x1]
        %v380 = vld [vmem:[%s291 + $0x1e0] sm:$0x1]
        %v381 = vld [vmem:[%s291 + $0x1e8] sm:$0x1]
        %v382 = vld [vmem:[%s291 + $0x1f0] sm:$0x1]
        %v383 = vld [vmem:[%s291 + $0x1f8] sm:$0x1]
        %vm384 = vcmask 203776
        %v386 = vsel %vm384, %v319, 0
        %vm388 = vcmask 1040384
        %v390 = vsel %vm388, %v368, 0
        %v393 = vsel %vm388, %v369, 0
        %v396 = vsel %vm388, %v370, 0
        %v399 = vsel %vm388, %v371, 0
        %v402 = vsel %vm388, %v372, 0
        %v405 = vsel %vm388, %v373, 0
        %v408 = vsel %vm388, %v374, 0
        %v411 = vsel %vm388, %v375, 0
        %v414 = vsel %vm388, %v376, 0
        %v417 = vsel %vm388, %v377, 0
        %v420 = vsel %vm388, %v378, 0
        %v423 = vsel %vm388, %v379, 0
        %v426 = vsel %vm388, %v380, 0
        %v429 = vsel %vm388, %v381, 0
        %v432 = vsel %vm388, %v382, 0
        %v435 = vsel %vm388, %v383, 0
        %437 = vmatprep.subr.mxu0 %v321
        %438 = vmatpush1.msra.mxu0 %v320
        %439 = vmatprep.subr.mxu0 %v337
        %440 = vmatpush1.msra.mxu0 %v336
        %441 = vmatprep.subr.mxu0 %v353
        %442 = vmatpush1.msra.mxu0 %v352
        %443 = vmatprep.subr.mxu0 %v393
        %444 = vmatpush1.msra.mxu0 %v390
        %445 = vmatprep.subr.mxu0 0.0
        %446 = vmatpush1.msra.mxu0 0.0
        %447 = vmatprep.subr.mxu0 0.0
        %448 = vmatpush1.msra.mxu0 0.0
        %449 = vmatprep.subr.mxu0 0.0
        %450 = vmatpush1.msra.mxu0 0.0
        %451 = vmatprep.subr.mxu0 0.0
        %452 = vmatpush1.msra.mxu0 0.0
        %453 = vmatprep.subr.mxu0 0.0
        %454 = vmatpush1.msra.mxu0 0.0
        %455 = vmatprep.subr.mxu0 0.0
        %456 = vmatpush1.msra.mxu0 0.0
        %457 = vmatprep.subr.mxu0 0.0
        %458 = vmatpush1.msra.mxu0 0.0
        %459 = vmatprep.subr.mxu0 0.0
        %460 = vmatpush1.msra.mxu0 0.0
        %461 = vmatprep.subr.mxu0 0.0
        %462 = vmatpush1.msra.mxu0 0.0
        %463 = vmatprep.subr.mxu0 0.0
        %464 = vmatpush1.msra.mxu0 0.0
        %465 = vmatprep.subr.mxu0 0.0
        %466 = vmatpush1.msra.mxu0 0.0
        %467 = vmatprep.subr.mxu0 0.0
        %468 = vmatpush1.msra.mxu0 0.0
        %469 = vmatprep.subr.mxu0 0.0
        %470 = vmatpush1.msra.mxu0 0.0
        %471 = vmatprep.subr.mxu0 0.0
        %472 = vmatpush1.msra.mxu0 0.0
        %473 = vmatprep.subr.mxu0 0.0
        %474 = vmatpush1.msra.mxu0 0.0
        %475 = vmatprep.subr.mxu0 0.0
        %476 = vmatpush1.msra.mxu0 0.0
        %477 = vmatprep.subr.mxu0 0.0
        %478 = vmatpush1.msra.mxu0 0.0
        %479 = vmatprep.subr.mxu0 0.0
        %480 = vmatpush1.msra.mxu0 0.0
        %481 = vmatprep.subr.mxu0 0.0
        %482 = vmatpush1.msra.mxu0 0.0
        %483 = vmatprep.subr.mxu0 0.0
        %484 = vmatpush1.msra.mxu0 0.0
        %485 = vmatprep.subr.mxu0 0.0
        %486 = vmatpush1.msra.mxu0 0.0
        %487 = vmatprep.subr.mxu0 0.0
        %488 = vmatpush1.msra.mxu0 0.0
        %489 = vmatprep.subr.mxu0 0.0
        %490 = vmatpush1.msra.mxu0 0.0
        %491 = vmatprep.subr.mxu0 0.0
        %492 = vmatpush1.msra.mxu0 0.0
        %493 = vmatprep.subr.mxu0 0.0
        %494 = vmatpush1.msra.mxu0 0.0
        %495 = vmatprep.subr.mxu0 0.0
        %496 = vmatpush1.msra.mxu0 0.0
        %497 = vmatprep.subr.mxu0 0.0
        %498 = vmatpush1.msra.mxu0 0.0
        %499 = vmatprep.subr.mxu0 0.0
        %500 = vmatpush1.msra.mxu0 0.0
        %501 = vmatprep.mubr.f32.mxu0 0.0
        %502 = vmatmul.mubr.f32.gmra.mrb[0].mxu0 %v386
        %v503 = vpop.f32.mrb[0].mxu0
        %v504 = vadd.f32 0.0, %v503
        %v505 = vpop.f32.mrb[0].mxu0
        %v506 = vadd.f32 0.0, %v505
        %507 = vdwg.mxu0
        %508 = vmatprep.subr.mxu0 %v323
        %509 = vmatpush1.msra.mxu0 %v322
        %510 = vmatprep.subr.mxu0 %v339
        %511 = vmatpush1.msra.mxu0 %v338
        %512 = vmatprep.subr.mxu0 %v355
        %513 = vmatpush1.msra.mxu0 %v354
        %514 = vmatprep.subr.mxu0 %v399
        %515 = vmatpush1.msra.mxu0 %v396
        %516 = vmatprep.subr.mxu0 0.0
        %517 = vmatpush1.msra.mxu0 0.0
        %518 = vmatprep.subr.mxu0 0.0
        %519 = vmatpush1.msra.mxu0 0.0
        %520 = vmatprep.subr.mxu0 0.0
        %521 = vmatpush1.msra.mxu0 0.0
        %522 = vmatprep.subr.mxu0 0.0
        %523 = vmatpush1.msra.mxu0 0.0
        %524 = vmatprep.subr.mxu0 0.0
        %525 = vmatpush1.msra.mxu0 0.0
        %526 = vmatprep.subr.mxu0 0.0
        %527 = vmatpush1.msra.mxu0 0.0
        %528 = vmatprep.subr.mxu0 0.0
        %529 = vmatpush1.msra.mxu0 0.0
        %530 = vmatprep.subr.mxu0 0.0
        %531 = vmatpush1.msra.mxu0 0.0
        %532 = vmatprep.subr.mxu0 0.0
        %533 = vmatpush1.msra.mxu0 0.0
        %534 = vmatprep.subr.mxu0 0.0
        %535 = vmatpush1.msra.mxu0 0.0
        %536 = vmatprep.subr.mxu0 0.0
        %537 = vmatpush1.msra.mxu0 0.0
        %538 = vmatprep.subr.mxu0 0.0
        %539 = vmatpush1.msra.mxu0 0.0
        %540 = vmatprep.subr.mxu0 0.0
        %541 = vmatpush1.msra.mxu0 0.0
        %542 = vmatprep.subr.mxu0 0.0
        %543 = vmatpush1.msra.mxu0 0.0
        %544 = vmatprep.subr.mxu0 0.0
        %545 = vmatpush1.msra.mxu0 0.0
        %546 = vmatprep.subr.mxu0 0.0
        %547 = vmatpush1.msra.mxu0 0.0
        %548 = vmatprep.subr.mxu0 0.0
        %549 = vmatpush1.msra.mxu0 0.0
        %550 = vmatprep.subr.mxu0 0.0
        %551 = vmatpush1.msra.mxu0 0.0
        %552 = vmatprep.subr.mxu0 0.0
        %553 = vmatpush1.msra.mxu0 0.0
        %554 = vmatprep.subr.mxu0 0.0
        %555 = vmatpush1.msra.mxu0 0.0
        %556 = vmatprep.subr.mxu0 0.0
        %557 = vmatpush1.msra.mxu0 0.0
        %558 = vmatprep.subr.mxu0 0.0
        %559 = vmatpush1.msra.mxu0 0.0
        %560 = vmatprep.subr.mxu0 0.0
        %561 = vmatpush1.msra.mxu0 0.0
        %562 = vmatprep.subr.mxu0 0.0
        %563 = vmatpush1.msra.mxu0 0.0
        %564 = vmatprep.subr.mxu0 0.0
        %565 = vmatpush1.msra.mxu0 0.0
        %566 = vmatprep.subr.mxu0 0.0
        %567 = vmatpush1.msra.mxu0 0.0
        %568 = vmatprep.subr.mxu0 0.0
        %569 = vmatpush1.msra.mxu0 0.0
        %570 = vmatprep.subr.mxu0 0.0
        %571 = vmatpush1.msra.mxu0 0.0
        %572 = vmatprep.mubr.f32.mxu0 0.0
        %573 = vmatmul.mubr.f32.gmra.mrb[0].mxu0 %v386
        %v574 = vpop.f32.mrb[0].mxu0
        %v575 = vadd.f32 0.0, %v574
        %v576 = vpop.f32.mrb[0].mxu0
        %v577 = vadd.f32 0.0, %v576
        %578 = vdwg.mxu0
        %579 = vmatprep.subr.mxu0 %v325
        %580 = vmatpush1.msra.mxu0 %v324
        %581 = vmatprep.subr.mxu0 %v341
        %582 = vmatpush1.msra.mxu0 %v340
        %583 = vmatprep.subr.mxu0 %v357
        %584 = vmatpush1.msra.mxu0 %v356
        %585 = vmatprep.subr.mxu0 %v405
        %586 = vmatpush1.msra.mxu0 %v402
        %587 = vmatprep.subr.mxu0 0.0
        %588 = vmatpush1.msra.mxu0 0.0
        %589 = vmatprep.subr.mxu0 0.0
        %590 = vmatpush1.msra.mxu0 0.0
        %591 = vmatprep.subr.mxu0 0.0
        %592 = vmatpush1.msra.mxu0 0.0
        %593 = vmatprep.subr.mxu0 0.0
        %594 = vmatpush1.msra.mxu0 0.0
        %595 = vmatprep.subr.mxu0 0.0
        %596 = vmatpush1.msra.mxu0 0.0
        %597 = vmatprep.subr.mxu0 0.0
        %598 = vmatpush1.msra.mxu0 0.0
        %599 = vmatprep.subr.mxu0 0.0
        %600 = vmatpush1.msra.mxu0 0.0
        %601 = vmatprep.subr.mxu0 0.0
        %602 = vmatpush1.msra.mxu0 0.0
        %603 = vmatprep.subr.mxu0 0.0
        %604 = vmatpush1.msra.mxu0 0.0
        %605 = vmatprep.subr.mxu0 0.0
        %606 = vmatpush1.msra.mxu0 0.0
        %607 = vmatprep.subr.mxu0 0.0
        %608 = vmatpush1.msra.mxu0 0.0
        %609 = vmatprep.subr.mxu0 0.0
        %610 = vmatpush1.msra.mxu0 0.0
        %611 = vmatprep.subr.mxu0 0.0
        %612 = vmatpush1.msra.mxu0 0.0
        %613 = vmatprep.subr.mxu0 0.0
        %614 = vmatpush1.msra.mxu0 0.0
        %615 = vmatprep.subr.mxu0 0.0
        %616 = vmatpush1.msra.mxu0 0.0
        %617 = vmatprep.subr.mxu0 0.0
        %618 = vmatpush1.msra.mxu0 0.0
        %619 = vmatprep.subr.mxu0 0.0
        %620 = vmatpush1.msra.mxu0 0.0
        %621 = vmatprep.subr.mxu0 0.0
        %622 = vmatpush1.msra.mxu0 0.0
        %623 = vmatprep.subr.mxu0 0.0
        %624 = vmatpush1.msra.mxu0 0.0
        %625 = vmatprep.subr.mxu0 0.0
        %626 = vmatpush1.msra.mxu0 0.0
        %627 = vmatprep.subr.mxu0 0.0
        %628 = vmatpush1.msra.mxu0 0.0
        %629 = vmatprep.subr.mxu0 0.0
        %630 = vmatpush1.msra.mxu0 0.0
        %631 = vmatprep.subr.mxu0 0.0
        %632 = vmatpush1.msra.mxu0 0.0
        %633 = vmatprep.subr.mxu0 0.0
        %634 = vmatpush1.msra.mxu0 0.0
        %635 = vmatprep.subr.mxu0 0.0
        %636 = vmatpush1.msra.mxu0 0.0
        %637 = vmatprep.subr.mxu0 0.0
        %638 = vmatpush1.msra.mxu0 0.0
        %639 = vmatprep.subr.mxu0 0.0
        %640 = vmatpush1.msra.mxu0 0.0
        %641 = vmatprep.subr.mxu0 0.0
        %642 = vmatpush1.msra.mxu0 0.0
        %643 = vmatprep.mubr.f32.mxu0 0.0
        %644 = vmatmul.mubr.f32.gmra.mrb[0].mxu0 %v386
        %v645 = vpop.f32.mrb[0].mxu0
        %v646 = vadd.f32 0.0, %v645
        %v647 = vpop.f32.mrb[0].mxu0
        %v648 = vadd.f32 0.0, %v647
        %649 = vdwg.mxu0
        %650 = vmatprep.subr.mxu0 %v327
        %651 = vmatpush1.msra.mxu0 %v326
        %652 = vmatprep.subr.mxu0 %v343
        %653 = vmatpush1.msra.mxu0 %v342
        %654 = vmatprep.subr.mxu0 %v359
        %655 = vmatpush1.msra.mxu0 %v358
        %656 = vmatprep.subr.mxu0 %v411
        %657 = vmatpush1.msra.mxu0 %v408
        %658 = vmatprep.subr.mxu0 0.0
        %659 = vmatpush1.msra.mxu0 0.0
        %660 = vmatprep.subr.mxu0 0.0
        %661 = vmatpush1.msra.mxu0 0.0
        %662 = vmatprep.subr.mxu0 0.0
        %663 = vmatpush1.msra.mxu0 0.0
        %664 = vmatprep.subr.mxu0 0.0
        %665 = vmatpush1.msra.mxu0 0.0
        %666 = vmatprep.subr.mxu0 0.0
        %667 = vmatpush1.msra.mxu0 0.0
        %668 = vmatprep.subr.mxu0 0.0
        %669 = vmatpush1.msra.mxu0 0.0
        %670 = vmatprep.subr.mxu0 0.0
        %671 = vmatpush1.msra.mxu0 0.0
        %672 = vmatprep.subr.mxu0 0.0
        %673 = vmatpush1.msra.mxu0 0.0
        %674 = vmatprep.subr.mxu0 0.0
        %675 = vmatpush1.msra.mxu0 0.0
        %676 = vmatprep.subr.mxu0 0.0
        %677 = vmatpush1.msra.mxu0 0.0
        %678 = vmatprep.subr.mxu0 0.0
        %679 = vmatpush1.msra.mxu0 0.0
        %680 = vmatprep.subr.mxu0 0.0
        %681 = vmatpush1.msra.mxu0 0.0
        %682 = vmatprep.subr.mxu0 0.0
        %683 = vmatpush1.msra.mxu0 0.0
        %684 = vmatprep.subr.mxu0 0.0
        %685 = vmatpush1.msra.mxu0 0.0
        %686 = vmatprep.subr.mxu0 0.0
        %687 = vmatpush1.msra.mxu0 0.0
        %688 = vmatprep.subr.mxu0 0.0
        %689 = vmatpush1.msra.mxu0 0.0
        %690 = vmatprep.subr.mxu0 0.0
        %691 = vmatpush1.msra.mxu0 0.0
        %692 = vmatprep.subr.mxu0 0.0
        %693 = vmatpush1.msra.mxu0 0.0
        %694 = vmatprep.subr.mxu0 0.0
        %695 = vmatpush1.msra.mxu0 0.0
        %696 = vmatprep.subr.mxu0 0.0
        %697 = vmatpush1.msra.mxu0 0.0
        %698 = vmatprep.subr.mxu0 0.0
        %699 = vmatpush1.msra.mxu0 0.0
        %700 = vmatprep.subr.mxu0 0.0
        %701 = vmatpush1.msra.mxu0 0.0
        %702 = vmatprep.subr.mxu0 0.0
        %703 = vmatpush1.msra.mxu0 0.0
        %704 = vmatprep.subr.mxu0 0.0
        %705 = vmatpush1.msra.mxu0 0.0
        %706 = vmatprep.subr.mxu0 0.0
        %707 = vmatpush1.msra.mxu0 0.0
        %708 = vmatprep.subr.mxu0 0.0
        %709 = vmatpush1.msra.mxu0 0.0
        %710 = vmatprep.subr.mxu0 0.0
        %711 = vmatpush1.msra.mxu0 0.0
        %712 = vmatprep.subr.mxu0 0.0
        %713 = vmatpush1.msra.mxu0 0.0
        %714 = vmatprep.mubr.f32.mxu0 0.0
        %715 = vmatmul.mubr.f32.gmra.mrb[0].mxu0 %v386
        %v716 = vpop.f32.mrb[0].mxu0
        %v717 = vadd.f32 0.0, %v716
        %v718 = vpop.f32.mrb[0].mxu0
        %v719 = vadd.f32 0.0, %v718
        %720 = vdwg.mxu0
        %721 = vmatprep.subr.mxu0 %v329
        %722 = vmatpush1.msra.mxu0 %v328
        %723 = vmatprep.subr.mxu0 %v345
        %724 = vmatpush1.msra.mxu0 %v344
        %725 = vmatprep.subr.mxu0 %v361
        %726 = vmatpush1.msra.mxu0 %v360
        %727 = vmatprep.subr.mxu0 %v417
        %728 = vmatpush1.msra.mxu0 %v414
        %729 = vmatprep.subr.mxu0 0.0
        %730 = vmatpush1.msra.mxu0 0.0
        %731 = vmatprep.subr.mxu0 0.0
        %732 = vmatpush1.msra.mxu0 0.0
        %733 = vmatprep.subr.mxu0 0.0
        %734 = vmatpush1.msra.mxu0 0.0
        %735 = vmatprep.subr.mxu0 0.0
        %736 = vmatpush1.msra.mxu0 0.0
        %737 = vmatprep.subr.mxu0 0.0
        %738 = vmatpush1.msra.mxu0 0.0
        %739 = vmatprep.subr.mxu0 0.0
        %740 = vmatpush1.msra.mxu0 0.0
        %741 = vmatprep.subr.mxu0 0.0
        %742 = vmatpush1.msra.mxu0 0.0
        %743 = vmatprep.subr.mxu0 0.0
        %744 = vmatpush1.msra.mxu0 0.0
        %745 = vmatprep.subr.mxu0 0.0
        %746 = vmatpush1.msra.mxu0 0.0
        %747 = vmatprep.subr.mxu0 0.0
        %748 = vmatpush1.msra.mxu0 0.0
        %749 = vmatprep.subr.mxu0 0.0
        %750 = vmatpush1.msra.mxu0 0.0
        %751 = vmatprep.subr.mxu0 0.0
        %752 = vmatpush1.msra.mxu0 0.0
        %753 = vmatprep.subr.mxu0 0.0
        %754 = vmatpush1.msra.mxu0 0.0
        %755 = vmatprep.subr.mxu0 0.0
        %756 = vmatpush1.msra.mxu0 0.0
        %757 = vmatprep.subr.mxu0 0.0
        %758 = vmatpush1.msra.mxu0 0.0
        %759 = vmatprep.subr.mxu0 0.0
        %760 = vmatpush1.msra.mxu0 0.0
        %761 = vmatprep.subr.mxu0 0.0
        %762 = vmatpush1.msra.mxu0 0.0
        %763 = vmatprep.subr.mxu0 0.0
        %764 = vmatpush1.msra.mxu0 0.0
        %765 = vmatprep.subr.mxu0 0.0
        %766 = vmatpush1.msra.mxu0 0.0
        %767 = vmatprep.subr.mxu0 0.0
        %768 = vmatpush1.msra.mxu0 0.0
        %769 = vmatprep.subr.mxu0 0.0
        %770 = vmatpush1.msra.mxu0 0.0
        %771 = vmatprep.subr.mxu0 0.0
        %772 = vmatpush1.msra.mxu0 0.0
        %773 = vmatprep.subr.mxu0 0.0
        %774 = vmatpush1.msra.mxu0 0.0
        %775 = vmatprep.subr.mxu0 0.0
        %776 = vmatpush1.msra.mxu0 0.0
        %777 = vmatprep.subr.mxu0 0.0
        %778 = vmatpush1.msra.mxu0 0.0
        %779 = vmatprep.subr.mxu0 0.0
        %780 = vmatpush1.msra.mxu0 0.0
        %781 = vmatprep.subr.mxu0 0.0
        %782 = vmatpush1.msra.mxu0 0.0
        %783 = vmatprep.subr.mxu0 0.0
        %784 = vmatpush1.msra.mxu0 0.0
        %785 = vmatprep.mubr.f32.mxu0 0.0
        %786 = vmatmul.mubr.f32.gmra.mrb[0].mxu0 %v386
        %v787 = vpop.f32.mrb[0].mxu0
        %v788 = vadd.f32 0.0, %v787
        %v789 = vpop.f32.mrb[0].mxu0
        %v790 = vadd.f32 0.0, %v789
        %791 = vdwg.mxu0
        %792 = vmatprep.subr.mxu0 %v331
        %793 = vmatpush1.msra.mxu0 %v330
        %794 = vmatprep.subr.mxu0 %v347
        %795 = vmatpush1.msra.mxu0 %v346
        %796 = vmatprep.subr.mxu0 %v363
        %797 = vmatpush1.msra.mxu0 %v362
        %798 = vmatprep.subr.mxu0 %v423
        %799 = vmatpush1.msra.mxu0 %v420
        %800 = vmatprep.subr.mxu0 0.0
        %801 = vmatpush1.msra.mxu0 0.0
        %802 = vmatprep.subr.mxu0 0.0
        %803 = vmatpush1.msra.mxu0 0.0
        %804 = vmatprep.subr.mxu0 0.0
        %805 = vmatpush1.msra.mxu0 0.0
        %806 = vmatprep.subr.mxu0 0.0
        %807 = vmatpush1.msra.mxu0 0.0
        %808 = vmatprep.subr.mxu0 0.0
        %809 = vmatpush1.msra.mxu0 0.0
        %810 = vmatprep.subr.mxu0 0.0
        %811 = vmatpush1.msra.mxu0 0.0
        %812 = vmatprep.subr.mxu0 0.0
        %813 = vmatpush1.msra.mxu0 0.0
        %814 = vmatprep.subr.mxu0 0.0
        %815 = vmatpush1.msra.mxu0 0.0
        %816 = vmatprep.subr.mxu0 0.0
        %817 = vmatpush1.msra.mxu0 0.0
        %818 = vmatprep.subr.mxu0 0.0
        %819 = vmatpush1.msra.mxu0 0.0
        %820 = vmatprep.subr.mxu0 0.0
        %821 = vmatpush1.msra.mxu0 0.0
        %822 = vmatprep.subr.mxu0 0.0
        %823 = vmatpush1.msra.mxu0 0.0
        %824 = vmatprep.subr.mxu0 0.0
        %825 = vmatpush1.msra.mxu0 0.0
        %826 = vmatprep.subr.mxu0 0.0
        %827 = vmatpush1.msra.mxu0 0.0
        %828 = vmatprep.subr.mxu0 0.0
        %829 = vmatpush1.msra.mxu0 0.0
        %830 = vmatprep.subr.mxu0 0.0
        %831 = vmatpush1.msra.mxu0 0.0
        %832 = vmatprep.subr.mxu0 0.0
        %833 = vmatpush1.msra.mxu0 0.0
        %834 = vmatprep.subr.mxu0 0.0
        %835 = vmatpush1.msra.mxu0 0.0
        %836 = vmatprep.subr.mxu0 0.0
        %837 = vmatpush1.msra.mxu0 0.0
        %838 = vmatprep.subr.mxu0 0.0
        %839 = vmatpush1.msra.mxu0 0.0
        %840 = vmatprep.subr.mxu0 0.0
        %841 = vmatpush1.msra.mxu0 0.0
        %842 = vmatprep.subr.mxu0 0.0
        %843 = vmatpush1.msra.mxu0 0.0
        %844 = vmatprep.subr.mxu0 0.0
        %845 = vmatpush1.msra.mxu0 0.0
        %846 = vmatprep.subr.mxu0 0.0
        %847 = vmatpush1.msra.mxu0 0.0
        %848 = vmatprep.subr.mxu0 0.0
        %849 = vmatpush1.msra.mxu0 0.0
        %850 = vmatprep.subr.mxu0 0.0
        %851 = vmatpush1.msra.mxu0 0.0
        %852 = vmatprep.subr.mxu0 0.0
        %853 = vmatpush1.msra.mxu0 0.0
        %854 = vmatprep.subr.mxu0 0.0
        %855 = vmatpush1.msra.mxu0 0.0
        %856 = vmatprep.mubr.f32.mxu0 0.0
        %857 = vmatmul.mubr.f32.gmra.mrb[0].mxu0 %v386
        %v858 = vpop.f32.mrb[0].mxu0
        %v859 = vadd.f32 0.0, %v858
        %v860 = vpop.f32.mrb[0].mxu0
        %v861 = vadd.f32 0.0, %v860
        %862 = vdwg.mxu0
        %863 = vmatprep.subr.mxu0 %v333
        %864 = vmatpush1.msra.mxu0 %v332
        %865 = vmatprep.subr.mxu0 %v349
        %866 = vmatpush1.msra.mxu0 %v348
        %867 = vmatprep.subr.mxu0 %v365
        %868 = vmatpush1.msra.mxu0 %v364
        %869 = vmatprep.subr.mxu0 %v429
        %870 = vmatpush1.msra.mxu0 %v426
        %871 = vmatprep.subr.mxu0 0.0
        %872 = vmatpush1.msra.mxu0 0.0
        %873 = vmatprep.subr.mxu0 0.0
        %874 = vmatpush1.msra.mxu0 0.0
        %875 = vmatprep.subr.mxu0 0.0
        %876 = vmatpush1.msra.mxu0 0.0
        %877 = vmatprep.subr.mxu0 0.0
        %878 = vmatpush1.msra.mxu0 0.0
        %879 = vmatprep.subr.mxu0 0.0
        %880 = vmatpush1.msra.mxu0 0.0
        %881 = vmatprep.subr.mxu0 0.0
        %882 = vmatpush1.msra.mxu0 0.0
        %883 = vmatprep.subr.mxu0 0.0
        %884 = vmatpush1.msra.mxu0 0.0
        %885 = vmatprep.subr.mxu0 0.0
        %886 = vmatpush1.msra.mxu0 0.0
        %887 = vmatprep.subr.mxu0 0.0
        %888 = vmatpush1.msra.mxu0 0.0
        %889 = vmatprep.subr.mxu0 0.0
        %890 = vmatpush1.msra.mxu0 0.0
        %891 = vmatprep.subr.mxu0 0.0
        %892 = vmatpush1.msra.mxu0 0.0
        %893 = vmatprep.subr.mxu0 0.0
        %894 = vmatpush1.msra.mxu0 0.0
        %895 = vmatprep.subr.mxu0 0.0
        %896 = vmatpush1.msra.mxu0 0.0
        %897 = vmatprep.subr.mxu0 0.0
        %898 = vmatpush1.msra.mxu0 0.0
        %899 = vmatprep.subr.mxu0 0.0
        %900 = vmatpush1.msra.mxu0 0.0
        %901 = vmatprep.subr.mxu0 0.0
        %902 = vmatpush1.msra.mxu0 0.0
        %903 = vmatprep.subr.mxu0 0.0
        %904 = vmatpush1.msra.mxu0 0.0
        %905 = vmatprep.subr.mxu0 0.0
        %906 = vmatpush1.msra.mxu0 0.0
        %907 = vmatprep.subr.mxu0 0.0
        %908 = vmatpush1.msra.mxu0 0.0
        %909 = vmatprep.subr.mxu0 0.0
        %910 = vmatpush1.msra.mxu0 0.0
        %911 = vmatprep.subr.mxu0 0.0
        %912 = vmatpush1.msra.mxu0 0.0
        %913 = vmatprep.subr.mxu0 0.0
        %914 = vmatpush1.msra.mxu0 0.0
        %915 = vmatprep.subr.mxu0 0.0
        %916 = vmatpush1.msra.mxu0 0.0
        %917 = vmatprep.subr.mxu0 0.0
        %918 = vmatpush1.msra.mxu0 0.0
        %919 = vmatprep.subr.mxu0 0.0
        %920 = vmatpush1.msra.mxu0 0.0
        %921 = vmatprep.subr.mxu0 0.0
        %922 = vmatpush1.msra.mxu0 0.0
        %923 = vmatprep.subr.mxu0 0.0
        %924 = vmatpush1.msra.mxu0 0.0
        %925 = vmatprep.subr.mxu0 0.0
        %926 = vmatpush1.msra.mxu0 0.0
        %927 = vmatprep.mubr.f32.mxu0 0.0
        %928 = vmatmul.mubr.f32.gmra.mrb[0].mxu0 %v386
        %v929 = vpop.f32.mrb[0].mxu0
        %v930 = vadd.f32 0.0, %v929
        %v931 = vpop.f32.mrb[0].mxu0
        %v932 = vadd.f32 0.0, %v931
        %933 = vdwg.mxu0
        %934 = vmatprep.subr.mxu0 %v335
        %935 = vmatpush1.msra.mxu0 %v334
        %936 = vmatprep.subr.mxu0 %v351
        %937 = vmatpush1.msra.mxu0 %v350
        %938 = vmatprep.subr.mxu0 %v367
        %939 = vmatpush1.msra.mxu0 %v366
        %940 = vmatprep.subr.mxu0 %v435
        %941 = vmatpush1.msra.mxu0 %v432
        %942 = vmatprep.subr.mxu0 0.0
        %943 = vmatpush1.msra.mxu0 0.0
        %944 = vmatprep.subr.mxu0 0.0
        %945 = vmatpush1.msra.mxu0 0.0
        %946 = vmatprep.subr.mxu0 0.0
        %947 = vmatpush1.msra.mxu0 0.0
        %948 = vmatprep.subr.mxu0 0.0
        %949 = vmatpush1.msra.mxu0 0.0
        %950 = vmatprep.subr.mxu0 0.0
        %951 = vmatpush1.msra.mxu0 0.0
        %952 = vmatprep.subr.mxu0 0.0
        %953 = vmatpush1.msra.mxu0 0.0
        %954 = vmatprep.subr.mxu0 0.0
        %955 = vmatpush1.msra.mxu0 0.0
        %956 = vmatprep.subr.mxu0 0.0
        %957 = vmatpush1.msra.mxu0 0.0
        %958 = vmatprep.subr.mxu0 0.0
        %959 = vmatpush1.msra.mxu0 0.0
        %960 = vmatprep.subr.mxu0 0.0
        %961 = vmatpush1.msra.mxu0 0.0
        %962 = vmatprep.subr.mxu0 0.0
        %963 = vmatpush1.msra.mxu0 0.0
        %964 = vmatprep.subr.mxu0 0.0
        %965 = vmatpush1.msra.mxu0 0.0
        %966 = vmatprep.subr.mxu0 0.0
        %967 = vmatpush1.msra.mxu0 0.0
        %968 = vmatprep.subr.mxu0 0.0
        %969 = vmatpush1.msra.mxu0 0.0
        %970 = vmatprep.subr.mxu0 0.0
        %971 = vmatpush1.msra.mxu0 0.0
        %972 = vmatprep.subr.mxu0 0.0
        %973 = vmatpush1.msra.mxu0 0.0
        %974 = vmatprep.subr.mxu0 0.0
        %975 = vmatpush1.msra.mxu0 0.0
        %976 = vmatprep.subr.mxu0 0.0
        %977 = vmatpush1.msra.mxu0 0.0
        %978 = vmatprep.subr.mxu0 0.0
        %979 = vmatpush1.msra.mxu0 0.0
        %980 = vmatprep.subr.mxu0 0.0
        %981 = vmatpush1.msra.mxu0 0.0
        %982 = vmatprep.subr.mxu0 0.0
        %983 = vmatpush1.msra.mxu0 0.0
        %984 = vmatprep.subr.mxu0 0.0
        %985 = vmatpush1.msra.mxu0 0.0
        %986 = vmatprep.subr.mxu0 0.0
        %987 = vmatpush1.msra.mxu0 0.0
        %988 = vmatprep.subr.mxu0 0.0
        %989 = vmatpush1.msra.mxu0 0.0
        %990 = vmatprep.subr.mxu0 0.0
        %991 = vmatpush1.msra.mxu0 0.0
        %992 = vmatprep.subr.mxu0 0.0
        %993 = vmatpush1.msra.mxu0 0.0
        %994 = vmatprep.subr.mxu0 0.0
        %995 = vmatpush1.msra.mxu0 0.0
        %996 = vmatprep.subr.mxu0 0.0
        %997 = vmatpush1.msra.mxu0 0.0
        %998 = vmatprep.mubr.f32.mxu0 0.0
        %999 = vmatmul.mubr.f32.gmra.mrb[0].mxu0 %v386
        %v1000 = vpop.f32.mrb[0].mxu0
        %v1001 = vadd.f32 0.0, %v1000
        %v1002 = vpop.f32.mrb[0].mxu0
        %v1003 = vadd.f32 0.0, %v1002
        %1004 = vdwg.mxu0
        %v1005 = vmax.f32 %v504, %v646
        %v1006 = vmax.f32 %v506, %v648
        %v1007 = vmax.f32 %v575, %v717
        %v1008 = vmax.f32 %v577, %v719
        %v1009 = vmax.f32 %v788, %v930
        %v1010 = vmax.f32 %v790, %v932
        %v1011 = vmax.f32 %v859, %v1001
        %v1012 = vmax.f32 %v861, %v1003
        %v1013 = vmax.f32 %v1005, %v1009
        %v1014 = vmax.f32 %v1006, %v1010
        %v1015 = vmax.f32 %v1007, %v1011
        %v1016 = vmax.f32 %v1008, %v1012
        %v1017 = vld [vmem:[%s2] sm:$0x3f]
        %1019 = vset.pattern.permute.xlu0 0
        %1020 = vperm.xlu0 %1019, %v1017
        %v1021 = vpop.permute.xlu0 %1020
        %v1023 = vadd.f32 %v1013, %v1021
        %v1024 = vadd.f32 %v1014, %v1021
        %v1025 = vadd.f32 %v1015, %v1021
        %v1026 = vadd.f32 %v1016, %v1021
        %v1027 = vmax.f32 %v1023, 0.0
        %v1028 = vmax.f32 %v1024, 0.0
        %v1029 = vmax.f32 %v1025, 0.0
        %v1030 = vmax.f32 %v1026, 0.0
        %1031 = vst [vmem:[%s317] sm:$0x3f] %v1027
        %1032 = vst [vmem:[%s317 + $0x8] sm:$0x3f] %v1028
        %1033 = vst [vmem:[%s317 + $0x10] sm:$0x3f] %v1029
        %1034 = vst [vmem:[%s317 + $0x18] sm:$0x3f] %v1030
        %s1035 = smul.u32 4, %s14
        %p1036 = scmp.lt.s32.totalorder %s1035, 7
        %s1037 = scalar_select %p1036, %s1035, 7
        %s1038 = smul.addr %s1037, 8
        %s1039 = scalar_lea.vmem %s3, %s1038
        // Predicated region
        $region56: #{network_forward.3} parent=50 // pred_check
          %p1040 = pneg %p100
        $region57: #{network_forward.3} parent=50 // pred_check_branch
          %1042 = sbr.rel (%p1040) target = $region59
        $region58: #{network_forward.3} parent=50 // pred_region
          %s1043 = smul.u32 4, %s14
        $region59: #{network_forward.3} parent=50 // pred_fallthru
          _
      $region51: #{network_forward.3} parent=5 // pred_fallthru
        _
      %p1044 = scmp.le.s32.totalorder 2, %s9
      // Predicated region
      $region60: #{network_forward.3} parent=5 // pred_check
        %p1045 = pneg %p1044
      $region61: #{network_forward.3} parent=5 // pred_check_branch
        %1047 = sbr.rel (%p1045) target = $region63
      $region62: #{network_forward.3} parent=5 // pred_region
        %s1048 = ssub.s32 %s9, 2
        // Predicated region
        $region64: #{network_forward.3} parent=62 // pred_check
          %p1049 = pneg %p106
        $region65: #{network_forward.3} parent=62 // pred_check_branch
          %1051 = sbr.rel (%p1049) target = $region67
        $region66: #{network_forward.3} parent=62 // pred_region
          %s1052 = smul.u32 4, %s15
          %p1053 = scmp.lt.s32.totalorder %s1052, 7
          %s1054 = scalar_select %p1053, %s1052, 7
          %s1055 = smul.addr %s1054, 8
          %s1056 = scalar_lea.vmem %s3, %s1055
        $region67: #{network_forward.3} parent=62 // pred_fallthru
          _
      $region63: #{network_forward.3} parent=5 // pred_fallthru
        _
    $region6: #{network_forward.3} parent=1 // loop_footer
      %s13 = sadd.s32 1, %s9
    $region7: #{network_forward.3} parent=1 // loop_footer_branch
      %8 = sbr.rel target = $region3
    $region8: #{network_forward.3} parent=1 // loop_exit
      _

// kernel: network_forward.4
$region0: #{network_forward.4}
  #allocation0 [shape = 'u32[]', space=smem, size = 0x4, offset = 0x4, fixed_abs, tag = 'smem constant byte address 0x4 - core index']
  #allocation1 [shape = 'u32[144,128]{1,0:T(1,128)}', space=vmem, size = 0x12000, scoped, tag = 'internal scratch']
  %s0 = inlined_call_operand.vmem [shape: f32[150,4096], index: 0, kind: input, shape index: {}]
  %s1 = inlined_call_operand.vmem [shape: f32[12,150], index: 1, kind: input, shape index: {}]
  %s2 = inlined_call_operand.vmem [shape: f32[12,1], index: 2, kind: input, shape index: {}]
  %s3 = inlined_call_operand.vmem [shape: f32[12,1024], index: 3, kind: output, shape index: {}]
  %s4 = sld [smem:[#allocation0]]
  $region87: #{network_forward.4} parent=0
    _
  %s6 = ssub.s32 1, %s4
  %s7 = scalar_select 0, %s6, %s4
  $region1: #{network_forward.4} parent=0
    #allocation2 [shape = 'u8[2490368]{0}', space=vmem, size = 0x260000, scoped, tag = 'input window, operand 0']
    #allocation3 [shape = 'u8[65536]{0}', space=vmem, size = 0x10000, scoped, tag = 'output window, operand 0']
    loop: start=0, step=1, limit=4
    $region2: #{network_forward.4} parent=1 // loop_pre_header
      _
    $region3: #{network_forward.4} parent=1 // loop_header
      %s9 = sphi 0, %s13
      %p10 = scmp.ge.s32.totalorder %s9, 4
      %s19 = sphi 0, %s21
      %s22 = sphi 0, %s19
      %s23 = sphi 0, %s22
      %s39 = sphi 0, %s23
      %s43 = sphi 0, %s43
      %s45 = sphi 0, %s43
      %s46 = sphi 0, %s45
      %s60 = sphi 0, %s46
      %s64 = sphi 0, %s64
      %s66 = sphi 0, %s64
      %s67 = sphi 0, %s66
      %s81 = sphi 0, %s67
      %s87 = sphi 0, %s89
      %s90 = sphi 0, %s87
      %s91 = sphi 0, %s90
      %s107 = sphi 0, %s91
    $region4: #{network_forward.4} parent=1 // loop_header_branch
      %12 = sbr.rel (%p10) target = $region8
    $region5: #{network_forward.4} parent=1 // loop_body
      %s14 = ssub.s32 %s9, 1
      %s15 = ssub.s32 %s9, 2
      %s16 = sadd.s32 %s9, 1
      %s17 = ssub.s32 %s9, %s16
      %p18 = scmp.eq.s32.totalorder %s17, 0
      %s20 = sadd.s32 %s19, 1
      %s21 = scalar_select %p18, %s19, %s20
      %p24 = pneg %p18
      %p25 = scmp.eq.s32.totalorder %s9, 1
      %p26 = por %p24, %p25
      %p27 = scmp.ne.s32.totalorder %s19, %s22
      %p28 = scmp.eq.s32.totalorder %s9, 0
      %p29 = por %p27, %p28
      %p30 = scmp.ne.s32.totalorder %s19, %s22
      %p31 = scmp.eq.s32.totalorder %s14, 1
      %p32 = por %p30, %p31
      %p33 = scmp.ne.s32.totalorder %s22, %s23
      %p34 = scmp.eq.s32.totalorder %s14, 0
      %p35 = por %p33, %p34
      %p36 = scmp.ne.s32.totalorder %s22, %s23
      %p37 = scmp.eq.s32.totalorder %s15, 1
      %p38 = por %p36, %p37
      %p40 = scmp.ne.s32.totalorder %s23, %s39
      %p41 = scmp.eq.s32.totalorder %s15, 0
      %p42 = por %p40, %p41
      %s44 = sadd.s32 %s43, 1
      %p47 = scmp.eq.s32.totalorder %s9, 1
      %p48 = scmp.ne.s32.totalorder %s43, %s45
      %p49 = scmp.eq.s32.totalorder %s9, 0
      %p50 = por %p48, %p49
      %p51 = scmp.ne.s32.totalorder %s43, %s45
      %p52 = scmp.eq.s32.totalorder %s14, 1
      %p53 = por %p51, %p52
      %p54 = scmp.ne.s32.totalorder %s45, %s46
      %p55 = scmp.eq.s32.totalorder %s14, 0
      %p56 = por %p54, %p55
      %p57 = scmp.ne.s32.totalorder %s45, %s46
      %p58 = scmp.eq.s32.totalorder %s15, 1
      %p59 = por %p57, %p58
      %p61 = scmp.ne.s32.totalorder %s46, %s60
      %p62 = scmp.eq.s32.totalorder %s15, 0
      %p63 = por %p61, %p62
      %s65 = sadd.s32 %s64, 1
      %p68 = scmp.eq.s32.totalorder %s9, 1
      %p69 = scmp.ne.s32.totalorder %s64, %s66
      %p70 = scmp.eq.s32.totalorder %s9, 0
      %p71 = por %p69, %p70
      %p72 = scmp.ne.s32.totalorder %s64, %s66
      %p73 = scmp.eq.s32.totalorder %s14, 1
      %p74 = por %p72, %p73
      %p75 = scmp.ne.s32.totalorder %s66, %s67
      %p76 = scmp.eq.s32.totalorder %s14, 0
      %p77 = por %p75, %p76
      %p78 = scmp.ne.s32.totalorder %s66, %s67
      %p79 = scmp.eq.s32.totalorder %s15, 1
      %p80 = por %p78, %p79
      %p82 = scmp.ne.s32.totalorder %s67, %s81
      %p83 = scmp.eq.s32.totalorder %s15, 0
      %p84 = por %p82, %p83
      %s85 = ssub.s32 %s9, %s16
      %p86 = scmp.eq.s32.totalorder %s85, 0
      %s88 = sadd.s32 %s87, 1
      %s89 = scalar_select %p86, %s87, %s88
      %p92 = pneg %p86
      %p93 = scmp.eq.s32.totalorder %s9, 1
      %p94 = por %p92, %p93
      %p95 = scmp.ne.s32.totalorder %s87, %s90
      %p96 = scmp.eq.s32.totalorder %s9, 0
      %p97 = por %p95, %p96
      %p98 = scmp.ne.s32.totalorder %s87, %s90
      %p99 = scmp.eq.s32.totalorder %s14, 1
      %p100 = por %p98, %p99
      %p101 = scmp.ne.s32.totalorder %s90, %s91
      %p102 = scmp.eq.s32.totalorder %s14, 0
      %p103 = por %p101, %p102
      %p104 = scmp.ne.s32.totalorder %s90, %s91
      %p105 = scmp.eq.s32.totalorder %s15, 1
      %p106 = por %p104, %p105
      %p108 = scmp.ne.s32.totalorder %s91, %s107
      %p109 = scmp.eq.s32.totalorder %s15, 0
      %p110 = por %p108, %p109
      %p111 = scmp.le.s32.totalorder 1, %s9
      %p112 = scmp.lt.s32.totalorder %s9, 3
      %p113 = pnand %p111, %p112
      %p114 = pneg %p113
      // Predicated region
      $region9: #{network_forward.4} parent=5 // pred_check
        _
      $region10: #{network_forward.4} parent=5 // pred_check_branch
        %116 = sbr.rel (%p113) target = $region12
      $region11: #{network_forward.4} parent=5 // pred_region
        %s117 = ssub.s32 %s9, 1
        // Predicated region
        $region13: #{network_forward.4} parent=11 // pred_check
          %p118 = pneg %p56
        $region14: #{network_forward.4} parent=11 // pred_check_branch
          %120 = sbr.rel (%p118) target = $region16
        $region15: #{network_forward.4} parent=11 // pred_region
          _
        $region16: #{network_forward.4} parent=11 // pred_fallthru
          _
        // Predicated region
        $region17: #{network_forward.4} parent=11 // pred_check
          %p121 = pneg %p77
        $region18: #{network_forward.4} parent=11 // pred_check_branch
          %123 = sbr.rel (%p121) target = $region20
        $region19: #{network_forward.4} parent=11 // pred_region
          _
        $region20: #{network_forward.4} parent=11 // pred_fallthru
          _
      $region12: #{network_forward.4} parent=5 // pred_fallthru
        _
      %p124 = scmp.lt.s32.totalorder %s9, 2
      // Predicated region
      $region21: #{network_forward.4} parent=5 // pred_check
        %p125 = pneg %p124
      $region22: #{network_forward.4} parent=5 // pred_check_branch
        %127 = sbr.rel (%p125) target = $region24
      $region23: #{network_forward.4} parent=5 // pred_region
        // Predicated region
        $region25: #{network_forward.4} parent=23 // pred_check
          %p128 = pneg %p29
        $region26: #{network_forward.4} parent=23 // pred_check_branch
          %130 = sbr.rel (%p128) target = $region28
        $region27: #{network_forward.4} parent=23 // pred_region
          %s131 = sand.u32 %s19, 1
          %s132 = sand.u32 %s19, 1
          %s133 = smul.addr %s132, 2432
          %s134 = scalar_lea.vmem [#allocation2], %s133
          %s135 = smul.u32 16, %s9
          %s136 = smul.addr %s135, 8
          %s137 = scalar_lea.vmem %s0, %s136
          // Predicated region
          $region29: #{network_forward.4} parent=27 // pred_check
            _
          $region30: #{network_forward.4} parent=27 // pred_check_branch
            %139 = sbr.rel (0) target = $region32
          $region31: #{network_forward.4} parent=27 // pred_region
            // Predicated region
            $region33: #{network_forward.4} parent=31 // pred_check
              _
            $region34: #{network_forward.4} parent=31 // pred_check_branch
              %141 = sbr.rel (0) target = $region36
            $region35: #{network_forward.4} parent=31 // pred_region
              loop: start=0, step=1, limit=1
              $region37: #{network_forward.4} parent=35 // loop_pre_header
                _
              $region38: #{network_forward.4} parent=35 // loop_header
                %s143 = sphi 0, %s147
                %p144 = scmp.ge.s32.totalorder %s143, 1
                %s148 = sphi %s137, %s137
                %s149 = sphi %s134, %s134
              $region39: #{network_forward.4} parent=35 // loop_header_branch
                %146 = sbr.rel (%p144) target = $region43
              $region40: #{network_forward.4} parent=35 // loop_body
                %v150 = vld [vmem:[%s148] sm:$0xff]
                %151 = vst [vmem:[%s149] sm:$0xff] %v150
                %v152 = vld [vmem:[%s148 + $0x8] sm:$0xff]
                %153 = vst [vmem:[%s149 + $0x8] sm:$0xff] %v152
                %v154 = vld [vmem:[%s148 + $0x10] sm:$0xff]
                %155 = vst [vmem:[%s149 + $0x10] sm:$0xff] %v154
                %v156 = vld [vmem:[%s148 + $0x18] sm:$0xff]
                %157 = vst [vmem:[%s149 + $0x18] sm:$0xff] %v156
                %v158 = vld [vmem:[%s148 + $0x20] sm:$0xff]
                %159 = vst [vmem:[%s149 + $0x20] sm:$0xff] %v158
                %v160 = vld [vmem:[%s148 + $0x28] sm:$0xff]
                %161 = vst [vmem:[%s149 + $0x28] sm:$0xff] %v160
                %v162 = vld [vmem:[%s148 + $0x30] sm:$0xff]
                %163 = vst [vmem:[%s149 + $0x30] sm:$0xff] %v162
                %v164 = vld [vmem:[%s148 + $0x38] sm:$0xff]
                %165 = vst [vmem:[%s149 + $0x38] sm:$0xff] %v164
                %v166 = vld [vmem:[%s148 + $0x40] sm:$0xff]
                %167 = vst [vmem:[%s149 + $0x40] sm:$0xff] %v166
                %v168 = vld [vmem:[%s148 + $0x48] sm:$0xff]
                %169 = vst [vmem:[%s149 + $0x48] sm:$0xff] %v168
                %v170 = vld [vmem:[%s148 + $0x50] sm:$0xff]
                %171 = vst [vmem:[%s149 + $0x50] sm:$0xff] %v170
                %v172 = vld [vmem:[%s148 + $0x58] sm:$0xff]
                %173 = vst [vmem:[%s149 + $0x58] sm:$0xff] %v172
                %v174 = vld [vmem:[%s148 + $0x60] sm:$0xff]
                %175 = vst [vmem:[%s149 + $0x60] sm:$0xff] %v174
                %v176 = vld [vmem:[%s148 + $0x68] sm:$0xff]
                %177 = vst [vmem:[%s149 + $0x68] sm:$0xff] %v176
                %v178 = vld [vmem:[%s148 + $0x70] sm:$0xff]
                %179 = vst [vmem:[%s149 + $0x70] sm:$0xff] %v178
                %v180 = vld [vmem:[%s148 + $0x78] sm:$0xff]
                %181 = vst [vmem:[%s149 + $0x78] sm:$0xff] %v180
                %v182 = vld [vmem:[%s148 + $0x100] sm:$0xff]
                %183 = vst [vmem:[%s149 + $0x80] sm:$0xff] %v182
                %v184 = vld [vmem:[%s148 + $0x108] sm:$0xff]
                %185 = vst [vmem:[%s149 + $0x88] sm:$0xff] %v184
                %v186 = vld [vmem:[%s148 + $0x110] sm:$0xff]
                %187 = vst [vmem:[%s149 + $0x90] sm:$0xff] %v186
                %v188 = vld [vmem:[%s148 + $0x118] sm:$0xff]
                %189 = vst [vmem:[%s149 + $0x98] sm:$0xff] %v188
                %v190 = vld [vmem:[%s148 + $0x120] sm:$0xff]
                %191 = vst [vmem:[%s149 + $0xa0] sm:$0xff] %v190
                %v192 = vld [vmem:[%s148 + $0x128] sm:$0xff]
                %193 = vst [vmem:[%s149 + $0xa8] sm:$0xff] %v192
                %v194 = vld [vmem:[%s148 + $0x130] sm:$0xff]
                %195 = vst [vmem:[%s149 + $0xb0] sm:$0xff] %v194
                %v196 = vld [vmem:[%s148 + $0x138] sm:$0xff]
                %197 = vst [vmem:[%s149 + $0xb8] sm:$0xff] %v196
                %v198 = vld [vmem:[%s148 + $0x140] sm:$0xff]
                %199 = vst [vmem:[%s149 + $0xc0] sm:$0xff] %v198
                %v200 = vld [vmem:[%s148 + $0x148] sm:$0xff]
                %201 = vst [vmem:[%s149 + $0xc8] sm:$0xff] %v200
                %v202 = vld [vmem:[%s148 + $0x150] sm:$0xff]
                %203 = vst [vmem:[%s149 + $0xd0] sm:$0xff] %v202
                %v204 = vld [vmem:[%s148 + $0x158] sm:$0xff]
                %205 = vst [vmem:[%s149 + $0xd8] sm:$0xff] %v204
                %v206 = vld [vmem:[%s148 + $0x160] sm:$0xff]
                %207 = vst [vmem:[%s149 + $0xe0] sm:$0xff] %v206
                %v208 = vld [vmem:[%s148 + $0x168] sm:$0xff]
                %209 = vst [vmem:[%s149 + $0xe8] sm:$0xff] %v208
                %v210 = vld [vmem:[%s148 + $0x170] sm:$0xff]
                %211 = vst [vmem:[%s149 + $0xf0] sm:$0xff] %v210
                %v212 = vld [vmem:[%s148 + $0x178] sm:$0xff]
                %213 = vst [vmem:[%s149 + $0xf8] sm:$0xff] %v212
                %v214 = vld [vmem:[%s148 + $0x200] sm:$0xff]
                %215 = vst [vmem:[%s149 + $0x100] sm:$0xff] %v214
                %v216 = vld [vmem:[%s148 + $0x208] sm:$0xff]
                %217 = vst [vmem:[%s149 + $0x108] sm:$0xff] %v216
                %v218 = vld [vmem:[%s148 + $0x210] sm:$0xff]
                %219 = vst [vmem:[%s149 + $0x110] sm:$0xff] %v218
                %v220 = vld [vmem:[%s148 + $0x218] sm:$0xff]
                %221 = vst [vmem:[%s149 + $0x118] sm:$0xff] %v220
                %v222 = vld [vmem:[%s148 + $0x220] sm:$0xff]
                %223 = vst [vmem:[%s149 + $0x120] sm:$0xff] %v222
                %v224 = vld [vmem:[%s148 + $0x228] sm:$0xff]
                %225 = vst [vmem:[%s149 + $0x128] sm:$0xff] %v224
                %v226 = vld [vmem:[%s148 + $0x230] sm:$0xff]
                %227 = vst [vmem:[%s149 + $0x130] sm:$0xff] %v226
                %v228 = vld [vmem:[%s148 + $0x238] sm:$0xff]
                %229 = vst [vmem:[%s149 + $0x138] sm:$0xff] %v228
                %v230 = vld [vmem:[%s148 + $0x240] sm:$0xff]
                %231 = vst [vmem:[%s149 + $0x140] sm:$0xff] %v230
                %v232 = vld [vmem:[%s148 + $0x248] sm:$0xff]
                %233 = vst [vmem:[%s149 + $0x148] sm:$0xff] %v232
                %v234 = vld [vmem:[%s148 + $0x250] sm:$0xff]
                %235 = vst [vmem:[%s149 + $0x150] sm:$0xff] %v234
                %v236 = vld [vmem:[%s148 + $0x258] sm:$0xff]
                %237 = vst [vmem:[%s149 + $0x158] sm:$0xff] %v236
                %v238 = vld [vmem:[%s148 + $0x260] sm:$0xff]
                %239 = vst [vmem:[%s149 + $0x160] sm:$0xff] %v238
                %v240 = vld [vmem:[%s148 + $0x268] sm:$0xff]
                %241 = vst [vmem:[%s149 + $0x168] sm:$0xff] %v240
                %v242 = vld [vmem:[%s148 + $0x270] sm:$0xff]
                %243 = vst [vmem:[%s149 + $0x170] sm:$0xff] %v242
                %v244 = vld [vmem:[%s148 + $0x278] sm:$0xff]
                %245 = vst [vmem:[%s149 + $0x178] sm:$0xff] %v244
                %v246 = vld [vmem:[%s148 + $0x300] sm:$0xff]
                %247 = vst [vmem:[%s149 + $0x180] sm:$0xff] %v246
                %v248 = vld [vmem:[%s148 + $0x308] sm:$0xff]
                %249 = vst [vmem:[%s149 + $0x188] sm:$0xff] %v248
                %v250 = vld [vmem:[%s148 + $0x310] sm:$0xff]
                %251 = vst [vmem:[%s149 + $0x190] sm:$0xff] %v250
                %v252 = vld [vmem:[%s148 + $0x318] sm:$0xff]
                %253 = vst [vmem:[%s149 + $0x198] sm:$0xff] %v252
                %v254 = vld [vmem:[%s148 + $0x320] sm:$0xff]
                %255 = vst [vmem:[%s149 + $0x1a0] sm:$0xff] %v254
                %v256 = vld [vmem:[%s148 + $0x328] sm:$0xff]
                %257 = vst [vmem:[%s149 + $0x1a8] sm:$0xff] %v256
                %v258 = vld [vmem:[%s148 + $0x330] sm:$0xff]
                %259 = vst [vmem:[%s149 + $0x1b0] sm:$0xff] %v258
                %v260 = vld [vmem:[%s148 + $0x338] sm:$0xff]
                %261 = vst [vmem:[%s149 + $0x1b8] sm:$0xff] %v260
                %v262 = vld [vmem:[%s148 + $0x340] sm:$0xff]
                %263 = vst [vmem:[%s149 + $0x1c0] sm:$0xff] %v262
                %v264 = vld [vmem:[%s148 + $0x348] sm:$0xff]
                %265 = vst [vmem:[%s149 + $0x1c8] sm:$0xff] %v264
                %v266 = vld [vmem:[%s148 + $0x350] sm:$0xff]
                %267 = vst [vmem:[%s149 + $0x1d0] sm:$0xff] %v266
                %v268 = vld [vmem:[%s148 + $0x358] sm:$0xff]
                %269 = vst [vmem:[%s149 + $0x1d8] sm:$0xff] %v268
                %v270 = vld [vmem:[%s148 + $0x360] sm:$0xff]
                %271 = vst [vmem:[%s149 + $0x1e0] sm:$0xff] %v270
                %v272 = vld [vmem:[%s148 + $0x368] sm:$0xff]
                %273 = vst [vmem:[%s149 + $0x1e8] sm:$0xff] %v272
                %v274 = vld [vmem:[%s148 + $0x370] sm:$0xff]
                %275 = vst [vmem:[%s149 + $0x1f0] sm:$0xff] %v274
                %v276 = vld [vmem:[%s148 + $0x378] sm:$0xff]
                %277 = vst [vmem:[%s149 + $0x1f8] sm:$0xff] %v276
                %v278 = vld [vmem:[%s148 + $0x400] sm:$0xff]
                %279 = vst [vmem:[%s149 + $0x200] sm:$0xff] %v278
                %v280 = vld [vmem:[%s148 + $0x408] sm:$0xff]
                %281 = vst [vmem:[%s149 + $0x208] sm:$0xff] %v280
                %v282 = vld [vmem:[%s148 + $0x410] sm:$0xff]
                %283 = vst [vmem:[%s149 + $0x210] sm:$0xff] %v282
                %v284 = vld [vmem:[%s148 + $0x418] sm:$0xff]
                %285 = vst [vmem:[%s149 + $0x218] sm:$0xff] %v284
                %v286 = vld [vmem:[%s148 + $0x420] sm:$0xff]
                %287 = vst [vmem:[%s149 + $0x220] sm:$0xff] %v286
                %v288 = vld [vmem:[%s148 + $0x428] sm:$0xff]
                %289 = vst [vmem:[%s149 + $0x228] sm:$0xff] %v288
                %v290 = vld [vmem:[%s148 + $0x430] sm:$0xff]
                %291 = vst [vmem:[%s149 + $0x230] sm:$0xff] %v290
                %v292 = vld [vmem:[%s148 + $0x438] sm:$0xff]
                %293 = vst [vmem:[%s149 + $0x238] sm:$0xff] %v292
                %v294 = vld [vmem:[%s148 + $0x440] sm:$0xff]
                %295 = vst [vmem:[%s149 + $0x240] sm:$0xff] %v294
                %v296 = vld [vmem:[%s148 + $0x448] sm:$0xff]
                %297 = vst [vmem:[%s149 + $0x248] sm:$0xff] %v296
                %v298 = vld [vmem:[%s148 + $0x450] sm:$0xff]
                %299 = vst [vmem:[%s149 + $0x250] sm:$0xff] %v298
                %v300 = vld [vmem:[%s148 + $0x458] sm:$0xff]
                %301 = vst [vmem:[%s149 + $0x258] sm:$0xff] %v300
                %v302 = vld [vmem:[%s148 + $0x460] sm:$0xff]
                %303 = vst [vmem:[%s149 + $0x260] sm:$0xff] %v302
                %v304 = vld [vmem:[%s148 + $0x468] sm:$0xff]
                %305 = vst [vmem:[%s149 + $0x268] sm:$0xff] %v304
                %v306 = vld [vmem:[%s148 + $0x470] sm:$0xff]
                %307 = vst [vmem:[%s149 + $0x270] sm:$0xff] %v306
                %v308 = vld [vmem:[%s148 + $0x478] sm:$0xff]
                %309 = vst [vmem:[%s149 + $0x278] sm:$0xff] %v308
                %v310 = vld [vmem:[%s148 + $0x500] sm:$0xff]
                %311 = vst [vmem:[%s149 + $0x280] sm:$0xff] %v310
                %v312 = vld [vmem:[%s148 + $0x508] sm:$0xff]
                %313 = vst [vmem:[%s149 + $0x288] sm:$0xff] %v312
                %v314 = vld [vmem:[%s148 + $0x510] sm:$0xff]
                %315 = vst [vmem:[%s149 + $0x290] sm:$0xff] %v314
                %v316 = vld [vmem:[%s148 + $0x518] sm:$0xff]
                %317 = vst [vmem:[%s149 + $0x298] sm:$0xff] %v316
                %v318 = vld [vmem:[%s148 + $0x520] sm:$0xff]
                %319 = vst [vmem:[%s149 + $0x2a0] sm:$0xff] %v318
                %v320 = vld [vmem:[%s148 + $0x528] sm:$0xff]
                %321 = vst [vmem:[%s149 + $0x2a8] sm:$0xff] %v320
                %v322 = vld [vmem:[%s148 + $0x530] sm:$0xff]
                %323 = vst [vmem:[%s149 + $0x2b0] sm:$0xff] %v322
                %v324 = vld [vmem:[%s148 + $0x538] sm:$0xff]
                %325 = vst [vmem:[%s149 + $0x2b8] sm:$0xff] %v324
                %v326 = vld [vmem:[%s148 + $0x540] sm:$0xff]
                %327 = vst [vmem:[%s149 + $0x2c0] sm:$0xff] %v326
                %v328 = vld [vmem:[%s148 + $0x548] sm:$0xff]
                %329 = vst [vmem:[%s149 + $0x2c8] sm:$0xff] %v328
                %v330 = vld [vmem:[%s148 + $0x550] sm:$0xff]
                %331 = vst [vmem:[%s149 + $0x2d0] sm:$0xff] %v330
                %v332 = vld [vmem:[%s148 + $0x558] sm:$0xff]
                %333 = vst [vmem:[%s149 + $0x2d8] sm:$0xff] %v332
                %v334 = vld [vmem:[%s148 + $0x560] sm:$0xff]
                %335 = vst [vmem:[%s149 + $0x2e0] sm:$0xff] %v334
                %v336 = vld [vmem:[%s148 + $0x568] sm:$0xff]
                %337 = vst [vmem:[%s149 + $0x2e8] sm:$0xff] %v336
                %v338 = vld [vmem:[%s148 + $0x570] sm:$0xff]
                %339 = vst [vmem:[%s149 + $0x2f0] sm:$0xff] %v338
                %v340 = vld [vmem:[%s148 + $0x578] sm:$0xff]
                %341 = vst [vmem:[%s149 + $0x2f8] sm:$0xff] %v340
                %v342 = vld [vmem:[%s148 + $0x600] sm:$0xff]
                %343 = vst [vmem:[%s149 + $0x300] sm:$0xff] %v342
                %v344 = vld [vmem:[%s148 + $0x608] sm:$0xff]
                %345 = vst [vmem:[%s149 + $0x308] sm:$0xff] %v344
                %v346 = vld [vmem:[%s148 + $0x610] sm:$0xff]
                %347 = vst [vmem:[%s149 + $0x310] sm:$0xff] %v346
                %v348 = vld [vmem:[%s148 + $0x618] sm:$0xff]
                %349 = vst [vmem:[%s149 + $0x318] sm:$0xff] %v348
                %v350 = vld [vmem:[%s148 + $0x620] sm:$0xff]
                %351 = vst [vmem:[%s149 + $0x320] sm:$0xff] %v350
                %v352 = vld [vmem:[%s148 + $0x628] sm:$0xff]
                %353 = vst [vmem:[%s149 + $0x328] sm:$0xff] %v352
                %v354 = vld [vmem:[%s148 + $0x630] sm:$0xff]
                %355 = vst [vmem:[%s149 + $0x330] sm:$0xff] %v354
                %v356 = vld [vmem:[%s148 + $0x638] sm:$0xff]
                %357 = vst [vmem:[%s149 + $0x338] sm:$0xff] %v356
                %v358 = vld [vmem:[%s148 + $0x640] sm:$0xff]
                %359 = vst [vmem:[%s149 + $0x340] sm:$0xff] %v358
                %v360 = vld [vmem:[%s148 + $0x648] sm:$0xff]
                %361 = vst [vmem:[%s149 + $0x348] sm:$0xff] %v360
                %v362 = vld [vmem:[%s148 + $0x650] sm:$0xff]
                %363 = vst [vmem:[%s149 + $0x350] sm:$0xff] %v362
                %v364 = vld [vmem:[%s148 + $0x658] sm:$0xff]
                %365 = vst [vmem:[%s149 + $0x358] sm:$0xff] %v364
                %v366 = vld [vmem:[%s148 + $0x660] sm:$0xff]
                %367 = vst [vmem:[%s149 + $0x360] sm:$0xff] %v366
                %v368 = vld [vmem:[%s148 + $0x668] sm:$0xff]
                %369 = vst [vmem:[%s149 + $0x368] sm:$0xff] %v368
                %v370 = vld [vmem:[%s148 + $0x670] sm:$0xff]
                %371 = vst [vmem:[%s149 + $0x370] sm:$0xff] %v370
                %v372 = vld [vmem:[%s148 + $0x678] sm:$0xff]
                %373 = vst [vmem:[%s149 + $0x378] sm:$0xff] %v372
                %v374 = vld [vmem:[%s148 + $0x700] sm:$0xff]
                %375 = vst [vmem:[%s149 + $0x380] sm:$0xff] %v374
                %v376 = vld [vmem:[%s148 + $0x708] sm:$0xff]
                %377 = vst [vmem:[%s149 + $0x388] sm:$0xff] %v376
                %v378 = vld [vmem:[%s148 + $0x710] sm:$0xff]
                %379 = vst [vmem:[%s149 + $0x390] sm:$0xff] %v378
                %v380 = vld [vmem:[%s148 + $0x718] sm:$0xff]
                %381 = vst [vmem:[%s149 + $0x398] sm:$0xff] %v380
                %v382 = vld [vmem:[%s148 + $0x720] sm:$0xff]
                %383 = vst [vmem:[%s149 + $0x3a0] sm:$0xff] %v382
                %v384 = vld [vmem:[%s148 + $0x728] sm:$0xff]
                %385 = vst [vmem:[%s149 + $0x3a8] sm:$0xff] %v384
                %v386 = vld [vmem:[%s148 + $0x730] sm:$0xff]
                %387 = vst [vmem:[%s149 + $0x3b0] sm:$0xff] %v386
                %v388 = vld [vmem:[%s148 + $0x738] sm:$0xff]
                %389 = vst [vmem:[%s149 + $0x3b8] sm:$0xff] %v388
                %v390 = vld [vmem:[%s148 + $0x740] sm:$0xff]
                %391 = vst [vmem:[%s149 + $0x3c0] sm:$0xff] %v390
                %v392 = vld [vmem:[%s148 + $0x748] sm:$0xff]
                %393 = vst [vmem:[%s149 + $0x3c8] sm:$0xff] %v392
                %v394 = vld [vmem:[%s148 + $0x750] sm:$0xff]
                %395 = vst [vmem:[%s149 + $0x3d0] sm:$0xff] %v394
                %v396 = vld [vmem:[%s148 + $0x758] sm:$0xff]
                %397 = vst [vmem:[%s149 + $0x3d8] sm:$0xff] %v396
                %v398 = vld [vmem:[%s148 + $0x760] sm:$0xff]
                %399 = vst [vmem:[%s149 + $0x3e0] sm:$0xff] %v398
                %v400 = vld [vmem:[%s148 + $0x768] sm:$0xff]
                %401 = vst [vmem:[%s149 + $0x3e8] sm:$0xff] %v400
                %v402 = vld [vmem:[%s148 + $0x770] sm:$0xff]
                %403 = vst [vmem:[%s149 + $0x3f0] sm:$0xff] %v402
                %v404 = vld [vmem:[%s148 + $0x778] sm:$0xff]
                %405 = vst [vmem:[%s149 + $0x3f8] sm:$0xff] %v404
                %v406 = vld [vmem:[%s148 + $0x800] sm:$0xff]
                %407 = vst [vmem:[%s149 + $0x400] sm:$0xff] %v406
                %v408 = vld [vmem:[%s148 + $0x808] sm:$0xff]
                %409 = vst [vmem:[%s149 + $0x408] sm:$0xff] %v408
                %v410 = vld [vmem:[%s148 + $0x810] sm:$0xff]
                %411 = vst [vmem:[%s149 + $0x410] sm:$0xff] %v410
                %v412 = vld [vmem:[%s148 + $0x818] sm:$0xff]
                %413 = vst [vmem:[%s149 + $0x418] sm:$0xff] %v412
                %v414 = vld [vmem:[%s148 + $0x820] sm:$0xff]
                %415 = vst [vmem:[%s149 + $0x420] sm:$0xff] %v414
                %v416 = vld [vmem:[%s148 + $0x828] sm:$0xff]
                %417 = vst [vmem:[%s149 + $0x428] sm:$0xff] %v416
                %v418 = vld [vmem:[%s148 + $0x830] sm:$0xff]
                %419 = vst [vmem:[%s149 + $0x430] sm:$0xff] %v418
                %v420 = vld [vmem:[%s148 + $0x838] sm:$0xff]
                %421 = vst [vmem:[%s149 + $0x438] sm:$0xff] %v420
                %v422 = vld [vmem:[%s148 + $0x840] sm:$0xff]
                %423 = vst [vmem:[%s149 + $0x440] sm:$0xff] %v422
                %v424 = vld [vmem:[%s148 + $0x848] sm:$0xff]
                %425 = vst [vmem:[%s149 + $0x448] sm:$0xff] %v424
                %v426 = vld [vmem:[%s148 + $0x850] sm:$0xff]
                %427 = vst [vmem:[%s149 + $0x450] sm:$0xff] %v426
                %v428 = vld [vmem:[%s148 + $0x858] sm:$0xff]
                %429 = vst [vmem:[%s149 + $0x458] sm:$0xff] %v428
                %v430 = vld [vmem:[%s148 + $0x860] sm:$0xff]
                %431 = vst [vmem:[%s149 + $0x460] sm:$0xff] %v430
                %v432 = vld [vmem:[%s148 + $0x868] sm:$0xff]
                %433 = vst [vmem:[%s149 + $0x468] sm:$0xff] %v432
                %v434 = vld [vmem:[%s148 + $0x870] sm:$0xff]
                %435 = vst [vmem:[%s149 + $0x470] sm:$0xff] %v434
                %v436 = vld [vmem:[%s148 + $0x878] sm:$0xff]
                %437 = vst [vmem:[%s149 + $0x478] sm:$0xff] %v436
                %v438 = vld [vmem:[%s148 + $0x900] sm:$0xff]
                %439 = vst [vmem:[%s149 + $0x480] sm:$0xff] %v438
                %v440 = vld [vmem:[%s148 + $0x908] sm:$0xff]
                %441 = vst [vmem:[%s149 + $0x488] sm:$0xff] %v440
                %v442 = vld [vmem:[%s148 + $0x910] sm:$0xff]
                %443 = vst [vmem:[%s149 + $0x490] sm:$0xff] %v442
                %v444 = vld [vmem:[%s148 + $0x918] sm:$0xff]
                %445 = vst [vmem:[%s149 + $0x498] sm:$0xff] %v444
                %v446 = vld [vmem:[%s148 + $0x920] sm:$0xff]
                %447 = vst [vmem:[%s149 + $0x4a0] sm:$0xff] %v446
                %v448 = vld [vmem:[%s148 + $0x928] sm:$0xff]
                %449 = vst [vmem:[%s149 + $0x4a8] sm:$0xff] %v448
                %v450 = vld [vmem:[%s148 + $0x930] sm:$0xff]
                %451 = vst [vmem:[%s149 + $0x4b0] sm:$0xff] %v450
                %v452 = vld [vmem:[%s148 + $0x938] sm:$0xff]
                %453 = vst [vmem:[%s149 + $0x4b8] sm:$0xff] %v452
                %v454 = vld [vmem:[%s148 + $0x940] sm:$0xff]
                %455 = vst [vmem:[%s149 + $0x4c0] sm:$0xff] %v454
                %v456 = vld [vmem:[%s148 + $0x948] sm:$0xff]
                %457 = vst [vmem:[%s149 + $0x4c8] sm:$0xff] %v456
                %v458 = vld [vmem:[%s148 + $0x950] sm:$0xff]
                %459 = vst [vmem:[%s149 + $0x4d0] sm:$0xff] %v458
                %v460 = vld [vmem:[%s148 + $0x958] sm:$0xff]
                %461 = vst [vmem:[%s149 + $0x4d8] sm:$0xff] %v460
                %v462 = vld [vmem:[%s148 + $0x960] sm:$0xff]
                %463 = vst [vmem:[%s149 + $0x4e0] sm:$0xff] %v462
                %v464 = vld [vmem:[%s148 + $0x968] sm:$0xff]
                %465 = vst [vmem:[%s149 + $0x4e8] sm:$0xff] %v464
                %v466 = vld [vmem:[%s148 + $0x970] sm:$0xff]
                %467 = vst [vmem:[%s149 + $0x4f0] sm:$0xff] %v466
                %v468 = vld [vmem:[%s148 + $0x978] sm:$0xff]
                %469 = vst [vmem:[%s149 + $0x4f8] sm:$0xff] %v468
                %v470 = vld [vmem:[%s148 + $0xa00] sm:$0xff]
                %471 = vst [vmem:[%s149 + $0x500] sm:$0xff] %v470
                %v472 = vld [vmem:[%s148 + $0xa08] sm:$0xff]
                %473 = vst [vmem:[%s149 + $0x508] sm:$0xff] %v472
                %v474 = vld [vmem:[%s148 + $0xa10] sm:$0xff]
                %475 = vst [vmem:[%s149 + $0x510] sm:$0xff] %v474
                %v476 = vld [vmem:[%s148 + $0xa18] sm:$0xff]
                %477 = vst [vmem:[%s149 + $0x518] sm:$0xff] %v476
                %v478 = vld [vmem:[%s148 + $0xa20] sm:$0xff]
                %479 = vst [vmem:[%s149 + $0x520] sm:$0xff] %v478
                %v480 = vld [vmem:[%s148 + $0xa28] sm:$0xff]
                %481 = vst [vmem:[%s149 + $0x528] sm:$0xff] %v480
                %v482 = vld [vmem:[%s148 + $0xa30] sm:$0xff]
                %483 = vst [vmem:[%s149 + $0x530] sm:$0xff] %v482
                %v484 = vld [vmem:[%s148 + $0xa38] sm:$0xff]
                %485 = vst [vmem:[%s149 + $0x538] sm:$0xff] %v484
                %v486 = vld [vmem:[%s148 + $0xa40] sm:$0xff]
                %487 = vst [vmem:[%s149 + $0x540] sm:$0xff] %v486
                %v488 = vld [vmem:[%s148 + $0xa48] sm:$0xff]
                %489 = vst [vmem:[%s149 + $0x548] sm:$0xff] %v488
                %v490 = vld [vmem:[%s148 + $0xa50] sm:$0xff]
                %491 = vst [vmem:[%s149 + $0x550] sm:$0xff] %v490
                %v492 = vld [vmem:[%s148 + $0xa58] sm:$0xff]
                %493 = vst [vmem:[%s149 + $0x558] sm:$0xff] %v492
                %v494 = vld [vmem:[%s148 + $0xa60] sm:$0xff]
                %495 = vst [vmem:[%s149 + $0x560] sm:$0xff] %v494
                %v496 = vld [vmem:[%s148 + $0xa68] sm:$0xff]
                %497 = vst [vmem:[%s149 + $0x568] sm:$0xff] %v496
                %v498 = vld [vmem:[%s148 + $0xa70] sm:$0xff]
                %499 = vst [vmem:[%s149 + $0x570] sm:$0xff] %v498
                %v500 = vld [vmem:[%s148 + $0xa78] sm:$0xff]
                %501 = vst [vmem:[%s149 + $0x578] sm:$0xff] %v500
                %v502 = vld [vmem:[%s148 + $0xb00] sm:$0xff]
                %503 = vst [vmem:[%s149 + $0x580] sm:$0xff] %v502
                %v504 = vld [vmem:[%s148 + $0xb08] sm:$0xff]
                %505 = vst [vmem:[%s149 + $0x588] sm:$0xff] %v504
                %v506 = vld [vmem:[%s148 + $0xb10] sm:$0xff]
                %507 = vst [vmem:[%s149 + $0x590] sm:$0xff] %v506
                %v508 = vld [vmem:[%s148 + $0xb18] sm:$0xff]
                %509 = vst [vmem:[%s149 + $0x598] sm:$0xff] %v508
                %v510 = vld [vmem:[%s148 + $0xb20] sm:$0xff]
                %511 = vst [vmem:[%s149 + $0x5a0] sm:$0xff] %v510
                %v512 = vld [vmem:[%s148 + $0xb28] sm:$0xff]
                %513 = vst [vmem:[%s149 + $0x5a8] sm:$0xff] %v512
                %v514 = vld [vmem:[%s148 + $0xb30] sm:$0xff]
                %515 = vst [vmem:[%s149 + $0x5b0] sm:$0xff] %v514
                %v516 = vld [vmem:[%s148 + $0xb38] sm:$0xff]
                %517 = vst [vmem:[%s149 + $0x5b8] sm:$0xff] %v516
                %v518 = vld [vmem:[%s148 + $0xb40] sm:$0xff]
                %519 = vst [vmem:[%s149 + $0x5c0] sm:$0xff] %v518
                %v520 = vld [vmem:[%s148 + $0xb48] sm:$0xff]
                %521 = vst [vmem:[%s149 + $0x5c8] sm:$0xff] %v520
                %v522 = vld [vmem:[%s148 + $0xb50] sm:$0xff]
                %523 = vst [vmem:[%s149 + $0x5d0] sm:$0xff] %v522
                %v524 = vld [vmem:[%s148 + $0xb58] sm:$0xff]
                %525 = vst [vmem:[%s149 + $0x5d8] sm:$0xff] %v524
                %v526 = vld [vmem:[%s148 + $0xb60] sm:$0xff]
                %527 = vst [vmem:[%s149 + $0x5e0] sm:$0xff] %v526
                %v528 = vld [vmem:[%s148 + $0xb68] sm:$0xff]
                %529 = vst [vmem:[%s149 + $0x5e8] sm:$0xff] %v528
                %v530 = vld [vmem:[%s148 + $0xb70] sm:$0xff]
                %531 = vst [vmem:[%s149 + $0x5f0] sm:$0xff] %v530
                %v532 = vld [vmem:[%s148 + $0xb78] sm:$0xff]
                %533 = vst [vmem:[%s149 + $0x5f8] sm:$0xff] %v532
                %v534 = vld [vmem:[%s148 + $0xc00] sm:$0xff]
                %535 = vst [vmem:[%s149 + $0x600] sm:$0xff] %v534
                %v536 = vld [vmem:[%s148 + $0xc08] sm:$0xff]
                %537 = vst [vmem:[%s149 + $0x608] sm:$0xff] %v536
                %v538 = vld [vmem:[%s148 + $0xc10] sm:$0xff]
                %539 = vst [vmem:[%s149 + $0x610] sm:$0xff] %v538
                %v540 = vld [vmem:[%s148 + $0xc18] sm:$0xff]
                %541 = vst [vmem:[%s149 + $0x618] sm:$0xff] %v540
                %v542 = vld [vmem:[%s148 + $0xc20] sm:$0xff]
                %543 = vst [vmem:[%s149 + $0x620] sm:$0xff] %v542
                %v544 = vld [vmem:[%s148 + $0xc28] sm:$0xff]
                %545 = vst [vmem:[%s149 + $0x628] sm:$0xff] %v544
                %v546 = vld [vmem:[%s148 + $0xc30] sm:$0xff]
                %547 = vst [vmem:[%s149 + $0x630] sm:$0xff] %v546
                %v548 = vld [vmem:[%s148 + $0xc38] sm:$0xff]
                %549 = vst [vmem:[%s149 + $0x638] sm:$0xff] %v548
                %v550 = vld [vmem:[%s148 + $0xc40] sm:$0xff]
                %551 = vst [vmem:[%s149 + $0x640] sm:$0xff] %v550
                %v552 = vld [vmem:[%s148 + $0xc48] sm:$0xff]
                %553 = vst [vmem:[%s149 + $0x648] sm:$0xff] %v552
                %v554 = vld [vmem:[%s148 + $0xc50] sm:$0xff]
                %555 = vst [vmem:[%s149 + $0x650] sm:$0xff] %v554
                %v556 = vld [vmem:[%s148 + $0xc58] sm:$0xff]
                %557 = vst [vmem:[%s149 + $0x658] sm:$0xff] %v556
                %v558 = vld [vmem:[%s148 + $0xc60] sm:$0xff]
                %559 = vst [vmem:[%s149 + $0x660] sm:$0xff] %v558
                %v560 = vld [vmem:[%s148 + $0xc68] sm:$0xff]
                %561 = vst [vmem:[%s149 + $0x668] sm:$0xff] %v560
                %v562 = vld [vmem:[%s148 + $0xc70] sm:$0xff]
                %563 = vst [vmem:[%s149 + $0x670] sm:$0xff] %v562
                %v564 = vld [vmem:[%s148 + $0xc78] sm:$0xff]
                %565 = vst [vmem:[%s149 + $0x678] sm:$0xff] %v564
                %v566 = vld [vmem:[%s148 + $0xd00] sm:$0xff]
                %567 = vst [vmem:[%s149 + $0x680] sm:$0xff] %v566
                %v568 = vld [vmem:[%s148 + $0xd08] sm:$0xff]
                %569 = vst [vmem:[%s149 + $0x688] sm:$0xff] %v568
                %v570 = vld [vmem:[%s148 + $0xd10] sm:$0xff]
                %571 = vst [vmem:[%s149 + $0x690] sm:$0xff] %v570
                %v572 = vld [vmem:[%s148 + $0xd18] sm:$0xff]
                %573 = vst [vmem:[%s149 + $0x698] sm:$0xff] %v572
                %v574 = vld [vmem:[%s148 + $0xd20] sm:$0xff]
                %575 = vst [vmem:[%s149 + $0x6a0] sm:$0xff] %v574
                %v576 = vld [vmem:[%s148 + $0xd28] sm:$0xff]
                %577 = vst [vmem:[%s149 + $0x6a8] sm:$0xff] %v576
                %v578 = vld [vmem:[%s148 + $0xd30] sm:$0xff]
                %579 = vst [vmem:[%s149 + $0x6b0] sm:$0xff] %v578
                %v580 = vld [vmem:[%s148 + $0xd38] sm:$0xff]
                %581 = vst [vmem:[%s149 + $0x6b8] sm:$0xff] %v580
                %v582 = vld [vmem:[%s148 + $0xd40] sm:$0xff]
                %583 = vst [vmem:[%s149 + $0x6c0] sm:$0xff] %v582
                %v584 = vld [vmem:[%s148 + $0xd48] sm:$0xff]
                %585 = vst [vmem:[%s149 + $0x6c8] sm:$0xff] %v584
                %v586 = vld [vmem:[%s148 + $0xd50] sm:$0xff]
                %587 = vst [vmem:[%s149 + $0x6d0] sm:$0xff] %v586
                %v588 = vld [vmem:[%s148 + $0xd58] sm:$0xff]
                %589 = vst [vmem:[%s149 + $0x6d8] sm:$0xff] %v588
                %v590 = vld [vmem:[%s148 + $0xd60] sm:$0xff]
                %591 = vst [vmem:[%s149 + $0x6e0] sm:$0xff] %v590
                %v592 = vld [vmem:[%s148 + $0xd68] sm:$0xff]
                %593 = vst [vmem:[%s149 + $0x6e8] sm:$0xff] %v592
                %v594 = vld [vmem:[%s148 + $0xd70] sm:$0xff]
                %595 = vst [vmem:[%s149 + $0x6f0] sm:$0xff] %v594
                %v596 = vld [vmem:[%s148 + $0xd78] sm:$0xff]
                %597 = vst [vmem:[%s149 + $0x6f8] sm:$0xff] %v596
                %v598 = vld [vmem:[%s148 + $0xe00] sm:$0xff]
                %599 = vst [vmem:[%s149 + $0x700] sm:$0xff] %v598
                %v600 = vld [vmem:[%s148 + $0xe08] sm:$0xff]
                %601 = vst [vmem:[%s149 + $0x708] sm:$0xff] %v600
                %v602 = vld [vmem:[%s148 + $0xe10] sm:$0xff]
                %603 = vst [vmem:[%s149 + $0x710] sm:$0xff] %v602
                %v604 = vld [vmem:[%s148 + $0xe18] sm:$0xff]
                %605 = vst [vmem:[%s149 + $0x718] sm:$0xff] %v604
                %v606 = vld [vmem:[%s148 + $0xe20] sm:$0xff]
                %607 = vst [vmem:[%s149 + $0x720] sm:$0xff] %v606
                %v608 = vld [vmem:[%s148 + $0xe28] sm:$0xff]
                %609 = vst [vmem:[%s149 + $0x728] sm:$0xff] %v608
                %v610 = vld [vmem:[%s148 + $0xe30] sm:$0xff]
                %611 = vst [vmem:[%s149 + $0x730] sm:$0xff] %v610
                %v612 = vld [vmem:[%s148 + $0xe38] sm:$0xff]
                %613 = vst [vmem:[%s149 + $0x738] sm:$0xff] %v612
                %v614 = vld [vmem:[%s148 + $0xe40] sm:$0xff]
                %615 = vst [vmem:[%s149 + $0x740] sm:$0xff] %v614
                %v616 = vld [vmem:[%s148 + $0xe48] sm:$0xff]
                %617 = vst [vmem:[%s149 + $0x748] sm:$0xff] %v616
                %v618 = vld [vmem:[%s148 + $0xe50] sm:$0xff]
                %619 = vst [vmem:[%s149 + $0x750] sm:$0xff] %v618
                %v620 = vld [vmem:[%s148 + $0xe58] sm:$0xff]
                %621 = vst [vmem:[%s149 + $0x758] sm:$0xff] %v620
                %v622 = vld [vmem:[%s148 + $0xe60] sm:$0xff]
                %623 = vst [vmem:[%s149 + $0x760] sm:$0xff] %v622
                %v624 = vld [vmem:[%s148 + $0xe68] sm:$0xff]
                %625 = vst [vmem:[%s149 + $0x768] sm:$0xff] %v624
                %v626 = vld [vmem:[%s148 + $0xe70] sm:$0xff]
                %627 = vst [vmem:[%s149 + $0x770] sm:$0xff] %v626
                %v628 = vld [vmem:[%s148 + $0xe78] sm:$0xff]
                %629 = vst [vmem:[%s149 + $0x778] sm:$0xff] %v628
                %v630 = vld [vmem:[%s148 + $0xf00] sm:$0xff]
                %631 = vst [vmem:[%s149 + $0x780] sm:$0xff] %v630
                %v632 = vld [vmem:[%s148 + $0xf08] sm:$0xff]
                %633 = vst [vmem:[%s149 + $0x788] sm:$0xff] %v632
                %v634 = vld [vmem:[%s148 + $0xf10] sm:$0xff]
                %635 = vst [vmem:[%s149 + $0x790] sm:$0xff] %v634
                %v636 = vld [vmem:[%s148 + $0xf18] sm:$0xff]
                %637 = vst [vmem:[%s149 + $0x798] sm:$0xff] %v636
                %v638 = vld [vmem:[%s148 + $0xf20] sm:$0xff]
                %639 = vst [vmem:[%s149 + $0x7a0] sm:$0xff] %v638
                %v640 = vld [vmem:[%s148 + $0xf28] sm:$0xff]
                %641 = vst [vmem:[%s149 + $0x7a8] sm:$0xff] %v640
                %v642 = vld [vmem:[%s148 + $0xf30] sm:$0xff]
                %643 = vst [vmem:[%s149 + $0x7b0] sm:$0xff] %v642
                %v644 = vld [vmem:[%s148 + $0xf38] sm:$0xff]
                %645 = vst [vmem:[%s149 + $0x7b8] sm:$0xff] %v644
                %v646 = vld [vmem:[%s148 + $0xf40] sm:$0xff]
                %647 = vst [vmem:[%s149 + $0x7c0] sm:$0xff] %v646
                %v648 = vld [vmem:[%s148 + $0xf48] sm:$0xff]
                %649 = vst [vmem:[%s149 + $0x7c8] sm:$0xff] %v648
                %v650 = vld [vmem:[%s148 + $0xf50] sm:$0xff]
                %651 = vst [vmem:[%s149 + $0x7d0] sm:$0xff] %v650
                %v652 = vld [vmem:[%s148 + $0xf58] sm:$0xff]
                %653 = vst [vmem:[%s149 + $0x7d8] sm:$0xff] %v652
                %v654 = vld [vmem:[%s148 + $0xf60] sm:$0xff]
                %655 = vst [vmem:[%s149 + $0x7e0] sm:$0xff] %v654
                %v656 = vld [vmem:[%s148 + $0xf68] sm:$0xff]
                %657 = vst [vmem:[%s149 + $0x7e8] sm:$0xff] %v656
                %v658 = vld [vmem:[%s148 + $0xf70] sm:$0xff]
                %659 = vst [vmem:[%s149 + $0x7f0] sm:$0xff] %v658
                %v660 = vld [vmem:[%s148 + $0xf78] sm:$0xff]
                %661 = vst [vmem:[%s149 + $0x7f8] sm:$0xff] %v660
                %v662 = vld [vmem:[%s148 + $0x1000] sm:$0xff]
                %663 = vst [vmem:[%s149 + $0x800] sm:$0xff] %v662
                %v664 = vld [vmem:[%s148 + $0x1008] sm:$0xff]
                %665 = vst [vmem:[%s149 + $0x808] sm:$0xff] %v664
                %v666 = vld [vmem:[%s148 + $0x1010] sm:$0xff]
                %667 = vst [vmem:[%s149 + $0x810] sm:$0xff] %v666
                %v668 = vld [vmem:[%s148 + $0x1018] sm:$0xff]
                %669 = vst [vmem:[%s149 + $0x818] sm:$0xff] %v668
                %v670 = vld [vmem:[%s148 + $0x1020] sm:$0xff]
                %671 = vst [vmem:[%s149 + $0x820] sm:$0xff] %v670
                %v672 = vld [vmem:[%s148 + $0x1028] sm:$0xff]
                %673 = vst [vmem:[%s149 + $0x828] sm:$0xff] %v672
                %v674 = vld [vmem:[%s148 + $0x1030] sm:$0xff]
                %675 = vst [vmem:[%s149 + $0x830] sm:$0xff] %v674
                %v676 = vld [vmem:[%s148 + $0x1038] sm:$0xff]
                %677 = vst [vmem:[%s149 + $0x838] sm:$0xff] %v676
                %v678 = vld [vmem:[%s148 + $0x1040] sm:$0xff]
                %679 = vst [vmem:[%s149 + $0x840] sm:$0xff] %v678
                %v680 = vld [vmem:[%s148 + $0x1048] sm:$0xff]
                %681 = vst [vmem:[%s149 + $0x848] sm:$0xff] %v680
                %v682 = vld [vmem:[%s148 + $0x1050] sm:$0xff]
                %683 = vst [vmem:[%s149 + $0x850] sm:$0xff] %v682
                %v684 = vld [vmem:[%s148 + $0x1058] sm:$0xff]
                %685 = vst [vmem:[%s149 + $0x858] sm:$0xff] %v684
                %v686 = vld [vmem:[%s148 + $0x1060] sm:$0xff]
                %687 = vst [vmem:[%s149 + $0x860] sm:$0xff] %v686
                %v688 = vld [vmem:[%s148 + $0x1068] sm:$0xff]
                %689 = vst [vmem:[%s149 + $0x868] sm:$0xff] %v688
                %v690 = vld [vmem:[%s148 + $0x1070] sm:$0xff]
                %691 = vst [vmem:[%s149 + $0x870] sm:$0xff] %v690
                %v692 = vld [vmem:[%s148 + $0x1078] sm:$0xff]
                %693 = vst [vmem:[%s149 + $0x878] sm:$0xff] %v692
                %v694 = vld [vmem:[%s148 + $0x1100] sm:$0xff]
                %695 = vst [vmem:[%s149 + $0x880] sm:$0xff] %v694
                %v696 = vld [vmem:[%s148 + $0x1108] sm:$0xff]
                %697 = vst [vmem:[%s149 + $0x888] sm:$0xff] %v696
                %v698 = vld [vmem:[%s148 + $0x1110] sm:$0xff]
                %699 = vst [vmem:[%s149 + $0x890] sm:$0xff] %v698
                %v700 = vld [vmem:[%s148 + $0x1118] sm:$0xff]
                %701 = vst [vmem:[%s149 + $0x898] sm:$0xff] %v700
                %v702 = vld [vmem:[%s148 + $0x1120] sm:$0xff]
                %703 = vst [vmem:[%s149 + $0x8a0] sm:$0xff] %v702
                %v704 = vld [vmem:[%s148 + $0x1128] sm:$0xff]
                %705 = vst [vmem:[%s149 + $0x8a8] sm:$0xff] %v704
                %v706 = vld [vmem:[%s148 + $0x1130] sm:$0xff]
                %707 = vst [vmem:[%s149 + $0x8b0] sm:$0xff] %v706
                %v708 = vld [vmem:[%s148 + $0x1138] sm:$0xff]
                %709 = vst [vmem:[%s149 + $0x8b8] sm:$0xff] %v708
                %v710 = vld [vmem:[%s148 + $0x1140] sm:$0xff]
                %711 = vst [vmem:[%s149 + $0x8c0] sm:$0xff] %v710
                %v712 = vld [vmem:[%s148 + $0x1148] sm:$0xff]
                %713 = vst [vmem:[%s149 + $0x8c8] sm:$0xff] %v712
                %v714 = vld [vmem:[%s148 + $0x1150] sm:$0xff]
                %715 = vst [vmem:[%s149 + $0x8d0] sm:$0xff] %v714
                %v716 = vld [vmem:[%s148 + $0x1158] sm:$0xff]
                %717 = vst [vmem:[%s149 + $0x8d8] sm:$0xff] %v716
                %v718 = vld [vmem:[%s148 + $0x1160] sm:$0xff]
                %719 = vst [vmem:[%s149 + $0x8e0] sm:$0xff] %v718
                %v720 = vld [vmem:[%s148 + $0x1168] sm:$0xff]
                %721 = vst [vmem:[%s149 + $0x8e8] sm:$0xff] %v720
                %v722 = vld [vmem:[%s148 + $0x1170] sm:$0xff]
                %723 = vst [vmem:[%s149 + $0x8f0] sm:$0xff] %v722
                %v724 = vld [vmem:[%s148 + $0x1178] sm:$0xff]
                %725 = vst [vmem:[%s149 + $0x8f8] sm:$0xff] %v724
                %v726 = vld [vmem:[%s148 + $0x1200] sm:$0xff]
                %727 = vst [vmem:[%s149 + $0x900] sm:$0xff] %v726
                %v728 = vld [vmem:[%s148 + $0x1208] sm:$0xff]
                %729 = vst [vmem:[%s149 + $0x908] sm:$0xff] %v728
                %v730 = vld [vmem:[%s148 + $0x1210] sm:$0xff]
                %731 = vst [vmem:[%s149 + $0x910] sm:$0xff] %v730
                %v732 = vld [vmem:[%s148 + $0x1218] sm:$0xff]
                %733 = vst [vmem:[%s149 + $0x918] sm:$0xff] %v732
                %v734 = vld [vmem:[%s148 + $0x1220] sm:$0xff]
                %735 = vst [vmem:[%s149 + $0x920] sm:$0xff] %v734
                %v736 = vld [vmem:[%s148 + $0x1228] sm:$0xff]
                %737 = vst [vmem:[%s149 + $0x928] sm:$0xff] %v736
                %v738 = vld [vmem:[%s148 + $0x1230] sm:$0xff]
                %739 = vst [vmem:[%s149 + $0x930] sm:$0xff] %v738
                %v740 = vld [vmem:[%s148 + $0x1238] sm:$0xff]
                %741 = vst [vmem:[%s149 + $0x938] sm:$0xff] %v740
                %v742 = vld [vmem:[%s148 + $0x1240] sm:$0xff]
                %743 = vst [vmem:[%s149 + $0x940] sm:$0xff] %v742
                %v744 = vld [vmem:[%s148 + $0x1248] sm:$0xff]
                %745 = vst [vmem:[%s149 + $0x948] sm:$0xff] %v744
                %v746 = vld [vmem:[%s148 + $0x1250] sm:$0xff]
                %747 = vst [vmem:[%s149 + $0x950] sm:$0xff] %v746
                %v748 = vld [vmem:[%s148 + $0x1258] sm:$0xff]
                %749 = vst [vmem:[%s149 + $0x958] sm:$0xff] %v748
                %v750 = vld [vmem:[%s148 + $0x1260] sm:$0xff]
                %751 = vst [vmem:[%s149 + $0x960] sm:$0xff] %v750
                %v752 = vld [vmem:[%s148 + $0x1268] sm:$0xff]
                %753 = vst [vmem:[%s149 + $0x968] sm:$0xff] %v752
                %v754 = vld [vmem:[%s148 + $0x1270] sm:$0xff]
                %755 = vst [vmem:[%s149 + $0x970] sm:$0xff] %v754
                %v756 = vld [vmem:[%s148 + $0x1278] sm:$0xff]
                %757 = vst [vmem:[%s149 + $0x978] sm:$0xff] %v756
              $region41: #{network_forward.4} parent=35 // loop_footer
                %s147 = sadd.s32 1, %s143
              $region42: #{network_forward.4} parent=35 // loop_footer_branch
                %142 = sbr.rel target = $region38
              $region43: #{network_forward.4} parent=35 // loop_exit
                _
            $region36: #{network_forward.4} parent=31 // pred_fallthru
              _
            // Predicated region
            $region44: #{network_forward.4} parent=31 // pred_check
              _
            $region45: #{network_forward.4} parent=31 // pred_check_branch
              %759 = sbr.rel target = $region47
            $region46: #{network_forward.4} parent=31 // pred_region
              _
            $region47: #{network_forward.4} parent=31 // pred_fallthru
              _
          $region32: #{network_forward.4} parent=27 // pred_fallthru
            _
          %760 = vnop
        $region28: #{network_forward.4} parent=23 // pred_fallthru
          _
      $region24: #{network_forward.4} parent=5 // pred_fallthru
        _
      %p761 = scmp.le.s32.totalorder 1, %s9
      %p762 = scmp.lt.s32.totalorder %s9, 3
      %p763 = pnand %p761, %p762
      %p764 = pneg %p763
      // Predicated region
      $region48: #{network_forward.4} parent=5 // pred_check
        _
      $region49: #{network_forward.4} parent=5 // pred_check_branch
        %766 = sbr.rel (%p763) target = $region51
      $region50: #{network_forward.4} parent=5 // pred_region
        %s767 = ssub.s32 %s9, 1
        %s768 = sand.u32 %s22, 1
        %s769 = sand.u32 %s22, 1
        %s770 = smul.addr %s769, 2432
        %s771 = scalar_lea.vmem [#allocation2], %s770
        // Predicated region
        $region52: #{network_forward.4} parent=50 // pred_check
          %p772 = pneg %p35
        $region53: #{network_forward.4} parent=50 // pred_check_branch
          %774 = sbr.rel (%p772) target = $region55
        $region54: #{network_forward.4} parent=50 // pred_region
          _
        $region55: #{network_forward.4} parent=50 // pred_fallthru
          _
        %s775 = sand.u32 %s22, 1
        %s776 = sand.u32 %s22, 1
        %s777 = smul.addr %s776, 2432
        %s778 = scalar_lea.vmem [#allocation2], %s777
        %p779 = pneg %p35
        %p780 = pneg %p32
        %p781 = pneg %p56
        %p782 = pneg %p53
        %p783 = pneg %p77
        %p784 = pneg %p74
        %p785 = pneg %p103
        %p786 = pneg %p100
        %s787 = sand.u32 %s90, 1
        %s788 = sand.u32 %s90, 1
        %s789 = smul.addr %s788, 64
        %s790 = scalar_lea.vmem [#allocation3], %s789
        %s791 = smul.u32 16, %s14
        %s792 = smul.u32 4, %s14
        %v793 = vld [vmem:[%s1] sm:$0xff]
        %v794 = vld [vmem:[%s1 + $0x8] sm:$0xff]
        %v795 = vld [vmem:[%s1 + $0x10] sm:$0xf]
        %v796 = vld [vmem:[%s1 + $0x18] sm:$0xf]
        %v797 = vld [vmem:[%s771] sm:$0xff]
        %v798 = vld [vmem:[%s771 + $0x8] sm:$0xff]
        %v799 = vld [vmem:[%s771 + $0x10] sm:$0xff]
        %v800 = vld [vmem:[%s771 + $0x18] sm:$0xff]
        %v801 = vld [vmem:[%s771 + $0x20] sm:$0xff]
        %v802 = vld [vmem:[%s771 + $0x28] sm:$0xff]
        %v803 = vld [vmem:[%s771 + $0x30] sm:$0xff]
        %v804 = vld [vmem:[%s771 + $0x38] sm:$0xff]
        %v805 = vld [vmem:[%s771 + $0x40] sm:$0xff]
        %v806 = vld [vmem:[%s771 + $0x48] sm:$0xff]
        %v807 = vld [vmem:[%s771 + $0x50] sm:$0xff]
        %v808 = vld [vmem:[%s771 + $0x58] sm:$0xff]
        %v809 = vld [vmem:[%s771 + $0x60] sm:$0xff]
        %v810 = vld [vmem:[%s771 + $0x68] sm:$0xff]
        %v811 = vld [vmem:[%s771 + $0x70] sm:$0xff]
        %v812 = vld [vmem:[%s771 + $0x78] sm:$0xff]
        %v813 = vld [vmem:[%s771 + $0x80] sm:$0xff]
        %v814 = vld [vmem:[%s771 + $0x88] sm:$0xff]
        %v815 = vld [vmem:[%s771 + $0x90] sm:$0xff]
        %v816 = vld [vmem:[%s771 + $0x98] sm:$0xff]
        %v817 = vld [vmem:[%s771 + $0xa0] sm:$0xff]
        %v818 = vld [vmem:[%s771 + $0xa8] sm:$0xff]
        %v819 = vld [vmem:[%s771 + $0xb0] sm:$0xff]
        %v820 = vld [vmem:[%s771 + $0xb8] sm:$0xff]
        %v821 = vld [vmem:[%s771 + $0xc0] sm:$0xff]
        %v822 = vld [vmem:[%s771 + $0xc8] sm:$0xff]
        %v823 = vld [vmem:[%s771 + $0xd0] sm:$0xff]
        %v824 = vld [vmem:[%s771 + $0xd8] sm:$0xff]
        %v825 = vld [vmem:[%s771 + $0xe0] sm:$0xff]
        %v826 = vld [vmem:[%s771 + $0xe8] sm:$0xff]
        %v827 = vld [vmem:[%s771 + $0xf0] sm:$0xff]
        %v828 = vld [vmem:[%s771 + $0xf8] sm:$0xff]
        %v829 = vld [vmem:[%s771 + $0x100] sm:$0xff]
        %v830 = vld [vmem:[%s771 + $0x108] sm:$0xff]
        %v831 = vld [vmem:[%s771 + $0x110] sm:$0xff]
        %v832 = vld [vmem:[%s771 + $0x118] sm:$0xff]
        %v833 = vld [vmem:[%s771 + $0x120] sm:$0xff]
        %v834 = vld [vmem:[%s771 + $0x128] sm:$0xff]
        %v835 = vld [vmem:[%s771 + $0x130] sm:$0xff]
        %v836 = vld [vmem:[%s771 + $0x138] sm:$0xff]
        %v837 = vld [vmem:[%s771 + $0x140] sm:$0xff]
        %v838 = vld [vmem:[%s771 + $0x148] sm:$0xff]
        %v839 = vld [vmem:[%s771 + $0x150] sm:$0xff]
        %v840 = vld [vmem:[%s771 + $0x158] sm:$0xff]
        %v841 = vld [vmem:[%s771 + $0x160] sm:$0xff]
        %v842 = vld [vmem:[%s771 + $0x168] sm:$0xff]
        %v843 = vld [vmem:[%s771 + $0x170] sm:$0xff]
        %v844 = vld [vmem:[%s771 + $0x178] sm:$0xff]
        %v845 = vld [vmem:[%s771 + $0x180] sm:$0xff]
        %v846 = vld [vmem:[%s771 + $0x188] sm:$0xff]
        %v847 = vld [vmem:[%s771 + $0x190] sm:$0xff]
        %v848 = vld [vmem:[%s771 + $0x198] sm:$0xff]
        %v849 = vld [vmem:[%s771 + $0x1a0] sm:$0xff]
        %v850 = vld [vmem:[%s771 + $0x1a8] sm:$0xff]
        %v851 = vld [vmem:[%s771 + $0x1b0] sm:$0xff]
        %v852 = vld [vmem:[%s771 + $0x1b8] sm:$0xff]
        %v853 = vld [vmem:[%s771 + $0x1c0] sm:$0xff]
        %v854 = vld [vmem:[%s771 + $0x1c8] sm:$0xff]
        %v855 = vld [vmem:[%s771 + $0x1d0] sm:$0xff]
        %v856 = vld [vmem:[%s771 + $0x1d8] sm:$0xff]
        %v857 = vld [vmem:[%s771 + $0x1e0] sm:$0xff]
        %v858 = vld [vmem:[%s771 + $0x1e8] sm:$0xff]
        %v859 = vld [vmem:[%s771 + $0x1f0] sm:$0xff]
        %v860 = vld [vmem:[%s771 + $0x1f8] sm:$0xff]
        %v861 = vld [vmem:[%s771 + $0x200] sm:$0xff]
        %v862 = vld [vmem:[%s771 + $0x208] sm:$0xff]
        %v863 = vld [vmem:[%s771 + $0x210] sm:$0xff]
        %v864 = vld [vmem:[%s771 + $0x218] sm:$0xff]
        %v865 = vld [vmem:[%s771 + $0x220] sm:$0xff]
        %v866 = vld [vmem:[%s771 + $0x228] sm:$0xff]
        %v867 = vld [vmem:[%s771 + $0x230] sm:$0xff]
        %v868 = vld [vmem:[%s771 + $0x238] sm:$0xff]
        %v869 = vld [vmem:[%s771 + $0x240] sm:$0xff]
        %v870 = vld [vmem:[%s771 + $0x248] sm:$0xff]
        %v871 = vld [vmem:[%s771 + $0x250] sm:$0xff]
        %v872 = vld [vmem:[%s771 + $0x258] sm:$0xff]
        %v873 = vld [vmem:[%s771 + $0x260] sm:$0xff]
        %v874 = vld [vmem:[%s771 + $0x268] sm:$0xff]
        %v875 = vld [vmem:[%s771 + $0x270] sm:$0xff]
        %v876 = vld [vmem:[%s771 + $0x278] sm:$0xff]
        %v877 = vld [vmem:[%s771 + $0x280] sm:$0xff]
        %v878 = vld [vmem:[%s771 + $0x288] sm:$0xff]
        %v879 = vld [vmem:[%s771 + $0x290] sm:$0xff]
        %v880 = vld [vmem:[%s771 + $0x298] sm:$0xff]
        %v881 = vld [vmem:[%s771 + $0x2a0] sm:$0xff]
        %v882 = vld [vmem:[%s771 + $0x2a8] sm:$0xff]
        %v883 = vld [vmem:[%s771 + $0x2b0] sm:$0xff]
        %v884 = vld [vmem:[%s771 + $0x2b8] sm:$0xff]
        %v885 = vld [vmem:[%s771 + $0x2c0] sm:$0xff]
        %v886 = vld [vmem:[%s771 + $0x2c8] sm:$0xff]
        %v887 = vld [vmem:[%s771 + $0x2d0] sm:$0xff]
        %v888 = vld [vmem:[%s771 + $0x2d8] sm:$0xff]
        %v889 = vld [vmem:[%s771 + $0x2e0] sm:$0xff]
        %v890 = vld [vmem:[%s771 + $0x2e8] sm:$0xff]
        %v891 = vld [vmem:[%s771 + $0x2f0] sm:$0xff]
        %v892 = vld [vmem:[%s771 + $0x2f8] sm:$0xff]
        %v893 = vld [vmem:[%s771 + $0x300] sm:$0xff]
        %v894 = vld [vmem:[%s771 + $0x308] sm:$0xff]
        %v895 = vld [vmem:[%s771 + $0x310] sm:$0xff]
        %v896 = vld [vmem:[%s771 + $0x318] sm:$0xff]
        %v897 = vld [vmem:[%s771 + $0x320] sm:$0xff]
        %v898 = vld [vmem:[%s771 + $0x328] sm:$0xff]
        %v899 = vld [vmem:[%s771 + $0x330] sm:$0xff]
        %v900 = vld [vmem:[%s771 + $0x338] sm:$0xff]
        %v901 = vld [vmem:[%s771 + $0x340] sm:$0xff]
        %v902 = vld [vmem:[%s771 + $0x348] sm:$0xff]
        %v903 = vld [vmem:[%s771 + $0x350] sm:$0xff]
        %v904 = vld [vmem:[%s771 + $0x358] sm:$0xff]
        %v905 = vld [vmem:[%s771 + $0x360] sm:$0xff]
        %v906 = vld [vmem:[%s771 + $0x368] sm:$0xff]
        %v907 = vld [vmem:[%s771 + $0x370] sm:$0xff]
        %v908 = vld [vmem:[%s771 + $0x378] sm:$0xff]
        %v909 = vld [vmem:[%s771 + $0x380] sm:$0xff]
        %v910 = vld [vmem:[%s771 + $0x388] sm:$0xff]
        %v911 = vld [vmem:[%s771 + $0x390] sm:$0xff]
        %v912 = vld [vmem:[%s771 + $0x398] sm:$0xff]
        %v913 = vld [vmem:[%s771 + $0x3a0] sm:$0xff]
        %v914 = vld [vmem:[%s771 + $0x3a8] sm:$0xff]
        %v915 = vld [vmem:[%s771 + $0x3b0] sm:$0xff]
        %v916 = vld [vmem:[%s771 + $0x3b8] sm:$0xff]
        %v917 = vld [vmem:[%s771 + $0x3c0] sm:$0xff]
        %v918 = vld [vmem:[%s771 + $0x3c8] sm:$0xff]
        %v919 = vld [vmem:[%s771 + $0x3d0] sm:$0xff]
        %v920 = vld [vmem:[%s771 + $0x3d8] sm:$0xff]
        %v921 = vld [vmem:[%s771 + $0x3e0] sm:$0xff]
        %v922 = vld [vmem:[%s771 + $0x3e8] sm:$0xff]
        %v923 = vld [vmem:[%s771 + $0x3f0] sm:$0xff]
        %v924 = vld [vmem:[%s771 + $0x3f8] sm:$0xff]
        %v925 = vld [vmem:[%s771 + $0x400] sm:$0xff]
        %v926 = vld [vmem:[%s771 + $0x408] sm:$0xff]
        %v927 = vld [vmem:[%s771 + $0x410] sm:$0xff]
        %v928 = vld [vmem:[%s771 + $0x418] sm:$0xff]
        %v929 = vld [vmem:[%s771 + $0x420] sm:$0xff]
        %v930 = vld [vmem:[%s771 + $0x428] sm:$0xff]
        %v931 = vld [vmem:[%s771 + $0x430] sm:$0xff]
        %v932 = vld [vmem:[%s771 + $0x438] sm:$0xff]
        %v933 = vld [vmem:[%s771 + $0x440] sm:$0xff]
        %v934 = vld [vmem:[%s771 + $0x448] sm:$0xff]
        %v935 = vld [vmem:[%s771 + $0x450] sm:$0xff]
        %v936 = vld [vmem:[%s771 + $0x458] sm:$0xff]
        %v937 = vld [vmem:[%s771 + $0x460] sm:$0xff]
        %v938 = vld [vmem:[%s771 + $0x468] sm:$0xff]
        %v939 = vld [vmem:[%s771 + $0x470] sm:$0xff]
        %v940 = vld [vmem:[%s771 + $0x478] sm:$0xff]
        %v941 = vld [vmem:[%s771 + $0x480] sm:$0xff]
        %v942 = vld [vmem:[%s771 + $0x488] sm:$0xff]
        %v943 = vld [vmem:[%s771 + $0x490] sm:$0xff]
        %v944 = vld [vmem:[%s771 + $0x498] sm:$0xff]
        %v945 = vld [vmem:[%s771 + $0x4a0] sm:$0xff]
        %v946 = vld [vmem:[%s771 + $0x4a8] sm:$0xff]
        %v947 = vld [vmem:[%s771 + $0x4b0] sm:$0xff]
        %v948 = vld [vmem:[%s771 + $0x4b8] sm:$0xff]
        %v949 = vld [vmem:[%s771 + $0x4c0] sm:$0xff]
        %v950 = vld [vmem:[%s771 + $0x4c8] sm:$0xff]
        %v951 = vld [vmem:[%s771 + $0x4d0] sm:$0xff]
        %v952 = vld [vmem:[%s771 + $0x4d8] sm:$0xff]
        %v953 = vld [vmem:[%s771 + $0x4e0] sm:$0xff]
        %v954 = vld [vmem:[%s771 + $0x4e8] sm:$0xff]
        %v955 = vld [vmem:[%s771 + $0x4f0] sm:$0xff]
        %v956 = vld [vmem:[%s771 + $0x4f8] sm:$0xff]
        %v957 = vld [vmem:[%s771 + $0x500] sm:$0xff]
        %v958 = vld [vmem:[%s771 + $0x508] sm:$0xff]
        %v959 = vld [vmem:[%s771 + $0x510] sm:$0xff]
        %v960 = vld [vmem:[%s771 + $0x518] sm:$0xff]
        %v961 = vld [vmem:[%s771 + $0x520] sm:$0xff]
        %v962 = vld [vmem:[%s771 + $0x528] sm:$0xff]
        %v963 = vld [vmem:[%s771 + $0x530] sm:$0xff]
        %v964 = vld [vmem:[%s771 + $0x538] sm:$0xff]
        %v965 = vld [vmem:[%s771 + $0x540] sm:$0xff]
        %v966 = vld [vmem:[%s771 + $0x548] sm:$0xff]
        %v967 = vld [vmem:[%s771 + $0x550] sm:$0xff]
        %v968 = vld [vmem:[%s771 + $0x558] sm:$0xff]
        %v969 = vld [vmem:[%s771 + $0x560] sm:$0xff]
        %v970 = vld [vmem:[%s771 + $0x568] sm:$0xff]
        %v971 = vld [vmem:[%s771 + $0x570] sm:$0xff]
        %v972 = vld [vmem:[%s771 + $0x578] sm:$0xff]
        %v973 = vld [vmem:[%s771 + $0x580] sm:$0xff]
        %v974 = vld [vmem:[%s771 + $0x588] sm:$0xff]
        %v975 = vld [vmem:[%s771 + $0x590] sm:$0xff]
        %v976 = vld [vmem:[%s771 + $0x598] sm:$0xff]
        %v977 = vld [vmem:[%s771 + $0x5a0] sm:$0xff]
        %v978 = vld [vmem:[%s771 + $0x5a8] sm:$0xff]
        %v979 = vld [vmem:[%s771 + $0x5b0] sm:$0xff]
        %v980 = vld [vmem:[%s771 + $0x5b8] sm:$0xff]
        %v981 = vld [vmem:[%s771 + $0x5c0] sm:$0xff]
        %v982 = vld [vmem:[%s771 + $0x5c8] sm:$0xff]
        %v983 = vld [vmem:[%s771 + $0x5d0] sm:$0xff]
        %v984 = vld [vmem:[%s771 + $0x5d8] sm:$0xff]
        %v985 = vld [vmem:[%s771 + $0x5e0] sm:$0xff]
        %v986 = vld [vmem:[%s771 + $0x5e8] sm:$0xff]
        %v987 = vld [vmem:[%s771 + $0x5f0] sm:$0xff]
        %v988 = vld [vmem:[%s771 + $0x5f8] sm:$0xff]
        %v989 = vld [vmem:[%s771 + $0x600] sm:$0xff]
        %v990 = vld [vmem:[%s771 + $0x608] sm:$0xff]
        %v991 = vld [vmem:[%s771 + $0x610] sm:$0xff]
        %v992 = vld [vmem:[%s771 + $0x618] sm:$0xff]
        %v993 = vld [vmem:[%s771 + $0x620] sm:$0xff]
        %v994 = vld [vmem:[%s771 + $0x628] sm:$0xff]
        %v995 = vld [vmem:[%s771 + $0x630] sm:$0xff]
        %v996 = vld [vmem:[%s771 + $0x638] sm:$0xff]
        %v997 = vld [vmem:[%s771 + $0x640] sm:$0xff]
        %v998 = vld [vmem:[%s771 + $0x648] sm:$0xff]
        %v999 = vld [vmem:[%s771 + $0x650] sm:$0xff]
        %v1000 = vld [vmem:[%s771 + $0x658] sm:$0xff]
        %v1001 = vld [vmem:[%s771 + $0x660] sm:$0xff]
        %v1002 = vld [vmem:[%s771 + $0x668] sm:$0xff]
        %v1003 = vld [vmem:[%s771 + $0x670] sm:$0xff]
        %v1004 = vld [vmem:[%s771 + $0x678] sm:$0xff]
        %v1005 = vld [vmem:[%s771 + $0x680] sm:$0xff]
        %v1006 = vld [vmem:[%s771 + $0x688] sm:$0xff]
        %v1007 = vld [vmem:[%s771 + $0x690] sm:$0xff]
        %v1008 = vld [vmem:[%s771 + $0x698] sm:$0xff]
        %v1009 = vld [vmem:[%s771 + $0x6a0] sm:$0xff]
        %v1010 = vld [vmem:[%s771 + $0x6a8] sm:$0xff]
        %v1011 = vld [vmem:[%s771 + $0x6b0] sm:$0xff]
        %v1012 = vld [vmem:[%s771 + $0x6b8] sm:$0xff]
        %v1013 = vld [vmem:[%s771 + $0x6c0] sm:$0xff]
        %v1014 = vld [vmem:[%s771 + $0x6c8] sm:$0xff]
        %v1015 = vld [vmem:[%s771 + $0x6d0] sm:$0xff]
        %v1016 = vld [vmem:[%s771 + $0x6d8] sm:$0xff]
        %v1017 = vld [vmem:[%s771 + $0x6e0] sm:$0xff]
        %v1018 = vld [vmem:[%s771 + $0x6e8] sm:$0xff]
        %v1019 = vld [vmem:[%s771 + $0x6f0] sm:$0xff]
        %v1020 = vld [vmem:[%s771 + $0x6f8] sm:$0xff]
        %v1021 = vld [vmem:[%s771 + $0x700] sm:$0xff]
        %v1022 = vld [vmem:[%s771 + $0x708] sm:$0xff]
        %v1023 = vld [vmem:[%s771 + $0x710] sm:$0xff]
        %v1024 = vld [vmem:[%s771 + $0x718] sm:$0xff]
        %v1025 = vld [vmem:[%s771 + $0x720] sm:$0xff]
        %v1026 = vld [vmem:[%s771 + $0x728] sm:$0xff]
        %v1027 = vld [vmem:[%s771 + $0x730] sm:$0xff]
        %v1028 = vld [vmem:[%s771 + $0x738] sm:$0xff]
        %v1029 = vld [vmem:[%s771 + $0x740] sm:$0xff]
        %v1030 = vld [vmem:[%s771 + $0x748] sm:$0xff]
        %v1031 = vld [vmem:[%s771 + $0x750] sm:$0xff]
        %v1032 = vld [vmem:[%s771 + $0x758] sm:$0xff]
        %v1033 = vld [vmem:[%s771 + $0x760] sm:$0xff]
        %v1034 = vld [vmem:[%s771 + $0x768] sm:$0xff]
        %v1035 = vld [vmem:[%s771 + $0x770] sm:$0xff]
        %v1036 = vld [vmem:[%s771 + $0x778] sm:$0xff]
        %v1037 = vld [vmem:[%s771 + $0x780] sm:$0xff]
        %v1038 = vld [vmem:[%s771 + $0x788] sm:$0xff]
        %v1039 = vld [vmem:[%s771 + $0x790] sm:$0xff]
        %v1040 = vld [vmem:[%s771 + $0x798] sm:$0xff]
        %v1041 = vld [vmem:[%s771 + $0x7a0] sm:$0xff]
        %v1042 = vld [vmem:[%s771 + $0x7a8] sm:$0xff]
        %v1043 = vld [vmem:[%s771 + $0x7b0] sm:$0xff]
        %v1044 = vld [vmem:[%s771 + $0x7b8] sm:$0xff]
        %v1045 = vld [vmem:[%s771 + $0x7c0] sm:$0xff]
        %v1046 = vld [vmem:[%s771 + $0x7c8] sm:$0xff]
        %v1047 = vld [vmem:[%s771 + $0x7d0] sm:$0xff]
        %v1048 = vld [vmem:[%s771 + $0x7d8] sm:$0xff]
        %v1049 = vld [vmem:[%s771 + $0x7e0] sm:$0xff]
        %v1050 = vld [vmem:[%s771 + $0x7e8] sm:$0xff]
        %v1051 = vld [vmem:[%s771 + $0x7f0] sm:$0xff]
        %v1052 = vld [vmem:[%s771 + $0x7f8] sm:$0xff]
        %v1053 = vld [vmem:[%s771 + $0x800] sm:$0xff]
        %v1054 = vld [vmem:[%s771 + $0x808] sm:$0xff]
        %v1055 = vld [vmem:[%s771 + $0x810] sm:$0xff]
        %v1056 = vld [vmem:[%s771 + $0x818] sm:$0xff]
        %v1057 = vld [vmem:[%s771 + $0x820] sm:$0xff]
        %v1058 = vld [vmem:[%s771 + $0x828] sm:$0xff]
        %v1059 = vld [vmem:[%s771 + $0x830] sm:$0xff]
        %v1060 = vld [vmem:[%s771 + $0x838] sm:$0xff]
        %v1061 = vld [vmem:[%s771 + $0x840] sm:$0xff]
        %v1062 = vld [vmem:[%s771 + $0x848] sm:$0xff]
        %v1063 = vld [vmem:[%s771 + $0x850] sm:$0xff]
        %v1064 = vld [vmem:[%s771 + $0x858] sm:$0xff]
        %v1065 = vld [vmem:[%s771 + $0x860] sm:$0xff]
        %v1066 = vld [vmem:[%s771 + $0x868] sm:$0xff]
        %v1067 = vld [vmem:[%s771 + $0x870] sm:$0xff]
        %v1068 = vld [vmem:[%s771 + $0x878] sm:$0xff]
        %v1069 = vld [vmem:[%s771 + $0x880] sm:$0xff]
        %v1070 = vld [vmem:[%s771 + $0x888] sm:$0xff]
        %v1071 = vld [vmem:[%s771 + $0x890] sm:$0xff]
        %v1072 = vld [vmem:[%s771 + $0x898] sm:$0xff]
        %v1073 = vld [vmem:[%s771 + $0x8a0] sm:$0xff]
        %v1074 = vld [vmem:[%s771 + $0x8a8] sm:$0xff]
        %v1075 = vld [vmem:[%s771 + $0x8b0] sm:$0xff]
        %v1076 = vld [vmem:[%s771 + $0x8b8] sm:$0xff]
        %v1077 = vld [vmem:[%s771 + $0x8c0] sm:$0xff]
        %v1078 = vld [vmem:[%s771 + $0x8c8] sm:$0xff]
        %v1079 = vld [vmem:[%s771 + $0x8d0] sm:$0xff]
        %v1080 = vld [vmem:[%s771 + $0x8d8] sm:$0xff]
        %v1081 = vld [vmem:[%s771 + $0x8e0] sm:$0xff]
        %v1082 = vld [vmem:[%s771 + $0x8e8] sm:$0xff]
        %v1083 = vld [vmem:[%s771 + $0x8f0] sm:$0xff]
        %v1084 = vld [vmem:[%s771 + $0x8f8] sm:$0xff]
        %v1085 = vld [vmem:[%s771 + $0x900] sm:$0x3f]
        %v1086 = vld [vmem:[%s771 + $0x908] sm:$0x3f]
        %v1087 = vld [vmem:[%s771 + $0x910] sm:$0x3f]
        %v1088 = vld [vmem:[%s771 + $0x918] sm:$0x3f]
        %v1089 = vld [vmem:[%s771 + $0x920] sm:$0x3f]
        %v1090 = vld [vmem:[%s771 + $0x928] sm:$0x3f]
        %v1091 = vld [vmem:[%s771 + $0x930] sm:$0x3f]
        %v1092 = vld [vmem:[%s771 + $0x938] sm:$0x3f]
        %v1093 = vld [vmem:[%s771 + $0x940] sm:$0x3f]
        %v1094 = vld [vmem:[%s771 + $0x948] sm:$0x3f]
        %v1095 = vld [vmem:[%s771 + $0x950] sm:$0x3f]
        %v1096 = vld [vmem:[%s771 + $0x958] sm:$0x3f]
        %v1097 = vld [vmem:[%s771 + $0x960] sm:$0x3f]
        %v1098 = vld [vmem:[%s771 + $0x968] sm:$0x3f]
        %v1099 = vld [vmem:[%s771 + $0x970] sm:$0x3f]
        %v1100 = vld [vmem:[%s771 + $0x978] sm:$0x3f]
        %vm1101 = vcmask 179200
        %v1103 = vsel %vm1101, %v794, 0
        %v1106 = vsel %vm1101, %v796, 0
        %vm1108 = vcmask 1045504
        %v1110 = vsel %vm1108, %v1085, 0
        %v1113 = vsel %vm1108, %v1086, 0
        %v1116 = vsel %vm1108, %v1087, 0
        %v1119 = vsel %vm1108, %v1088, 0
        %v1122 = vsel %vm1108, %v1089, 0
        %v1125 = vsel %vm1108, %v1090, 0
        %v1128 = vsel %vm1108, %v1091, 0
        %v1131 = vsel %vm1108, %v1092, 0
        %v1134 = vsel %vm1108, %v1093, 0
        %v1137 = vsel %vm1108, %v1094, 0
        %v1140 = vsel %vm1108, %v1095, 0
        %v1143 = vsel %vm1108, %v1096, 0
        %v1146 = vsel %vm1108, %v1097, 0
        %v1149 = vsel %vm1108, %v1098, 0
        %v1152 = vsel %vm1108, %v1099, 0
        %v1155 = vsel %vm1108, %v1100, 0
        %1157 = vmatprep.subr.mxu0 %v798
        %1158 = vmatpush1.msra.mxu0 %v797
        %1159 = vmatprep.subr.mxu0 %v814
        %1160 = vmatpush1.msra.mxu0 %v813
        %1161 = vmatprep.subr.mxu0 %v830
        %1162 = vmatpush1.msra.mxu0 %v829
        %1163 = vmatprep.subr.mxu0 %v846
        %1164 = vmatpush1.msra.mxu0 %v845
        %1165 = vmatprep.subr.mxu0 %v862
        %1166 = vmatpush1.msra.mxu0 %v861
        %1167 = vmatprep.subr.mxu0 %v878
        %1168 = vmatpush1.msra.mxu0 %v877
        %1169 = vmatprep.subr.mxu0 %v894
        %1170 = vmatpush1.msra.mxu0 %v893
        %1171 = vmatprep.subr.mxu0 %v910
        %1172 = vmatpush1.msra.mxu0 %v909
        %1173 = vmatprep.subr.mxu0 %v926
        %1174 = vmatpush1.msra.mxu0 %v925
        %1175 = vmatprep.subr.mxu0 %v942
        %1176 = vmatpush1.msra.mxu0 %v941
        %1177 = vmatprep.subr.mxu0 %v958
        %1178 = vmatpush1.msra.mxu0 %v957
        %1179 = vmatprep.subr.mxu0 %v974
        %1180 = vmatpush1.msra.mxu0 %v973
        %1181 = vmatprep.subr.mxu0 %v990
        %1182 = vmatpush1.msra.mxu0 %v989
        %1183 = vmatprep.subr.mxu0 %v1006
        %1184 = vmatpush1.msra.mxu0 %v1005
        %1185 = vmatprep.subr.mxu0 %v1022
        %1186 = vmatpush1.msra.mxu0 %v1021
        %1187 = vmatprep.subr.mxu0 %v1038
        %1188 = vmatpush1.msra.mxu0 %v1037
        %1189 = vmatprep.subr.mxu0 %v1054
        %1190 = vmatpush1.msra.mxu0 %v1053
        %1191 = vmatprep.subr.mxu0 %v1070
        %1192 = vmatpush1.msra.mxu0 %v1069
        %1193 = vmatprep.subr.mxu0 %v1113
        %1194 = vmatpush1.msra.mxu0 %v1110
        %1195 = vmatprep.subr.mxu0 0.0
        %1196 = vmatpush1.msra.mxu0 0.0
        %1197 = vmatprep.subr.mxu0 0.0
        %1198 = vmatpush1.msra.mxu0 0.0
        %1199 = vmatprep.subr.mxu0 0.0
        %1200 = vmatpush1.msra.mxu0 0.0
        %1201 = vmatprep.subr.mxu0 0.0
        %1202 = vmatpush1.msra.mxu0 0.0
        %1203 = vmatprep.subr.mxu0 0.0
        %1204 = vmatpush1.msra.mxu0 0.0
        %1205 = vmatprep.subr.mxu0 0.0
        %1206 = vmatpush1.msra.mxu0 0.0
        %1207 = vmatprep.subr.mxu0 0.0
        %1208 = vmatpush1.msra.mxu0 0.0
        %1209 = vmatprep.subr.mxu0 0.0
        %1210 = vmatpush1.msra.mxu0 0.0
        %1211 = vmatprep.subr.mxu0 0.0
        %1212 = vmatpush1.msra.mxu0 0.0
        %1213 = vmatprep.subr.mxu0 0.0
        %1214 = vmatpush1.msra.mxu0 0.0
        %1215 = vmatprep.subr.mxu0 0.0
        %1216 = vmatpush1.msra.mxu0 0.0
        %1217 = vmatprep.subr.mxu0 0.0
        %1218 = vmatpush1.msra.mxu0 0.0
        %1219 = vmatprep.subr.mxu0 0.0
        %1220 = vmatpush1.msra.mxu0 0.0
        %1221 = vmatprep.mubr.f32.mxu0 %v1103
        %1222 = vmatmul.mubr.f32.gmra.mrb[0].mxu0 %v793
        %v1223 = vpop.f32.mrb[0].mxu0
        %v1224 = vadd.f32 0.0, %v1223
        %v1225 = vpop.f32.mrb[0].mxu0
        %v1226 = vadd.f32 0.0, %v1225
        %1227 = vmatprep.mubr.f32.mxu0 %v1106
        %1228 = vmatmul.mubr.f32.gmra.mrb[0].mxu0 %v795
        %v1229 = vpop.f32.mrb[0].mxu0
        %v1230 = vadd.f32 0.0, %v1229
        %v1231 = vpop.f32.mrb[0].mxu0
        %v1232 = vadd.f32 0.0, %v1231
        %1233 = vdwg.mxu0
        %1234 = vmatprep.subr.mxu0 %v800
        %1235 = vmatpush1.msra.mxu0 %v799
        %1236 = vmatprep.subr.mxu0 %v816
        %1237 = vmatpush1.msra.mxu0 %v815
        %1238 = vmatprep.subr.mxu0 %v832
        %1239 = vmatpush1.msra.mxu0 %v831
        %1240 = vmatprep.subr.mxu0 %v848
        %1241 = vmatpush1.msra.mxu0 %v847
        %1242 = vmatprep.subr.mxu0 %v864
        %1243 = vmatpush1.msra.mxu0 %v863
        %1244 = vmatprep.subr.mxu0 %v880
        %1245 = vmatpush1.msra.mxu0 %v879
        %1246 = vmatprep.subr.mxu0 %v896
        %1247 = vmatpush1.msra.mxu0 %v895
        %1248 = vmatprep.subr.mxu0 %v912
        %1249 = vmatpush1.msra.mxu0 %v911
        %1250 = vmatprep.subr.mxu0 %v928
        %1251 = vmatpush1.msra.mxu0 %v927
        %1252 = vmatprep.subr.mxu0 %v944
        %1253 = vmatpush1.msra.mxu0 %v943
        %1254 = vmatprep.subr.mxu0 %v960
        %1255 = vmatpush1.msra.mxu0 %v959
        %1256 = vmatprep.subr.mxu0 %v976
        %1257 = vmatpush1.msra.mxu0 %v975
        %1258 = vmatprep.subr.mxu0 %v992
        %1259 = vmatpush1.msra.mxu0 %v991
        %1260 = vmatprep.subr.mxu0 %v1008
        %1261 = vmatpush1.msra.mxu0 %v1007
        %1262 = vmatprep.subr.mxu0 %v1024
        %1263 = vmatpush1.msra.mxu0 %v1023
        %1264 = vmatprep.subr.mxu0 %v1040
        %1265 = vmatpush1.msra.mxu0 %v1039
        %1266 = vmatprep.subr.mxu0 %v1056
        %1267 = vmatpush1.msra.mxu0 %v1055
        %1268 = vmatprep.subr.mxu0 %v1072
        %1269 = vmatpush1.msra.mxu0 %v1071
        %1270 = vmatprep.subr.mxu0 %v1119
        %1271 = vmatpush1.msra.mxu0 %v1116
        %1272 = vmatprep.subr.mxu0 0.0
        %1273 = vmatpush1.msra.mxu0 0.0
        %1274 = vmatprep.subr.mxu0 0.0
        %1275 = vmatpush1.msra.mxu0 0.0
        %1276 = vmatprep.subr.mxu0 0.0
        %1277 = vmatpush1.msra.mxu0 0.0
        %1278 = vmatprep.subr.mxu0 0.0
        %1279 = vmatpush1.msra.mxu0 0.0
        %1280 = vmatprep.subr.mxu0 0.0
        %1281 = vmatpush1.msra.mxu0 0.0
        %1282 = vmatprep.subr.mxu0 0.0
        %1283 = vmatpush1.msra.mxu0 0.0
        %1284 = vmatprep.subr.mxu0 0.0
        %1285 = vmatpush1.msra.mxu0 0.0
        %1286 = vmatprep.subr.mxu0 0.0
        %1287 = vmatpush1.msra.mxu0 0.0
        %1288 = vmatprep.subr.mxu0 0.0
        %1289 = vmatpush1.msra.mxu0 0.0
        %1290 = vmatprep.subr.mxu0 0.0
        %1291 = vmatpush1.msra.mxu0 0.0
        %1292 = vmatprep.subr.mxu0 0.0
        %1293 = vmatpush1.msra.mxu0 0.0
        %1294 = vmatprep.subr.mxu0 0.0
        %1295 = vmatpush1.msra.mxu0 0.0
        %1296 = vmatprep.subr.mxu0 0.0
        %1297 = vmatpush1.msra.mxu0 0.0
        %1298 = vmatprep.mubr.f32.mxu0 %v1103
        %1299 = vmatmul.mubr.f32.gmra.mrb[0].mxu0 %v793
        %v1300 = vpop.f32.mrb[0].mxu0
        %v1301 = vadd.f32 0.0, %v1300
        %v1302 = vpop.f32.mrb[0].mxu0
        %v1303 = vadd.f32 0.0, %v1302
        %1304 = vmatprep.mubr.f32.mxu0 %v1106
        %1305 = vmatmul.mubr.f32.gmra.mrb[0].mxu0 %v795
        %v1306 = vpop.f32.mrb[0].mxu0
        %v1307 = vadd.f32 0.0, %v1306
        %v1308 = vpop.f32.mrb[0].mxu0
        %v1309 = vadd.f32 0.0, %v1308
        %1310 = vdwg.mxu0
        %1311 = vmatprep.subr.mxu0 %v802
        %1312 = vmatpush1.msra.mxu0 %v801
        %1313 = vmatprep.subr.mxu0 %v818
        %1314 = vmatpush1.msra.mxu0 %v817
        %1315 = vmatprep.subr.mxu0 %v834
        %1316 = vmatpush1.msra.mxu0 %v833
        %1317 = vmatprep.subr.mxu0 %v850
        %1318 = vmatpush1.msra.mxu0 %v849
        %1319 = vmatprep.subr.mxu0 %v866
        %1320 = vmatpush1.msra.mxu0 %v865
        %1321 = vmatprep.subr.mxu0 %v882
        %1322 = vmatpush1.msra.mxu0 %v881
        %1323 = vmatprep.subr.mxu0 %v898
        %1324 = vmatpush1.msra.mxu0 %v897
        %1325 = vmatprep.subr.mxu0 %v914
        %1326 = vmatpush1.msra.mxu0 %v913
        %1327 = vmatprep.subr.mxu0 %v930
        %1328 = vmatpush1.msra.mxu0 %v929
        %1329 = vmatprep.subr.mxu0 %v946
        %1330 = vmatpush1.msra.mxu0 %v945
        %1331 = vmatprep.subr.mxu0 %v962
        %1332 = vmatpush1.msra.mxu0 %v961
        %1333 = vmatprep.subr.mxu0 %v978
        %1334 = vmatpush1.msra.mxu0 %v977
        %1335 = vmatprep.subr.mxu0 %v994
        %1336 = vmatpush1.msra.mxu0 %v993
        %1337 = vmatprep.subr.mxu0 %v1010
        %1338 = vmatpush1.msra.mxu0 %v1009
        %1339 = vmatprep.subr.mxu0 %v1026
        %1340 = vmatpush1.msra.mxu0 %v1025
        %1341 = vmatprep.subr.mxu0 %v1042
        %1342 = vmatpush1.msra.mxu0 %v1041
        %1343 = vmatprep.subr.mxu0 %v1058
        %1344 = vmatpush1.msra.mxu0 %v1057
        %1345 = vmatprep.subr.mxu0 %v1074
        %1346 = vmatpush1.msra.mxu0 %v1073
        %1347 = vmatprep.subr.mxu0 %v1125
        %1348 = vmatpush1.msra.mxu0 %v1122
        %1349 = vmatprep.subr.mxu0 0.0
        %1350 = vmatpush1.msra.mxu0 0.0
        %1351 = vmatprep.subr.mxu0 0.0
        %1352 = vmatpush1.msra.mxu0 0.0
        %1353 = vmatprep.subr.mxu0 0.0
        %1354 = vmatpush1.msra.mxu0 0.0
        %1355 = vmatprep.subr.mxu0 0.0
        %1356 = vmatpush1.msra.mxu0 0.0
        %1357 = vmatprep.subr.mxu0 0.0
        %1358 = vmatpush1.msra.mxu0 0.0
        %1359 = vmatprep.subr.mxu0 0.0
        %1360 = vmatpush1.msra.mxu0 0.0
        %1361 = vmatprep.subr.mxu0 0.0
        %1362 = vmatpush1.msra.mxu0 0.0
        %1363 = vmatprep.subr.mxu0 0.0
        %1364 = vmatpush1.msra.mxu0 0.0
        %1365 = vmatprep.subr.mxu0 0.0
        %1366 = vmatpush1.msra.mxu0 0.0
        %1367 = vmatprep.subr.mxu0 0.0
        %1368 = vmatpush1.msra.mxu0 0.0
        %1369 = vmatprep.subr.mxu0 0.0
        %1370 = vmatpush1.msra.mxu0 0.0
        %1371 = vmatprep.subr.mxu0 0.0
        %1372 = vmatpush1.msra.mxu0 0.0
        %1373 = vmatprep.subr.mxu0 0.0
        %1374 = vmatpush1.msra.mxu0 0.0
        %1375 = vmatprep.mubr.f32.mxu0 %v1103
        %1376 = vmatmul.mubr.f32.gmra.mrb[0].mxu0 %v793
        %v1377 = vpop.f32.mrb[0].mxu0
        %v1378 = vadd.f32 0.0, %v1377
        %v1379 = vpop.f32.mrb[0].mxu0
        %v1380 = vadd.f32 0.0, %v1379
        %1381 = vmatprep.mubr.f32.mxu0 %v1106
        %1382 = vmatmul.mubr.f32.gmra.mrb[0].mxu0 %v795
        %v1383 = vpop.f32.mrb[0].mxu0
        %v1384 = vadd.f32 0.0, %v1383
        %v1385 = vpop.f32.mrb[0].mxu0
        %v1386 = vadd.f32 0.0, %v1385
        %1387 = vdwg.mxu0
        %1388 = vmatprep.subr.mxu0 %v804
        %1389 = vmatpush1.msra.mxu0 %v803
        %1390 = vmatprep.subr.mxu0 %v820
        %1391 = vmatpush1.msra.mxu0 %v819
        %1392 = vmatprep.subr.mxu0 %v836
        %1393 = vmatpush1.msra.mxu0 %v835
        %1394 = vmatprep.subr.mxu0 %v852
        %1395 = vmatpush1.msra.mxu0 %v851
        %1396 = vmatprep.subr.mxu0 %v868
        %1397 = vmatpush1.msra.mxu0 %v867
        %1398 = vmatprep.subr.mxu0 %v884
        %1399 = vmatpush1.msra.mxu0 %v883
        %1400 = vmatprep.subr.mxu0 %v900
        %1401 = vmatpush1.msra.mxu0 %v899
        %1402 = vmatprep.subr.mxu0 %v916
        %1403 = vmatpush1.msra.mxu0 %v915
        %1404 = vmatprep.subr.mxu0 %v932
        %1405 = vmatpush1.msra.mxu0 %v931
        %1406 = vmatprep.subr.mxu0 %v948
        %1407 = vmatpush1.msra.mxu0 %v947
        %1408 = vmatprep.subr.mxu0 %v964
        %1409 = vmatpush1.msra.mxu0 %v963
        %1410 = vmatprep.subr.mxu0 %v980
        %1411 = vmatpush1.msra.mxu0 %v979
        %1412 = vmatprep.subr.mxu0 %v996
        %1413 = vmatpush1.msra.mxu0 %v995
        %1414 = vmatprep.subr.mxu0 %v1012
        %1415 = vmatpush1.msra.mxu0 %v1011
        %1416 = vmatprep.subr.mxu0 %v1028
        %1417 = vmatpush1.msra.mxu0 %v1027
        %1418 = vmatprep.subr.mxu0 %v1044
        %1419 = vmatpush1.msra.mxu0 %v1043
        %1420 = vmatprep.subr.mxu0 %v1060
        %1421 = vmatpush1.msra.mxu0 %v1059
        %1422 = vmatprep.subr.mxu0 %v1076
        %1423 = vmatpush1.msra.mxu0 %v1075
        %1424 = vmatprep.subr.mxu0 %v1131
        %1425 = vmatpush1.msra.mxu0 %v1128
        %1426 = vmatprep.subr.mxu0 0.0
        %1427 = vmatpush1.msra.mxu0 0.0
        %1428 = vmatprep.subr.mxu0 0.0
        %1429 = vmatpush1.msra.mxu0 0.0
        %1430 = vmatprep.subr.mxu0 0.0
        %1431 = vmatpush1.msra.mxu0 0.0
        %1432 = vmatprep.subr.mxu0 0.0
        %1433 = vmatpush1.msra.mxu0 0.0
        %1434 = vmatprep.subr.mxu0 0.0
        %1435 = vmatpush1.msra.mxu0 0.0
        %1436 = vmatprep.subr.mxu0 0.0
        %1437 = vmatpush1.msra.mxu0 0.0
        %1438 = vmatprep.subr.mxu0 0.0
        %1439 = vmatpush1.msra.mxu0 0.0
        %1440 = vmatprep.subr.mxu0 0.0
        %1441 = vmatpush1.msra.mxu0 0.0
        %1442 = vmatprep.subr.mxu0 0.0
        %1443 = vmatpush1.msra.mxu0 0.0
        %1444 = vmatprep.subr.mxu0 0.0
        %1445 = vmatpush1.msra.mxu0 0.0
        %1446 = vmatprep.subr.mxu0 0.0
        %1447 = vmatpush1.msra.mxu0 0.0
        %1448 = vmatprep.subr.mxu0 0.0
        %1449 = vmatpush1.msra.mxu0 0.0
        %1450 = vmatprep.subr.mxu0 0.0
        %1451 = vmatpush1.msra.mxu0 0.0
        %1452 = vmatprep.mubr.f32.mxu0 %v1103
        %1453 = vmatmul.mubr.f32.gmra.mrb[0].mxu0 %v793
        %v1454 = vpop.f32.mrb[0].mxu0
        %v1455 = vadd.f32 0.0, %v1454
        %v1456 = vpop.f32.mrb[0].mxu0
        %v1457 = vadd.f32 0.0, %v1456
        %1458 = vmatprep.mubr.f32.mxu0 %v1106
        %1459 = vmatmul.mubr.f32.gmra.mrb[0].mxu0 %v795
        %v1460 = vpop.f32.mrb[0].mxu0
        %v1461 = vadd.f32 0.0, %v1460
        %v1462 = vpop.f32.mrb[0].mxu0
        %v1463 = vadd.f32 0.0, %v1462
        %1464 = vdwg.mxu0
        %1465 = vmatprep.subr.mxu0 %v806
        %1466 = vmatpush1.msra.mxu0 %v805
        %1467 = vmatprep.subr.mxu0 %v822
        %1468 = vmatpush1.msra.mxu0 %v821
        %1469 = vmatprep.subr.mxu0 %v838
        %1470 = vmatpush1.msra.mxu0 %v837
        %1471 = vmatprep.subr.mxu0 %v854
        %1472 = vmatpush1.msra.mxu0 %v853
        %1473 = vmatprep.subr.mxu0 %v870
        %1474 = vmatpush1.msra.mxu0 %v869
        %1475 = vmatprep.subr.mxu0 %v886
        %1476 = vmatpush1.msra.mxu0 %v885
        %1477 = vmatprep.subr.mxu0 %v902
        %1478 = vmatpush1.msra.mxu0 %v901
        %1479 = vmatprep.subr.mxu0 %v918
        %1480 = vmatpush1.msra.mxu0 %v917
        %1481 = vmatprep.subr.mxu0 %v934
        %1482 = vmatpush1.msra.mxu0 %v933
        %1483 = vmatprep.subr.mxu0 %v950
        %1484 = vmatpush1.msra.mxu0 %v949
        %1485 = vmatprep.subr.mxu0 %v966
        %1486 = vmatpush1.msra.mxu0 %v965
        %1487 = vmatprep.subr.mxu0 %v982
        %1488 = vmatpush1.msra.mxu0 %v981
        %1489 = vmatprep.subr.mxu0 %v998
        %1490 = vmatpush1.msra.mxu0 %v997
        %1491 = vmatprep.subr.mxu0 %v1014
        %1492 = vmatpush1.msra.mxu0 %v1013
        %1493 = vmatprep.subr.mxu0 %v1030
        %1494 = vmatpush1.msra.mxu0 %v1029
        %1495 = vmatprep.subr.mxu0 %v1046
        %1496 = vmatpush1.msra.mxu0 %v1045
        %1497 = vmatprep.subr.mxu0 %v1062
        %1498 = vmatpush1.msra.mxu0 %v1061
        %1499 = vmatprep.subr.mxu0 %v1078
        %1500 = vmatpush1.msra.mxu0 %v1077
        %1501 = vmatprep.subr.mxu0 %v1137
        %1502 = vmatpush1.msra.mxu0 %v1134
        %1503 = vmatprep.subr.mxu0 0.0
        %1504 = vmatpush1.msra.mxu0 0.0
        %1505 = vmatprep.subr.mxu0 0.0
        %1506 = vmatpush1.msra.mxu0 0.0
        %1507 = vmatprep.subr.mxu0 0.0
        %1508 = vmatpush1.msra.mxu0 0.0
        %1509 = vmatprep.subr.mxu0 0.0
        %1510 = vmatpush1.msra.mxu0 0.0
        %1511 = vmatprep.subr.mxu0 0.0
        %1512 = vmatpush1.msra.mxu0 0.0
        %1513 = vmatprep.subr.mxu0 0.0
        %1514 = vmatpush1.msra.mxu0 0.0
        %1515 = vmatprep.subr.mxu0 0.0
        %1516 = vmatpush1.msra.mxu0 0.0
        %1517 = vmatprep.subr.mxu0 0.0
        %1518 = vmatpush1.msra.mxu0 0.0
        %1519 = vmatprep.subr.mxu0 0.0
        %1520 = vmatpush1.msra.mxu0 0.0
        %1521 = vmatprep.subr.mxu0 0.0
        %1522 = vmatpush1.msra.mxu0 0.0
        %1523 = vmatprep.subr.mxu0 0.0
        %1524 = vmatpush1.msra.mxu0 0.0
        %1525 = vmatprep.subr.mxu0 0.0
        %1526 = vmatpush1.msra.mxu0 0.0
        %1527 = vmatprep.subr.mxu0 0.0
        %1528 = vmatpush1.msra.mxu0 0.0
        %1529 = vmatprep.mubr.f32.mxu0 %v1103
        %1530 = vmatmul.mubr.f32.gmra.mrb[0].mxu0 %v793
        %v1531 = vpop.f32.mrb[0].mxu0
        %v1532 = vadd.f32 0.0, %v1531
        %v1533 = vpop.f32.mrb[0].mxu0
        %v1534 = vadd.f32 0.0, %v1533
        %1535 = vmatprep.mubr.f32.mxu0 %v1106
        %1536 = vmatmul.mubr.f32.gmra.mrb[0].mxu0 %v795
        %v1537 = vpop.f32.mrb[0].mxu0
        %v1538 = vadd.f32 0.0, %v1537
        %v1539 = vpop.f32.mrb[0].mxu0
        %v1540 = vadd.f32 0.0, %v1539
        %1541 = vdwg.mxu0
        %1542 = vmatprep.subr.mxu0 %v808
        %1543 = vmatpush1.msra.mxu0 %v807
        %1544 = vmatprep.subr.mxu0 %v824
        %1545 = vmatpush1.msra.mxu0 %v823
        %1546 = vmatprep.subr.mxu0 %v840
        %1547 = vmatpush1.msra.mxu0 %v839
        %1548 = vmatprep.subr.mxu0 %v856
        %1549 = vmatpush1.msra.mxu0 %v855
        %1550 = vmatprep.subr.mxu0 %v872
        %1551 = vmatpush1.msra.mxu0 %v871
        %1552 = vmatprep.subr.mxu0 %v888
        %1553 = vmatpush1.msra.mxu0 %v887
        %1554 = vmatprep.subr.mxu0 %v904
        %1555 = vmatpush1.msra.mxu0 %v903
        %1556 = vmatprep.subr.mxu0 %v920
        %1557 = vmatpush1.msra.mxu0 %v919
        %1558 = vmatprep.subr.mxu0 %v936
        %1559 = vmatpush1.msra.mxu0 %v935
        %1560 = vmatprep.subr.mxu0 %v952
        %1561 = vmatpush1.msra.mxu0 %v951
        %1562 = vmatprep.subr.mxu0 %v968
        %1563 = vmatpush1.msra.mxu0 %v967
        %1564 = vmatprep.subr.mxu0 %v984
        %1565 = vmatpush1.msra.mxu0 %v983
        %1566 = vmatprep.subr.mxu0 %v1000
        %1567 = vmatpush1.msra.mxu0 %v999
        %1568 = vmatprep.subr.mxu0 %v1016
        %1569 = vmatpush1.msra.mxu0 %v1015
        %1570 = vmatprep.subr.mxu0 %v1032
        %1571 = vmatpush1.msra.mxu0 %v1031
        %1572 = vmatprep.subr.mxu0 %v1048
        %1573 = vmatpush1.msra.mxu0 %v1047
        %1574 = vmatprep.subr.mxu0 %v1064
        %1575 = vmatpush1.msra.mxu0 %v1063
        %1576 = vmatprep.subr.mxu0 %v1080
        %1577 = vmatpush1.msra.mxu0 %v1079
        %1578 = vmatprep.subr.mxu0 %v1143
        %1579 = vmatpush1.msra.mxu0 %v1140
        %1580 = vmatprep.subr.mxu0 0.0
        %1581 = vmatpush1.msra.mxu0 0.0
        %1582 = vmatprep.subr.mxu0 0.0
        %1583 = vmatpush1.msra.mxu0 0.0
        %1584 = vmatprep.subr.mxu0 0.0
        %1585 = vmatpush1.msra.mxu0 0.0
        %1586 = vmatprep.subr.mxu0 0.0
        %1587 = vmatpush1.msra.mxu0 0.0
        %1588 = vmatprep.subr.mxu0 0.0
        %1589 = vmatpush1.msra.mxu0 0.0
        %1590 = vmatprep.subr.mxu0 0.0
        %1591 = vmatpush1.msra.mxu0 0.0
        %1592 = vmatprep.subr.mxu0 0.0
        %1593 = vmatpush1.msra.mxu0 0.0
        %1594 = vmatprep.subr.mxu0 0.0
        %1595 = vmatpush1.msra.mxu0 0.0
        %1596 = vmatprep.subr.mxu0 0.0
        %1597 = vmatpush1.msra.mxu0 0.0
        %1598 = vmatprep.subr.mxu0 0.0
        %1599 = vmatpush1.msra.mxu0 0.0
        %1600 = vmatprep.subr.mxu0 0.0
        %1601 = vmatpush1.msra.mxu0 0.0
        %1602 = vmatprep.subr.mxu0 0.0
        %1603 = vmatpush1.msra.mxu0 0.0
        %1604 = vmatprep.subr.mxu0 0.0
        %1605 = vmatpush1.msra.mxu0 0.0
        %1606 = vmatprep.mubr.f32.mxu0 %v1103
        %1607 = vmatmul.mubr.f32.gmra.mrb[0].mxu0 %v793
        %v1608 = vpop.f32.mrb[0].mxu0
        %v1609 = vadd.f32 0.0, %v1608
        %v1610 = vpop.f32.mrb[0].mxu0
        %v1611 = vadd.f32 0.0, %v1610
        %1612 = vmatprep.mubr.f32.mxu0 %v1106
        %1613 = vmatmul.mubr.f32.gmra.mrb[0].mxu0 %v795
        %v1614 = vpop.f32.mrb[0].mxu0
        %v1615 = vadd.f32 0.0, %v1614
        %v1616 = vpop.f32.mrb[0].mxu0
        %v1617 = vadd.f32 0.0, %v1616
        %1618 = vdwg.mxu0
        %1619 = vmatprep.subr.mxu0 %v810
        %1620 = vmatpush1.msra.mxu0 %v809
        %1621 = vmatprep.subr.mxu0 %v826
        %1622 = vmatpush1.msra.mxu0 %v825
        %1623 = vmatprep.subr.mxu0 %v842
        %1624 = vmatpush1.msra.mxu0 %v841
        %1625 = vmatprep.subr.mxu0 %v858
        %1626 = vmatpush1.msra.mxu0 %v857
        %1627 = vmatprep.subr.mxu0 %v874
        %1628 = vmatpush1.msra.mxu0 %v873
        %1629 = vmatprep.subr.mxu0 %v890
        %1630 = vmatpush1.msra.mxu0 %v889
        %1631 = vmatprep.subr.mxu0 %v906
        %1632 = vmatpush1.msra.mxu0 %v905
        %1633 = vmatprep.subr.mxu0 %v922
        %1634 = vmatpush1.msra.mxu0 %v921
        %1635 = vmatprep.subr.mxu0 %v938
        %1636 = vmatpush1.msra.mxu0 %v937
        %1637 = vmatprep.subr.mxu0 %v954
        %1638 = vmatpush1.msra.mxu0 %v953
        %1639 = vmatprep.subr.mxu0 %v970
        %1640 = vmatpush1.msra.mxu0 %v969
        %1641 = vmatprep.subr.mxu0 %v986
        %1642 = vmatpush1.msra.mxu0 %v985
        %1643 = vmatprep.subr.mxu0 %v1002
        %1644 = vmatpush1.msra.mxu0 %v1001
        %1645 = vmatprep.subr.mxu0 %v1018
        %1646 = vmatpush1.msra.mxu0 %v1017
        %1647 = vmatprep.subr.mxu0 %v1034
        %1648 = vmatpush1.msra.mxu0 %v1033
        %1649 = vmatprep.subr.mxu0 %v1050
        %1650 = vmatpush1.msra.mxu0 %v1049
        %1651 = vmatprep.subr.mxu0 %v1066
        %1652 = vmatpush1.msra.mxu0 %v1065
        %1653 = vmatprep.subr.mxu0 %v1082
        %1654 = vmatpush1.msra.mxu0 %v1081
        %1655 = vmatprep.subr.mxu0 %v1149
        %1656 = vmatpush1.msra.mxu0 %v1146
        %1657 = vmatprep.subr.mxu0 0.0
        %1658 = vmatpush1.msra.mxu0 0.0
        %1659 = vmatprep.subr.mxu0 0.0
        %1660 = vmatpush1.msra.mxu0 0.0
        %1661 = vmatprep.subr.mxu0 0.0
        %1662 = vmatpush1.msra.mxu0 0.0
        %1663 = vmatprep.subr.mxu0 0.0
        %1664 = vmatpush1.msra.mxu0 0.0
        %1665 = vmatprep.subr.mxu0 0.0
        %1666 = vmatpush1.msra.mxu0 0.0
        %1667 = vmatprep.subr.mxu0 0.0
        %1668 = vmatpush1.msra.mxu0 0.0
        %1669 = vmatprep.subr.mxu0 0.0
        %1670 = vmatpush1.msra.mxu0 0.0
        %1671 = vmatprep.subr.mxu0 0.0
        %1672 = vmatpush1.msra.mxu0 0.0
        %1673 = vmatprep.subr.mxu0 0.0
        %1674 = vmatpush1.msra.mxu0 0.0
        %1675 = vmatprep.subr.mxu0 0.0
        %1676 = vmatpush1.msra.mxu0 0.0
        %1677 = vmatprep.subr.mxu0 0.0
        %1678 = vmatpush1.msra.mxu0 0.0
        %1679 = vmatprep.subr.mxu0 0.0
        %1680 = vmatpush1.msra.mxu0 0.0
        %1681 = vmatprep.subr.mxu0 0.0
        %1682 = vmatpush1.msra.mxu0 0.0
        %1683 = vmatprep.mubr.f32.mxu0 %v1103
        %1684 = vmatmul.mubr.f32.gmra.mrb[0].mxu0 %v793
        %v1685 = vpop.f32.mrb[0].mxu0
        %v1686 = vadd.f32 0.0, %v1685
        %v1687 = vpop.f32.mrb[0].mxu0
        %v1688 = vadd.f32 0.0, %v1687
        %1689 = vmatprep.mubr.f32.mxu0 %v1106
        %1690 = vmatmul.mubr.f32.gmra.mrb[0].mxu0 %v795
        %v1691 = vpop.f32.mrb[0].mxu0
        %v1692 = vadd.f32 0.0, %v1691
        %v1693 = vpop.f32.mrb[0].mxu0
        %v1694 = vadd.f32 0.0, %v1693
        %1695 = vdwg.mxu0
        %1696 = vmatprep.subr.mxu0 %v812
        %1697 = vmatpush1.msra.mxu0 %v811
        %1698 = vmatprep.subr.mxu0 %v828
        %1699 = vmatpush1.msra.mxu0 %v827
        %1700 = vmatprep.subr.mxu0 %v844
        %1701 = vmatpush1.msra.mxu0 %v843
        %1702 = vmatprep.subr.mxu0 %v860
        %1703 = vmatpush1.msra.mxu0 %v859
        %1704 = vmatprep.subr.mxu0 %v876
        %1705 = vmatpush1.msra.mxu0 %v875
        %1706 = vmatprep.subr.mxu0 %v892
        %1707 = vmatpush1.msra.mxu0 %v891
        %1708 = vmatprep.subr.mxu0 %v908
        %1709 = vmatpush1.msra.mxu0 %v907
        %1710 = vmatprep.subr.mxu0 %v924
        %1711 = vmatpush1.msra.mxu0 %v923
        %1712 = vmatprep.subr.mxu0 %v940
        %1713 = vmatpush1.msra.mxu0 %v939
        %1714 = vmatprep.subr.mxu0 %v956
        %1715 = vmatpush1.msra.mxu0 %v955
        %1716 = vmatprep.subr.mxu0 %v972
        %1717 = vmatpush1.msra.mxu0 %v971
        %1718 = vmatprep.subr.mxu0 %v988
        %1719 = vmatpush1.msra.mxu0 %v987
        %1720 = vmatprep.subr.mxu0 %v1004
        %1721 = vmatpush1.msra.mxu0 %v1003
        %1722 = vmatprep.subr.mxu0 %v1020
        %1723 = vmatpush1.msra.mxu0 %v1019
        %1724 = vmatprep.subr.mxu0 %v1036
        %1725 = vmatpush1.msra.mxu0 %v1035
        %1726 = vmatprep.subr.mxu0 %v1052
        %1727 = vmatpush1.msra.mxu0 %v1051
        %1728 = vmatprep.subr.mxu0 %v1068
        %1729 = vmatpush1.msra.mxu0 %v1067
        %1730 = vmatprep.subr.mxu0 %v1084
        %1731 = vmatpush1.msra.mxu0 %v1083
        %1732 = vmatprep.subr.mxu0 %v1155
        %1733 = vmatpush1.msra.mxu0 %v1152
        %1734 = vmatprep.subr.mxu0 0.0
        %1735 = vmatpush1.msra.mxu0 0.0
        %1736 = vmatprep.subr.mxu0 0.0
        %1737 = vmatpush1.msra.mxu0 0.0
        %1738 = vmatprep.subr.mxu0 0.0
        %1739 = vmatpush1.msra.mxu0 0.0
        %1740 = vmatprep.subr.mxu0 0.0
        %1741 = vmatpush1.msra.mxu0 0.0
        %1742 = vmatprep.subr.mxu0 0.0
        %1743 = vmatpush1.msra.mxu0 0.0
        %1744 = vmatprep.subr.mxu0 0.0
        %1745 = vmatpush1.msra.mxu0 0.0
        %1746 = vmatprep.subr.mxu0 0.0
        %1747 = vmatpush1.msra.mxu0 0.0
        %1748 = vmatprep.subr.mxu0 0.0
        %1749 = vmatpush1.msra.mxu0 0.0
        %1750 = vmatprep.subr.mxu0 0.0
        %1751 = vmatpush1.msra.mxu0 0.0
        %1752 = vmatprep.subr.mxu0 0.0
        %1753 = vmatpush1.msra.mxu0 0.0
        %1754 = vmatprep.subr.mxu0 0.0
        %1755 = vmatpush1.msra.mxu0 0.0
        %1756 = vmatprep.subr.mxu0 0.0
        %1757 = vmatpush1.msra.mxu0 0.0
        %1758 = vmatprep.subr.mxu0 0.0
        %1759 = vmatpush1.msra.mxu0 0.0
        %1760 = vmatprep.mubr.f32.mxu0 %v1103
        %1761 = vmatmul.mubr.f32.gmra.mrb[0].mxu0 %v793
        %v1762 = vpop.f32.mrb[0].mxu0
        %v1763 = vadd.f32 0.0, %v1762
        %v1764 = vpop.f32.mrb[0].mxu0
        %v1765 = vadd.f32 0.0, %v1764
        %1766 = vmatprep.mubr.f32.mxu0 %v1106
        %1767 = vmatmul.mubr.f32.gmra.mrb[0].mxu0 %v795
        %v1768 = vpop.f32.mrb[0].mxu0
        %v1769 = vadd.f32 0.0, %v1768
        %v1770 = vpop.f32.mrb[0].mxu0
        %v1771 = vadd.f32 0.0, %v1770
        %1772 = vdwg.mxu0
        %v1773 = vmax.f32 %v1224, %v1378
        %v1774 = vmax.f32 %v1226, %v1380
        %v1775 = vmax.f32 %v1301, %v1455
        %v1776 = vmax.f32 %v1303, %v1457
        %v1777 = vmax.f32 %v1230, %v1384
        %v1778 = vmax.f32 %v1232, %v1386
        %v1779 = vmax.f32 %v1307, %v1461
        %v1780 = vmax.f32 %v1309, %v1463
        %v1781 = vmax.f32 %v1532, %v1686
        %v1782 = vmax.f32 %v1534, %v1688
        %v1783 = vmax.f32 %v1609, %v1763
        %v1784 = vmax.f32 %v1611, %v1765
        %v1785 = vmax.f32 %v1538, %v1692
        %v1786 = vmax.f32 %v1540, %v1694
        %v1787 = vmax.f32 %v1615, %v1769
        %v1788 = vmax.f32 %v1617, %v1771
        %v1789 = vmax.f32 %v1773, %v1781
        %v1790 = vmax.f32 %v1774, %v1782
        %v1791 = vmax.f32 %v1775, %v1783
        %v1792 = vmax.f32 %v1776, %v1784
        %v1793 = vmax.f32 %v1777, %v1785
        %v1794 = vmax.f32 %v1778, %v1786
        %v1795 = vmax.f32 %v1779, %v1787
        %v1796 = vmax.f32 %v1780, %v1788
        %v1797 = vld [vmem:[%s2] sm:$0xff]
        %v1798 = vld [vmem:[%s2 + $0x8] sm:$0xf]
        %1800 = vset.pattern.permute.xlu0 0
        %1801 = vperm.xlu0 %1800, %v1797
        %v1802 = vpop.permute.xlu0 %1801
        %1805 = vset.pattern.permute.xlu0 0
        %1806 = vperm.xlu0 %1805, %v1798
        %v1807 = vpop.permute.xlu0 %1806
        %v1809 = vadd.f32 %v1789, %v1802
        %v1810 = vadd.f32 %v1790, %v1802
        %v1811 = vadd.f32 %v1791, %v1802
        %v1812 = vadd.f32 %v1792, %v1802
        %v1813 = vadd.f32 %v1793, %v1807
        %v1814 = vadd.f32 %v1794, %v1807
        %v1815 = vadd.f32 %v1795, %v1807
        %v1816 = vadd.f32 %v1796, %v1807
        %v1817 = vmax.f32 %v1809, 0.0
        %v1818 = vmax.f32 %v1810, 0.0
        %v1819 = vmax.f32 %v1811, 0.0
        %v1820 = vmax.f32 %v1812, 0.0
        %v1821 = vmax.f32 %v1813, 0.0
        %v1822 = vmax.f32 %v1814, 0.0
        %v1823 = vmax.f32 %v1815, 0.0
        %v1824 = vmax.f32 %v1816, 0.0
        %1825 = vst [vmem:[%s790] sm:$0xff] %v1817
        %1826 = vst [vmem:[%s790 + $0x8] sm:$0xff] %v1818
        %1827 = vst [vmem:[%s790 + $0x10] sm:$0xff] %v1819
        %1828 = vst [vmem:[%s790 + $0x18] sm:$0xff] %v1820
        %1829 = vst [vmem:[%s790 + $0x20] sm:$0xf] %v1821
        %1830 = vst [vmem:[%s790 + $0x28] sm:$0xf] %v1822
        %1831 = vst [vmem:[%s790 + $0x30] sm:$0xf] %v1823
        %1832 = vst [vmem:[%s790 + $0x38] sm:$0xf] %v1824
        %s1833 = sand.u32 %s90, 1
        %s1834 = sand.u32 %s90, 1
        %s1835 = smul.addr %s1834, 64
        %s1836 = scalar_lea.vmem [#allocation3], %s1835
        // Predicated region
        $region56: #{network_forward.4} parent=50 // pred_check
          %p1837 = pneg %p100
        $region57: #{network_forward.4} parent=50 // pred_check_branch
          %1839 = sbr.rel (%p1837) target = $region59
        $region58: #{network_forward.4} parent=50 // pred_region
          %s1840 = smul.u32 4, %s14
          %s1841 = smul.addr %s1840, 8
          %s1842 = scalar_lea.vmem %s3, %s1841
          // Predicated region
          $region60: #{network_forward.4} parent=58 // pred_check
            _
          $region61: #{network_forward.4} parent=58 // pred_check_branch
            %1844 = sbr.rel (0) target = $region63
          $region62: #{network_forward.4} parent=58 // pred_region
            // Predicated region
            $region64: #{network_forward.4} parent=62 // pred_check
              _
            $region65: #{network_forward.4} parent=62 // pred_check_branch
              %1846 = sbr.rel (0) target = $region67
            $region66: #{network_forward.4} parent=62 // pred_region
              loop: start=0, step=1, limit=1
              $region68: #{network_forward.4} parent=66 // loop_pre_header
                _
              $region69: #{network_forward.4} parent=66 // loop_header
                %s1848 = sphi 0, %s1852
                %p1849 = scmp.ge.s32.totalorder %s1848, 1
                %s1853 = sphi %s1836, %s1836
                %s1854 = sphi %s1842, %s1842
              $region70: #{network_forward.4} parent=66 // loop_header_branch
                %1851 = sbr.rel (%p1849) target = $region74
              $region71: #{network_forward.4} parent=66 // loop_body
                %v1855 = vld [vmem:[%s1853] sm:$0xff]
                %1856 = vst [vmem:[%s1854] sm:$0xff] %v1855
                %v1857 = vld [vmem:[%s1853 + $0x8] sm:$0xff]
                %1858 = vst [vmem:[%s1854 + $0x8] sm:$0xff] %v1857
                %v1859 = vld [vmem:[%s1853 + $0x10] sm:$0xff]
                %1860 = vst [vmem:[%s1854 + $0x10] sm:$0xff] %v1859
                %v1861 = vld [vmem:[%s1853 + $0x18] sm:$0xff]
                %1862 = vst [vmem:[%s1854 + $0x18] sm:$0xff] %v1861
                %v1863 = vld [vmem:[%s1853 + $0x20] sm:$0xff]
                %1864 = vst [vmem:[%s1854 + $0x40] sm:$0xff] %v1863
                %v1865 = vld [vmem:[%s1853 + $0x28] sm:$0xff]
                %1866 = vst [vmem:[%s1854 + $0x48] sm:$0xff] %v1865
                %v1867 = vld [vmem:[%s1853 + $0x30] sm:$0xff]
                %1868 = vst [vmem:[%s1854 + $0x50] sm:$0xff] %v1867
                %v1869 = vld [vmem:[%s1853 + $0x38] sm:$0xff]
                %1870 = vst [vmem:[%s1854 + $0x58] sm:$0xff] %v1869
              $region72: #{network_forward.4} parent=66 // loop_footer
                %s1852 = sadd.s32 1, %s1848
              $region73: #{network_forward.4} parent=66 // loop_footer_branch
                %1847 = sbr.rel target = $region69
              $region74: #{network_forward.4} parent=66 // loop_exit
                _
            $region67: #{network_forward.4} parent=62 // pred_fallthru
              _
            // Predicated region
            $region75: #{network_forward.4} parent=62 // pred_check
              _
            $region76: #{network_forward.4} parent=62 // pred_check_branch
              %1872 = sbr.rel target = $region78
            $region77: #{network_forward.4} parent=62 // pred_region
              _
            $region78: #{network_forward.4} parent=62 // pred_fallthru
              _
          $region63: #{network_forward.4} parent=58 // pred_fallthru
            _
          %1873 = vnop
        $region59: #{network_forward.4} parent=50 // pred_fallthru
          _
      $region51: #{network_forward.4} parent=5 // pred_fallthru
        _
      %p1874 = scmp.le.s32.totalorder 2, %s9
      // Predicated region
      $region79: #{network_forward.4} parent=5 // pred_check
        %p1875 = pneg %p1874
      $region80: #{network_forward.4} parent=5 // pred_check_branch
        %1877 = sbr.rel (%p1875) target = $region82
      $region81: #{network_forward.4} parent=5 // pred_region
        %s1878 = ssub.s32 %s9, 2
        // Predicated region
        $region83: #{network_forward.4} parent=81 // pred_check
          %p1879 = pneg %p106
        $region84: #{network_forward.4} parent=81 // pred_check_branch
          %1881 = sbr.rel (%p1879) target = $region86
        $region85: #{network_forward.4} parent=81 // pred_region
          %s1882 = sand.u32 %s91, 1
          %s1883 = sand.u32 %s91, 1
          %s1884 = smul.addr %s1883, 64
          %s1885 = scalar_lea.vmem [#allocation3], %s1884
        $region86: #{network_forward.4} parent=81 // pred_fallthru
          _
      $region82: #{network_forward.4} parent=5 // pred_fallthru
        _
    $region6: #{network_forward.4} parent=1 // loop_footer
      %s13 = sadd.s32 1, %s9
    $region7: #{network_forward.4} parent=1 // loop_footer_branch
      %8 = sbr.rel target = $region3
    $region8: #{network_forward.4} parent=1 // loop_exit
      _

// kernel: network_forward.5
$region0: #{network_forward.5}
  #allocation0 [shape = 'u32[]', space=smem, size = 0x4, offset = 0x4, fixed_abs, tag = 'smem constant byte address 0x4 - core index']
  #allocation1 [shape = 'u32[144,128]{1,0:T(1,128)}', space=vmem, size = 0x12000, scoped, tag = 'internal scratch']
  %s0 = inlined_call_operand.vmem [shape: f32[8,192], index: 0, kind: input, shape index: {}]
  %s1 = inlined_call_operand.vmem [shape: f32[192,128], index: 1, kind: input, shape index: {}]
  %s2 = inlined_call_operand.vmem [shape: f32[1,128], index: 2, kind: input, shape index: {}]
  %s3 = inlined_call_operand.vmem [shape: f32[128,128], index: 3, kind: input, shape index: {}]
  %s4 = inlined_call_operand.vmem [shape: f32[1,128], index: 4, kind: input, shape index: {}]
  %s5 = inlined_call_operand.vmem [shape: f32[128,128], index: 5, kind: input, shape index: {}]
  %s6 = inlined_call_operand.vmem [shape: f32[1,128], index: 6, kind: input, shape index: {}]
  %s7 = inlined_call_operand.vmem [shape: f32[8,128], index: 7, kind: output, shape index: {}]
  %s8 = sld [smem:[#allocation0]]
  $region38: #{network_forward.5} parent=0
    _
  %s10 = ssub.s32 1, %s8
  %s11 = scalar_select 0, %s10, %s8
  // Predicated region
  $region2: #{network_forward.5} parent=0 // pred_check
    _
  $region3: #{network_forward.5} parent=0 // pred_check_branch
    %13 = sbr.rel (0) target = $region5
  $region4: #{network_forward.5} parent=0 // pred_region
    _
  $region5: #{network_forward.5} parent=0 // pred_fallthru
    _
  // Predicated region
  $region6: #{network_forward.5} parent=0 // pred_check
    _
  $region7: #{network_forward.5} parent=0 // pred_check_branch
    %15 = sbr.rel (0) target = $region9
  $region8: #{network_forward.5} parent=0 // pred_region
    _
  $region9: #{network_forward.5} parent=0 // pred_fallthru
    _
  // Predicated region
  $region10: #{network_forward.5} parent=0 // pred_check
    _
  $region11: #{network_forward.5} parent=0 // pred_check_branch
    %17 = sbr.rel (0) target = $region13
  $region12: #{network_forward.5} parent=0 // pred_region
    _
  $region13: #{network_forward.5} parent=0 // pred_fallthru
    _
  // Predicated region
  $region14: #{network_forward.5} parent=0 // pred_check
    _
  $region15: #{network_forward.5} parent=0 // pred_check_branch
    %19 = sbr.rel (0) target = $region17
  $region16: #{network_forward.5} parent=0 // pred_region
    _
  $region17: #{network_forward.5} parent=0 // pred_fallthru
    _
  // Predicated region
  $region18: #{network_forward.5} parent=0 // pred_check
    _
  $region19: #{network_forward.5} parent=0 // pred_check_branch
    %21 = sbr.rel (0) target = $region21
  $region20: #{network_forward.5} parent=0 // pred_region
    _
  $region21: #{network_forward.5} parent=0 // pred_fallthru
    _
  // Predicated region
  $region22: #{network_forward.5} parent=0 // pred_check
    _
  $region23: #{network_forward.5} parent=0 // pred_check_branch
    %23 = sbr.rel (0) target = $region25
  $region24: #{network_forward.5} parent=0 // pred_region
    _
  $region25: #{network_forward.5} parent=0 // pred_fallthru
    _
  // Predicated region
  $region26: #{network_forward.5} parent=0 // pred_check
    _
  $region27: #{network_forward.5} parent=0 // pred_check_branch
    %25 = sbr.rel (0) target = $region29
  $region28: #{network_forward.5} parent=0 // pred_region
    _
  $region29: #{network_forward.5} parent=0 // pred_fallthru
    _
  %v26 = vld [vmem:[%s0] sm:$0xff]
  %v27 = vld [vmem:[%s0 + $0x8] sm:$0xff]
  %v28 = vld [vmem:[%s1] sm:$0xff]
  %v29 = vld [vmem:[%s1 + $0x8] sm:$0xff]
  %v30 = vld [vmem:[%s1 + $0x10] sm:$0xff]
  %v31 = vld [vmem:[%s1 + $0x18] sm:$0xff]
  %v32 = vld [vmem:[%s1 + $0x20] sm:$0xff]
  %v33 = vld [vmem:[%s1 + $0x28] sm:$0xff]
  %v34 = vld [vmem:[%s1 + $0x30] sm:$0xff]
  %v35 = vld [vmem:[%s1 + $0x38] sm:$0xff]
  %v36 = vld [vmem:[%s1 + $0x40] sm:$0xff]
  %v37 = vld [vmem:[%s1 + $0x48] sm:$0xff]
  %v38 = vld [vmem:[%s1 + $0x50] sm:$0xff]
  %v39 = vld [vmem:[%s1 + $0x58] sm:$0xff]
  %v40 = vld [vmem:[%s1 + $0x60] sm:$0xff]
  %v41 = vld [vmem:[%s1 + $0x68] sm:$0xff]
  %v42 = vld [vmem:[%s1 + $0x70] sm:$0xff]
  %v43 = vld [vmem:[%s1 + $0x78] sm:$0xff]
  %v44 = vld [vmem:[%s1 + $0x80] sm:$0xff]
  %v45 = vld [vmem:[%s1 + $0x88] sm:$0xff]
  %v46 = vld [vmem:[%s1 + $0x90] sm:$0xff]
  %v47 = vld [vmem:[%s1 + $0x98] sm:$0xff]
  %v48 = vld [vmem:[%s1 + $0xa0] sm:$0xff]
  %v49 = vld [vmem:[%s1 + $0xa8] sm:$0xff]
  %v50 = vld [vmem:[%s1 + $0xb0] sm:$0xff]
  %v51 = vld [vmem:[%s1 + $0xb8] sm:$0xff]
  %v52 = vld [vmem:[%s2] sm:$0x1]
  %v54 = vlaneseq
  %v55 = vshrl.u32 %v54, 7
  %v56 = vsub.s32 0, %v55
  %v57 = vrot.slane %v52, %v56
  %vm59 = vcmask 523264
  %v61 = vsel %vm59, %v27, 0
  %63 = vmatprep.subr.mxu0 0.0
  %64 = vmatpush1.msra.mxu0 %v28
  %65 = vmatprep.subr.mxu0 0.0
  %66 = vmatpush1.msra.mxu0 %v29
  %67 = vmatprep.subr.mxu0 0.0
  %68 = vmatpush1.msra.mxu0 %v30
  %69 = vmatprep.subr.mxu0 0.0
  %70 = vmatpush1.msra.mxu0 %v31
  %71 = vmatprep.subr.mxu0 0.0
  %72 = vmatpush1.msra.mxu0 %v32
  %73 = vmatprep.subr.mxu0 0.0
  %74 = vmatpush1.msra.mxu0 %v33
  %75 = vmatprep.subr.mxu0 0.0
  %76 = vmatpush1.msra.mxu0 %v34
  %77 = vmatprep.subr.mxu0 0.0
  %78 = vmatpush1.msra.mxu0 %v35
  %79 = vmatprep.subr.mxu0 0.0
  %80 = vmatpush1.msra.mxu0 %v36
  %81 = vmatprep.subr.mxu0 0.0
  %82 = vmatpush1.msra.mxu0 %v37
  %83 = vmatprep.subr.mxu0 0.0
  %84 = vmatpush1.msra.mxu0 %v38
  %85 = vmatprep.subr.mxu0 0.0
  %86 = vmatpush1.msra.mxu0 %v39
  %87 = vmatprep.subr.mxu0 0.0
  %88 = vmatpush1.msra.mxu0 %v40
  %89 = vmatprep.subr.mxu0 0.0
  %90 = vmatpush1.msra.mxu0 %v41
  %91 = vmatprep.subr.mxu0 0.0
  %92 = vmatpush1.msra.mxu0 %v42
  %93 = vmatprep.subr.mxu0 0.0
  %94 = vmatpush1.msra.mxu0 %v43
  %95 = vmatprep.subr.mxu0 0.0
  %96 = vmatpush1.msra.mxu0 %v44
  %97 = vmatprep.subr.mxu0 0.0
  %98 = vmatpush1.msra.mxu0 %v45
  %99 = vmatprep.subr.mxu0 0.0
  %100 = vmatpush1.msra.mxu0 %v46
  %101 = vmatprep.subr.mxu0 0.0
  %102 = vmatpush1.msra.mxu0 %v47
  %103 = vmatprep.subr.mxu0 0.0
  %104 = vmatpush1.msra.mxu0 %v48
  %105 = vmatprep.subr.mxu0 0.0
  %106 = vmatpush1.msra.mxu0 %v49
  %107 = vmatprep.subr.mxu0 0.0
  %108 = vmatpush1.msra.mxu0 %v50
  %109 = vmatprep.subr.mxu0 0.0
  %110 = vmatpush1.msra.mxu0 %v51
  %111 = vmatprep.subr.mxu0 0.0
  %112 = vmatpush1.msra.mxu0 0.0
  %113 = vmatprep.subr.mxu0 0.0
  %114 = vmatpush1.msra.mxu0 0.0
  %115 = vmatprep.subr.mxu0 0.0
  %116 = vmatpush1.msra.mxu0 0.0
  %117 = vmatprep.subr.mxu0 0.0
  %118 = vmatpush1.msra.mxu0 0.0
  %119 = vmatprep.subr.mxu0 0.0
  %120 = vmatpush1.msra.mxu0 0.0
  %121 = vmatprep.subr.mxu0 0.0
  %122 = vmatpush1.msra.mxu0 0.0
  %123 = vmatprep.subr.mxu0 0.0
  %124 = vmatpush1.msra.mxu0 0.0
  %125 = vmatprep.subr.mxu0 0.0
  %126 = vmatpush1.msra.mxu0 0.0
  %127 = vmatprep.mubr.f32.mxu0 %v61
  %128 = vmatmul.mubr.f32.gmra.mrb[0].mxu0 %v26
  %v129 = vpop.f32.mrb[0].mxu0
  %v130 = vadd.f32 %v57, %v129
  %v131 = vpop.f32.mrb[0].mxu0
  %132 = vdwg.mxu0
  %v133 = vmax.f32 %v130, 0.0
  %v134 = vld [vmem:[%s3] sm:$0xff]
  %v135 = vld [vmem:[%s3 + $0x8] sm:$0xff]
  %v136 = vld [vmem:[%s3 + $0x10] sm:$0xff]
  %v137 = vld [vmem:[%s3 + $0x18] sm:$0xff]
  %v138 = vld [vmem:[%s3 + $0x20] sm:$0xff]
  %v139 = vld [vmem:[%s3 + $0x28] sm:$0xff]
  %v140 = vld [vmem:[%s3 + $0x30] sm:$0xff]
  %v141 = vld [vmem:[%s3 + $0x38] sm:$0xff]
  %v142 = vld [vmem:[%s3 + $0x40] sm:$0xff]
  %v143 = vld [vmem:[%s3 + $0x48] sm:$0xff]
  %v144 = vld [vmem:[%s3 + $0x50] sm:$0xff]
  %v145 = vld [vmem:[%s3 + $0x58] sm:$0xff]
  %v146 = vld [vmem:[%s3 + $0x60] sm:$0xff]
  %v147 = vld [vmem:[%s3 + $0x68] sm:$0xff]
  %v148 = vld [vmem:[%s3 + $0x70] sm:$0xff]
  %v149 = vld [vmem:[%s3 + $0x78] sm:$0xff]
  %v150 = vld [vmem:[%s4] sm:$0x1]
  %v152 = vlaneseq
  %v153 = vshrl.u32 %v152, 7
  %v154 = vsub.s32 0, %v153
  %v155 = vrot.slane %v150, %v154
  %157 = vmatprep.subr.mxu0 0.0
  %158 = vmatpush1.msra.mxu0 %v134
  %159 = vmatprep.subr.mxu0 0.0
  %160 = vmatpush1.msra.mxu0 %v135
  %161 = vmatprep.subr.mxu0 0.0
  %162 = vmatpush1.msra.mxu0 %v136
  %163 = vmatprep.subr.mxu0 0.0
  %164 = vmatpush1.msra.mxu0 %v137
  %165 = vmatprep.subr.mxu0 0.0
  %166 = vmatpush1.msra.mxu0 %v138
  %167 = vmatprep.subr.mxu0 0.0
  %168 = vmatpush1.msra.mxu0 %v139
  %169 = vmatprep.subr.mxu0 0.0
  %170 = vmatpush1.msra.mxu0 %v140
  %171 = vmatprep.subr.mxu0 0.0
  %172 = vmatpush1.msra.mxu0 %v141
  %173 = vmatprep.subr.mxu0 0.0
  %174 = vmatpush1.msra.mxu0 %v142
  %175 = vmatprep.subr.mxu0 0.0
  %176 = vmatpush1.msra.mxu0 %v143
  %177 = vmatprep.subr.mxu0 0.0
  %178 = vmatpush1.msra.mxu0 %v144
  %179 = vmatprep.subr.mxu0 0.0
  %180 = vmatpush1.msra.mxu0 %v145
  %181 = vmatprep.subr.mxu0 0.0
  %182 = vmatpush1.msra.mxu0 %v146
  %183 = vmatprep.subr.mxu0 0.0
  %184 = vmatpush1.msra.mxu0 %v147
  %185 = vmatprep.subr.mxu0 0.0
  %186 = vmatpush1.msra.mxu0 %v148
  %187 = vmatprep.subr.mxu0 0.0
  %188 = vmatpush1.msra.mxu0 %v149
  %189 = vmatprep.subr.mxu0 0.0
  %190 = vmatpush1.msra.mxu0 0.0
  %191 = vmatprep.subr.mxu0 0.0
  %192 = vmatpush1.msra.mxu0 0.0
  %193 = vmatprep.subr.mxu0 0.0
  %194 = vmatpush1.msra.mxu0 0.0
  %195 = vmatprep.subr.mxu0 0.0
  %196 = vmatpush1.msra.mxu0 0.0
  %197 = vmatprep.subr.mxu0 0.0
  %198 = vmatpush1.msra.mxu0 0.0
  %199 = vmatprep.subr.mxu0 0.0
  %200 = vmatpush1.msra.mxu0 0.0
  %201 = vmatprep.subr.mxu0 0.0
  %202 = vmatpush1.msra.mxu0 0.0
  %203 = vmatprep.subr.mxu0 0.0
  %204 = vmatpush1.msra.mxu0 0.0
  %205 = vmatprep.subr.mxu0 0.0
  %206 = vmatpush1.msra.mxu0 0.0
  %207 = vmatprep.subr.mxu0 0.0
  %208 = vmatpush1.msra.mxu0 0.0
  %209 = vmatprep.subr.mxu0 0.0
  %210 = vmatpush1.msra.mxu0 0.0
  %211 = vmatprep.subr.mxu0 0.0
  %212 = vmatpush1.msra.mxu0 0.0
  %213 = vmatprep.subr.mxu0 0.0
  %214 = vmatpush1.msra.mxu0 0.0
  %215 = vmatprep.subr.mxu0 0.0
  %216 = vmatpush1.msra.mxu0 0.0
  %217 = vmatprep.subr.mxu0 0.0
  %218 = vmatpush1.msra.mxu0 0.0
  %219 = vmatprep.subr.mxu0 0.0
  %220 = vmatpush1.msra.mxu0 0.0
  %221 = vmatprep.mubr.f32.mxu0 0.0
  %222 = vmatmul.mubr.f32.gmra.mrb[0].mxu0 %v133
  %v223 = vpop.f32.mrb[0].mxu0
  %v224 = vadd.f32 %v155, %v223
  %v225 = vpop.f32.mrb[0].mxu0
  %226 = vdwg.mxu0
  %v227 = vmax.f32 %v224, 0.0
  %v228 = vld [vmem:[%s5] sm:$0xff]
  %v229 = vld [vmem:[%s5 + $0x8] sm:$0xff]
  %v230 = vld [vmem:[%s5 + $0x10] sm:$0xff]
  %v231 = vld [vmem:[%s5 + $0x18] sm:$0xff]
  %v232 = vld [vmem:[%s5 + $0x20] sm:$0xff]
  %v233 = vld [vmem:[%s5 + $0x28] sm:$0xff]
  %v234 = vld [vmem:[%s5 + $0x30] sm:$0xff]
  %v235 = vld [vmem:[%s5 + $0x38] sm:$0xff]
  %v236 = vld [vmem:[%s5 + $0x40] sm:$0xff]
  %v237 = vld [vmem:[%s5 + $0x48] sm:$0xff]
  %v238 = vld [vmem:[%s5 + $0x50] sm:$0xff]
  %v239 = vld [vmem:[%s5 + $0x58] sm:$0xff]
  %v240 = vld [vmem:[%s5 + $0x60] sm:$0xff]
  %v241 = vld [vmem:[%s5 + $0x68] sm:$0xff]
  %v242 = vld [vmem:[%s5 + $0x70] sm:$0xff]
  %v243 = vld [vmem:[%s5 + $0x78] sm:$0xff]
  %v244 = vld [vmem:[%s6] sm:$0x1]
  %v246 = vlaneseq
  %v247 = vshrl.u32 %v246, 7
  %v248 = vsub.s32 0, %v247
  %v249 = vrot.slane %v244, %v248
  %251 = vmatprep.subr.mxu0 0.0
  %252 = vmatpush1.msra.mxu0 %v228
  %253 = vmatprep.subr.mxu0 0.0
  %254 = vmatpush1.msra.mxu0 %v229
  %255 = vmatprep.subr.mxu0 0.0
  %256 = vmatpush1.msra.mxu0 %v230
  %257 = vmatprep.subr.mxu0 0.0
  %258 = vmatpush1.msra.mxu0 %v231
  %259 = vmatprep.subr.mxu0 0.0
  %260 = vmatpush1.msra.mxu0 %v232
  %261 = vmatprep.subr.mxu0 0.0
  %262 = vmatpush1.msra.mxu0 %v233
  %263 = vmatprep.subr.mxu0 0.0
  %264 = vmatpush1.msra.mxu0 %v234
  %265 = vmatprep.subr.mxu0 0.0
  %266 = vmatpush1.msra.mxu0 %v235
  %267 = vmatprep.subr.mxu0 0.0
  %268 = vmatpush1.msra.mxu0 %v236
  %269 = vmatprep.subr.mxu0 0.0
  %270 = vmatpush1.msra.mxu0 %v237
  %271 = vmatprep.subr.mxu0 0.0
  %272 = vmatpush1.msra.mxu0 %v238
  %273 = vmatprep.subr.mxu0 0.0
  %274 = vmatpush1.msra.mxu0 %v239
  %275 = vmatprep.subr.mxu0 0.0
  %276 = vmatpush1.msra.mxu0 %v240
  %277 = vmatprep.subr.mxu0 0.0
  %278 = vmatpush1.msra.mxu0 %v241
  %279 = vmatprep.subr.mxu0 0.0
  %280 = vmatpush1.msra.mxu0 %v242
  %281 = vmatprep.subr.mxu0 0.0
  %282 = vmatpush1.msra.mxu0 %v243
  %283 = vmatprep.subr.mxu0 0.0
  %284 = vmatpush1.msra.mxu0 0.0
  %285 = vmatprep.subr.mxu0 0.0
  %286 = vmatpush1.msra.mxu0 0.0
  %287 = vmatprep.subr.mxu0 0.0
  %288 = vmatpush1.msra.mxu0 0.0
  %289 = vmatprep.subr.mxu0 0.0
  %290 = vmatpush1.msra.mxu0 0.0
  %291 = vmatprep.subr.mxu0 0.0
  %292 = vmatpush1.msra.mxu0 0.0
  %293 = vmatprep.subr.mxu0 0.0
  %294 = vmatpush1.msra.mxu0 0.0
  %295 = vmatprep.subr.mxu0 0.0
  %296 = vmatpush1.msra.mxu0 0.0
  %297 = vmatprep.subr.mxu0 0.0
  %298 = vmatpush1.msra.mxu0 0.0
  %299 = vmatprep.subr.mxu0 0.0
  %300 = vmatpush1.msra.mxu0 0.0
  %301 = vmatprep.subr.mxu0 0.0
  %302 = vmatpush1.msra.mxu0 0.0
  %303 = vmatprep.subr.mxu0 0.0
  %304 = vmatpush1.msra.mxu0 0.0
  %305 = vmatprep.subr.mxu0 0.0
  %306 = vmatpush1.msra.mxu0 0.0
  %307 = vmatprep.subr.mxu0 0.0
  %308 = vmatpush1.msra.mxu0 0.0
  %309 = vmatprep.subr.mxu0 0.0
  %310 = vmatpush1.msra.mxu0 0.0
  %311 = vmatprep.subr.mxu0 0.0
  %312 = vmatpush1.msra.mxu0 0.0
  %313 = vmatprep.subr.mxu0 0.0
  %314 = vmatpush1.msra.mxu0 0.0
  %315 = vmatprep.mubr.f32.mxu0 0.0
  %316 = vmatmul.mubr.f32.gmra.mrb[0].mxu0 %v227
  %v317 = vpop.f32.mrb[0].mxu0
  %v318 = vadd.f32 %v249, %v317
  %v319 = vpop.f32.mrb[0].mxu0
  %320 = vdwg.mxu0
  %321 = vst [vmem:[%s7] sm:$0xff] %v318
  // Predicated region
  $region30: #{network_forward.5} parent=0 // pred_check
    _
  $region31: #{network_forward.5} parent=0 // pred_check_branch
    %323 = sbr.rel (0) target = $region33
  $region32: #{network_forward.5} parent=0 // pred_region
    _
  $region33: #{network_forward.5} parent=0 // pred_fallthru
    _
  // Predicated region
  $region34: #{network_forward.5} parent=0 // pred_check
    _
  $region35: #{network_forward.5} parent=0 // pred_check_branch
    %325 = sbr.rel (0) target = $region37
  $region36: #{network_forward.5} parent=0 // pred_region
    _
  $region37: #{network_forward.5} parent=0 // pred_fallthru
    _

</llo_original>
